<compile_context>
chip_gen: v7x
topology: tpu7x:2x2x1
jax: 0.10.0
libtpu: 0.0.40
codegen_flags: <defaults>
</compile_context>

<pallas_src>
import jax
import jax.numpy as jnp
from jax.experimental import pallas as pl
from jax.experimental.pallas import tpu as pltpu


def _ceil_to(x, m):
    return ((x + m - 1) // m) * m


# ---------------------------------------------------------------------------
# Fused kernel: stacked GRU over T steps + final linear on the last hidden state.
#
# PyTorch nn.GRU equations (gate order r, z, n):
#   r = sigmoid(W_ir x + b_ir + W_hr h + b_hr)
#   z = sigmoid(W_iz x + b_iz + W_hz h + b_hz)
#   n = tanh   (W_in x + b_in + r * (W_hn h + b_hn))
#   h = (1 - z) * n + z * h
# With gi = x W_ih^T + (b_ih + [b_hr, b_hz, 0]) hoisted out of the time loop, the loop
# only needs gh = h W_hh^T and the b_hn term.
# ---------------------------------------------------------------------------
def make_gru_stack_kernel(n_layers, seq_len, b_p, h_p):
    """Ref order: x, [wih, whh, b_gi, b_hn] per layer, wout, bout | logits | gi_scr, hseq_scr."""

    def kernel(*args):
        x_ref = args[0]
        layer_refs = []
        idx = 1
        for _ in range(n_layers):
            layer_refs.append(tuple(args[idx:idx + 4]))
            idx += 4
        wout_ref, bout_ref = args[idx], args[idx + 1]
        logits_ref = args[idx + 2]
        gi_scr, hseq_scr = args[idx + 3], args[idx + 4]

        # Layer-0 input, flattened to (T*Bp, Dp) and cast to bf16 for the MXU.
        layer_in = x_ref[...].reshape(seq_len * b_p, x_ref.shape[-1]).astype(jnp.bfloat16)

        h = jnp.zeros((b_p, h_p), jnp.float32)
        for l, (wih_ref, whh_ref, bgi_ref, bhn_ref) in enumerate(layer_refs):
            # Hoisted input projection: one large, well-shaped MXU matmul for all timesteps.
            gi2 = jnp.dot(layer_in, wih_ref[...],
                          preferred_element_type=jnp.float32) + bgi_ref[...]
            gi_scr[...] = gi2.reshape(seq_len, b_p, 3 * h_p)

            whh = whh_ref[...]       # (Hp, 3Hp) bf16, resident in VMEM for the recurrence
            bhn = bhn_ref[...]       # (1, Hp) f32

            h = jnp.zeros((b_p, h_p), jnp.float32)
            # T is small & static here -> trace-time unroll (full LLO visibility).
            # TODO(synk): for long sequences switch to lax.fori_loop / a time grid axis and
            # stream gi chunks with pltpu.emit_pipeline.
            for t in range(seq_len):
                g_i = gi_scr[t]                                    # (Bp, 3Hp) f32
                gh = jnp.dot(h.astype(jnp.bfloat16), whh,
                             preferred_element_type=jnp.float32)   # (Bp, 3Hp) f32
                r = jax.nn.sigmoid(g_i[:, 0:h_p] + gh[:, 0:h_p])
                z = jax.nn.sigmoid(g_i[:, h_p:2 * h_p] + gh[:, h_p:2 * h_p])
                n = jnp.tanh(g_i[:, 2 * h_p:3 * h_p]
                             + r * (gh[:, 2 * h_p:3 * h_p] + bhn))
                h = (1.0 - z) * n + z * h
                if l < n_layers - 1:
                    hseq_scr[t] = h          # next layer consumes the full hidden sequence

            if l < n_layers - 1:
                layer_in = hseq_scr[...].reshape(seq_len * b_p, h_p).astype(jnp.bfloat16)

        # Fused output projection on the last hidden state (lane-dense padded C).
        logits_ref[...] = (jnp.dot(h.astype(jnp.bfloat16), wout_ref[...],
                                   preferred_element_type=jnp.float32) + bout_ref[...])

    return kernel


def gru_stack_forward(x_pad, layer_params, w_out_t, b_out, *,
                      n_layers, seq_len, b_p, h_p, c_p):
    kernel = make_gru_stack_kernel(n_layers, seq_len, b_p, h_p)
    flat = []
    for lp in layer_params:
        flat.extend([lp["w_ih_t"], lp["w_hh_t"], lp["b_gi"], lp["b_hn"]])
    return pl.pallas_call(
        kernel,
        out_shape=jax.ShapeDtypeStruct((b_p, c_p), jnp.float32),
        scratch_shapes=[
            pltpu.VMEM((seq_len, b_p, 3 * h_p), jnp.float32),  # gi of the current layer
            pltpu.VMEM((seq_len, b_p, h_p), jnp.float32),      # hidden-seq handoff l -> l+1
        ],
    )(x_pad, *flat, w_out_t, b_out)


# ---------------------------------------------------------------------------
# Parameter init (PyTorch-style uniform(-1/sqrt(H), 1/sqrt(H))), stored pre-padded,
# pre-transposed and bf16 in the exact layout the kernel consumes.
# ---------------------------------------------------------------------------
def init_params(key, n_layers, hidden_dim, n_vocab, embed_dim, n_classes):
    h_p = _ceil_to(hidden_dim, 128)
    d_p = _ceil_to(embed_dim, 128)
    c_p = _ceil_to(n_classes, 128)

    keys = list(jax.random.split(key, 1 + 4 * n_layers + 2))
    ki = iter(keys)

    def pad_gates_cols(m):  # (rows, 3H) -> (rows, 3*Hp), gate g placed at g*Hp
        out = jnp.zeros((m.shape[0], 3 * h_p), m.dtype)
        for g in range(3):
            out = out.at[:, g * h_p:g * h_p + hidden_dim].set(
                m[:, g * hidden_dim:(g + 1) * hidden_dim])
        return out

    def pad_rows(m, rows_p):
        return jnp.zeros((rows_p,) + m.shape[1:], m.dtype).at[:m.shape[0]].set(m)

    params = {
        "embedding": jax.random.normal(next(ki), (n_vocab, embed_dim), jnp.float32)
    }

    k = 1.0 / float(hidden_dim) ** 0.5
    layers = []
    for layer in range(n_layers):
        in_dim = embed_dim if layer == 0 else hidden_dim
        in_p = d_p if layer == 0 else h_p
        w_ih = jax.random.uniform(next(ki), (3 * hidden_dim, in_dim), minval=-k, maxval=k)
        w_hh = jax.random.uniform(next(ki), (3 * hidden_dim, hidden_dim), minval=-k, maxval=k)
        b_ih = jax.random.uniform(next(ki), (3 * hidden_dim,), minval=-k, maxval=k)
        b_hh = jax.random.uniform(next(ki), (3 * hidden_dim,), minval=-k, maxval=k)

        # Fold b_ih and the r/z parts of b_hh into the hoisted input projection.
        b_gi = b_ih + jnp.concatenate(
            [b_hh[:2 * hidden_dim], jnp.zeros((hidden_dim,), jnp.float32)])
        b_hn = jnp.zeros((1, h_p), jnp.float32).at[0, :hidden_dim].set(b_hh[2 * hidden_dim:])

        layers.append({
            "w_ih_t": pad_rows(pad_gates_cols(w_ih.T), in_p).astype(jnp.bfloat16),
            "w_hh_t": pad_rows(pad_gates_cols(w_hh.T), h_p).astype(jnp.bfloat16),
            "b_gi": pad_gates_cols(b_gi[None, :]).astype(jnp.float32),
            "b_hn": b_hn,
        })
    params["gru_layers"] = layers

    w_out = jax.random.uniform(next(ki), (n_classes, hidden_dim), minval=-k, maxval=k)
    b_out = jax.random.uniform(next(ki), (n_classes,), minval=-k, maxval=k)
    params["w_out_t"] = pad_rows(
        jnp.zeros((hidden_dim, c_p), jnp.float32).at[:, :n_classes].set(w_out.T), h_p
    ).astype(jnp.bfloat16)
    params["b_out"] = jnp.zeros((1, c_p), jnp.float32).at[0, :n_classes].set(b_out)

    params["meta"] = {
        "n_layers": n_layers, "hidden_dim": hidden_dim, "embed_dim": embed_dim,
        "n_classes": n_classes, "h_p": h_p, "d_p": d_p, "c_p": c_p,
    }
    return params


# ---------------------------------------------------------------------------
# Forward pass mirroring GRU.forward(x)
# ---------------------------------------------------------------------------
def gru_model_forward(params, x_tokens):
    meta = params["meta"]
    B, T = x_tokens.shape
    b_p = max(8, _ceil_to(B, 8))

    emb = params["embedding"][x_tokens]            # (B, T, D) embedding gather (glue)
    # Time-major + zero-pad to (T, Bp, Dp). Tiny one-shot glue pass outside the kernel;
    # padded batch rows / feature lanes stay zero end-to-end and are sliced off below.
    x_pad = jnp.zeros((T, b_p, meta["d_p"]), jnp.float32)
    x_pad = x_pad.at[:, :B, :meta["embed_dim"]].set(jnp.transpose(emb, (1, 0, 2)))

    logits_p = gru_stack_forward(
        x_pad, params["gru_layers"], params["w_out_t"], params["b_out"],
        n_layers=meta["n_layers"], seq_len=T, b_p=b_p,
        h_p=meta["h_p"], c_p=meta["c_p"])

    # dropout(h_t): result discarded in the reference forward -> no-op
    return logits_p[:B, :meta["n_classes"]]        # (B, n_classes)


if __name__ == "__main__":
    # Small, module-consistent shapes
    n_layers = 2
    hidden_dim = 32
    n_vocab = 100
    embed_dim = 32
    n_classes = 2
    batch = 2
    seq_len = 8

    key = jax.random.PRNGKey(0)
    k_params, k_data = jax.random.split(key)

    params = init_params(k_params, n_layers, hidden_dim, n_vocab, embed_dim, n_classes)
    x = jax.random.randint(k_data, (batch, seq_len), 0, n_vocab, dtype=jnp.int32)

    logits = gru_model_forward(params, x)
    jax.block_until_ready(logits)
    assert logits.shape == (batch, n_classes)
    print("KERNEL_OK")
</pallas_src>

<mosaic_0001>
module attributes {stable_mosaic.version = 11 : i64} {
  func.func @kernel(%arg0: memref<8x8x128xf32, #tpu.memory_space<vmem>>, %arg1: memref<128x384xbf16, #tpu.memory_space<vmem>>, %arg2: memref<128x384xbf16, #tpu.memory_space<vmem>>, %arg3: memref<1x384xf32, #tpu.memory_space<vmem>>, %arg4: memref<1x128xf32, #tpu.memory_space<vmem>>, %arg5: memref<128x384xbf16, #tpu.memory_space<vmem>>, %arg6: memref<128x384xbf16, #tpu.memory_space<vmem>>, %arg7: memref<1x384xf32, #tpu.memory_space<vmem>>, %arg8: memref<1x128xf32, #tpu.memory_space<vmem>>, %arg9: memref<128x128xbf16, #tpu.memory_space<vmem>>, %arg10: memref<1x128xf32, #tpu.memory_space<vmem>>, %arg11: memref<8x128xf32, #tpu.memory_space<vmem>>, %arg12: memref<8x8x384xf32, #tpu.memory_space<vmem>>, %arg13: memref<8x8x128xf32, #tpu.memory_space<vmem>>) attributes {dimension_semantics = [], scalar_prefetch = 0 : i64, scratch_operands = 2 : i64, tpu.core_type = #tpu.core_type<tc>} {
    %c0 = arith.constant 0 : index
    %c0_0 = arith.constant 0 : index
    %c0_1 = arith.constant 0 : index
    %0 = vector.load %arg0[%c0, %c0_0, %c0_1] : memref<8x8x128xf32, #tpu.memory_space<vmem>>, vector<8x8x128xf32>
    %1 = vector.shape_cast %0 : vector<8x8x128xf32> to vector<64x128xf32>
    %2 = arith.truncf %1 : vector<64x128xf32> to vector<64x128xbf16>
    %c0_2 = arith.constant 0 : index
    %c0_3 = arith.constant 0 : index
    %3 = vector.load %arg1[%c0_2, %c0_3] : memref<128x384xbf16, #tpu.memory_space<vmem>>, vector<128x384xbf16>
    %cst = arith.constant dense<0.000000e+00> : vector<64x384xf32>
    %4 = tpu.matmul %2, %3, %cst {dimension_numbers = #tpu.dot_dimension_numbers<[1], [0], [0], [1], [0, 0, 1, 1], [], []>} : vector<64x128xbf16>, vector<128x384xbf16>, vector<64x384xf32> -> vector<64x384xf32>
    %c0_4 = arith.constant 0 : index
    %c0_5 = arith.constant 0 : index
    %5 = vector.load %arg3[%c0_4, %c0_5] : memref<1x384xf32, #tpu.memory_space<vmem>>, vector<1x384xf32>
    %6 = vector.broadcast %5 : vector<1x384xf32> to vector<64x384xf32>
    %7 = arith.addf %4, %6 : vector<64x384xf32>
    %8 = vector.shape_cast %7 : vector<64x384xf32> to vector<8x8x384xf32>
    %c0_6 = arith.constant 0 : index
    %c0_7 = arith.constant 0 : index
    %c0_8 = arith.constant 0 : index
    %9 = vector.load %arg12[%c0_6, %c0_7, %c0_8] : memref<8x8x384xf32, #tpu.memory_space<vmem>>, vector<8x8x384xf32>
    tpu.vector_store %arg12[%c0_6, %c0_7, %c0_8], %8 {strides = array<i32>} : memref<8x8x384xf32, #tpu.memory_space<vmem>>, vector<8x8x384xf32>,
    %c0_9 = arith.constant 0 : index
    %c0_10 = arith.constant 0 : index
    %10 = vector.load %arg2[%c0_9, %c0_10] : memref<128x384xbf16, #tpu.memory_space<vmem>>, vector<128x384xbf16>
    %c0_11 = arith.constant 0 : index
    %c0_12 = arith.constant 0 : index
    %11 = vector.load %arg4[%c0_11, %c0_12] : memref<1x128xf32, #tpu.memory_space<vmem>>, vector<1x128xf32>
    %cst_13 = arith.constant 0.000000e+00 : f32
    %12 = vector.broadcast %cst_13 : f32 to vector<8x128xf32>
    %c0_14 = arith.constant 0 : index
    %c0_15 = arith.constant 0 : index
    %c0_16 = arith.constant 0 : index
    %13 = vector.load %arg12[%c0_14, %c0_15, %c0_16] : memref<8x8x384xf32, #tpu.memory_space<vmem>>, vector<1x8x384xf32>
    %14 = vector.shape_cast %13 : vector<1x8x384xf32> to vector<8x384xf32>
    %15 = arith.truncf %12 : vector<8x128xf32> to vector<8x128xbf16>
    %cst_17 = arith.constant dense<0.000000e+00> : vector<8x384xf32>
    %16 = tpu.matmul %15, %10, %cst_17 {dimension_numbers = #tpu.dot_dimension_numbers<[1], [0], [0], [1], [0, 0, 1, 1], [], []>} : vector<8x128xbf16>, vector<128x384xbf16>, vector<8x384xf32> -> vector<8x384xf32>
    %17 = vector.extract_strided_slice %14 {offsets = [0, 0], sizes = [8, 128], strides = [1, 1]} : vector<8x384xf32> to vector<8x128xf32>
    %18 = vector.extract_strided_slice %16 {offsets = [0, 0], sizes = [8, 128], strides = [1, 1]} : vector<8x384xf32> to vector<8x128xf32>
    %19 = arith.addf %17, %18 : vector<8x128xf32>
    %20 = arith.negf %19 : vector<8x128xf32>
    %21 = math.exp %20 : vector<8x128xf32>
    %cst_18 = arith.constant 1.000000e+00 : f32
    %22 = vector.broadcast %cst_18 : f32 to vector<8x128xf32>
    %23 = arith.addf %22, %21 : vector<8x128xf32>
    %24 = arith.divf %22, %23 : vector<8x128xf32>
    %25 = vector.extract_strided_slice %14 {offsets = [0, 128], sizes = [8, 128], strides = [1, 1]} : vector<8x384xf32> to vector<8x128xf32>
    %26 = vector.extract_strided_slice %16 {offsets = [0, 128], sizes = [8, 128], strides = [1, 1]} : vector<8x384xf32> to vector<8x128xf32>
    %27 = arith.addf %25, %26 : vector<8x128xf32>
    %28 = arith.negf %27 : vector<8x128xf32>
    %29 = math.exp %28 : vector<8x128xf32>
    %cst_19 = arith.constant 1.000000e+00 : f32
    %30 = vector.broadcast %cst_19 : f32 to vector<8x128xf32>
    %31 = arith.addf %30, %29 : vector<8x128xf32>
    %32 = arith.divf %30, %31 : vector<8x128xf32>
    %33 = vector.extract_strided_slice %14 {offsets = [0, 256], sizes = [8, 128], strides = [1, 1]} : vector<8x384xf32> to vector<8x128xf32>
    %34 = vector.extract_strided_slice %16 {offsets = [0, 256], sizes = [8, 128], strides = [1, 1]} : vector<8x384xf32> to vector<8x128xf32>
    %35 = vector.broadcast %11 : vector<1x128xf32> to vector<8x128xf32>
    %36 = arith.addf %34, %35 : vector<8x128xf32>
    %37 = arith.mulf %24, %36 : vector<8x128xf32>
    %38 = arith.addf %33, %37 : vector<8x128xf32>
    %39 = math.tanh %38 : vector<8x128xf32>
    %cst_20 = arith.constant 1.000000e+00 : f32
    %40 = vector.broadcast %cst_20 : f32 to vector<8x128xf32>
    %41 = arith.subf %40, %32 : vector<8x128xf32>
    %42 = arith.mulf %41, %39 : vector<8x128xf32>
    %43 = arith.mulf %32, %12 : vector<8x128xf32>
    %44 = arith.addf %42, %43 : vector<8x128xf32>
    %c0_21 = arith.constant 0 : index
    %c0_22 = arith.constant 0 : index
    %c0_23 = arith.constant 0 : index
    %45 = vector.load %arg13[%c0_21, %c0_22, %c0_23] : memref<8x8x128xf32, #tpu.memory_space<vmem>>, vector<1x8x128xf32>
    %46 = vector.shape_cast %45 : vector<1x8x128xf32> to vector<8x128xf32>
    %47 = vector.shape_cast %44 : vector<8x128xf32> to vector<1x8x128xf32>
    tpu.vector_store %arg13[%c0_21, %c0_22, %c0_23], %47 {strides = array<i32>} : memref<8x8x128xf32, #tpu.memory_space<vmem>>, vector<1x8x128xf32>,
    %c1 = arith.constant 1 : index
    %c0_24 = arith.constant 0 : index
    %c0_25 = arith.constant 0 : index
    %48 = vector.load %arg12[%c1, %c0_24, %c0_25] : memref<8x8x384xf32, #tpu.memory_space<vmem>>, vector<1x8x384xf32>
    %49 = vector.shape_cast %48 : vector<1x8x384xf32> to vector<8x384xf32>
    %50 = arith.truncf %44 : vector<8x128xf32> to vector<8x128xbf16>
    %cst_26 = arith.constant dense<0.000000e+00> : vector<8x384xf32>
    %51 = tpu.matmul %50, %10, %cst_26 {dimension_numbers = #tpu.dot_dimension_numbers<[1], [0], [0], [1], [0, 0, 1, 1], [], []>} : vector<8x128xbf16>, vector<128x384xbf16>, vector<8x384xf32> -> vector<8x384xf32>
    %52 = vector.extract_strided_slice %49 {offsets = [0, 0], sizes = [8, 128], strides = [1, 1]} : vector<8x384xf32> to vector<8x128xf32>
    %53 = vector.extract_strided_slice %51 {offsets = [0, 0], sizes = [8, 128], strides = [1, 1]} : vector<8x384xf32> to vector<8x128xf32>
    %54 = arith.addf %52, %53 : vector<8x128xf32>
    %55 = arith.negf %54 : vector<8x128xf32>
    %56 = math.exp %55 : vector<8x128xf32>
    %cst_27 = arith.constant 1.000000e+00 : f32
    %57 = vector.broadcast %cst_27 : f32 to vector<8x128xf32>
    %58 = arith.addf %57, %56 : vector<8x128xf32>
    %59 = arith.divf %57, %58 : vector<8x128xf32>
    %60 = vector.extract_strided_slice %49 {offsets = [0, 128], sizes = [8, 128], strides = [1, 1]} : vector<8x384xf32> to vector<8x128xf32>
    %61 = vector.extract_strided_slice %51 {offsets = [0, 128], sizes = [8, 128], strides = [1, 1]} : vector<8x384xf32> to vector<8x128xf32>
    %62 = arith.addf %60, %61 : vector<8x128xf32>
    %63 = arith.negf %62 : vector<8x128xf32>
    %64 = math.exp %63 : vector<8x128xf32>
    %cst_28 = arith.constant 1.000000e+00 : f32
    %65 = vector.broadcast %cst_28 : f32 to vector<8x128xf32>
    %66 = arith.addf %65, %64 : vector<8x128xf32>
    %67 = arith.divf %65, %66 : vector<8x128xf32>
    %68 = vector.extract_strided_slice %49 {offsets = [0, 256], sizes = [8, 128], strides = [1, 1]} : vector<8x384xf32> to vector<8x128xf32>
    %69 = vector.extract_strided_slice %51 {offsets = [0, 256], sizes = [8, 128], strides = [1, 1]} : vector<8x384xf32> to vector<8x128xf32>
    %70 = vector.broadcast %11 : vector<1x128xf32> to vector<8x128xf32>
    %71 = arith.addf %69, %70 : vector<8x128xf32>
    %72 = arith.mulf %59, %71 : vector<8x128xf32>
    %73 = arith.addf %68, %72 : vector<8x128xf32>
    %74 = math.tanh %73 : vector<8x128xf32>
    %cst_29 = arith.constant 1.000000e+00 : f32
    %75 = vector.broadcast %cst_29 : f32 to vector<8x128xf32>
    %76 = arith.subf %75, %67 : vector<8x128xf32>
    %77 = arith.mulf %76, %74 : vector<8x128xf32>
    %78 = arith.mulf %67, %44 : vector<8x128xf32>
    %79 = arith.addf %77, %78 : vector<8x128xf32>
    %c1_30 = arith.constant 1 : index
    %c0_31 = arith.constant 0 : index
    %c0_32 = arith.constant 0 : index
    %80 = vector.load %arg13[%c1_30, %c0_31, %c0_32] : memref<8x8x128xf32, #tpu.memory_space<vmem>>, vector<1x8x128xf32>
    %81 = vector.shape_cast %80 : vector<1x8x128xf32> to vector<8x128xf32>
    %82 = vector.shape_cast %79 : vector<8x128xf32> to vector<1x8x128xf32>
    tpu.vector_store %arg13[%c1_30, %c0_31, %c0_32], %82 {strides = array<i32>} : memref<8x8x128xf32, #tpu.memory_space<vmem>>, vector<1x8x128xf32>,
    %c2 = arith.constant 2 : index
    %c0_33 = arith.constant 0 : index
    %c0_34 = arith.constant 0 : index
    %83 = vector.load %arg12[%c2, %c0_33, %c0_34] : memref<8x8x384xf32, #tpu.memory_space<vmem>>, vector<1x8x384xf32>
    %84 = vector.shape_cast %83 : vector<1x8x384xf32> to vector<8x384xf32>
    %85 = arith.truncf %79 : vector<8x128xf32> to vector<8x128xbf16>
    %cst_35 = arith.constant dense<0.000000e+00> : vector<8x384xf32>
    %86 = tpu.matmul %85, %10, %cst_35 {dimension_numbers = #tpu.dot_dimension_numbers<[1], [0], [0], [1], [0, 0, 1, 1], [], []>} : vector<8x128xbf16>, vector<128x384xbf16>, vector<8x384xf32> -> vector<8x384xf32>
    %87 = vector.extract_strided_slice %84 {offsets = [0, 0], sizes = [8, 128], strides = [1, 1]} : vector<8x384xf32> to vector<8x128xf32>
    %88 = vector.extract_strided_slice %86 {offsets = [0, 0], sizes = [8, 128], strides = [1, 1]} : vector<8x384xf32> to vector<8x128xf32>
    %89 = arith.addf %87, %88 : vector<8x128xf32>
    %90 = arith.negf %89 : vector<8x128xf32>
    %91 = math.exp %90 : vector<8x128xf32>
    %cst_36 = arith.constant 1.000000e+00 : f32
    %92 = vector.broadcast %cst_36 : f32 to vector<8x128xf32>
    %93 = arith.addf %92, %91 : vector<8x128xf32>
    %94 = arith.divf %92, %93 : vector<8x128xf32>
    %95 = vector.extract_strided_slice %84 {offsets = [0, 128], sizes = [8, 128], strides = [1, 1]} : vector<8x384xf32> to vector<8x128xf32>
    %96 = vector.extract_strided_slice %86 {offsets = [0, 128], sizes = [8, 128], strides = [1, 1]} : vector<8x384xf32> to vector<8x128xf32>
    %97 = arith.addf %95, %96 : vector<8x128xf32>
    %98 = arith.negf %97 : vector<8x128xf32>
    %99 = math.exp %98 : vector<8x128xf32>
    %cst_37 = arith.constant 1.000000e+00 : f32
    %100 = vector.broadcast %cst_37 : f32 to vector<8x128xf32>
    %101 = arith.addf %100, %99 : vector<8x128xf32>
    %102 = arith.divf %100, %101 : vector<8x128xf32>
    %103 = vector.extract_strided_slice %84 {offsets = [0, 256], sizes = [8, 128], strides = [1, 1]} : vector<8x384xf32> to vector<8x128xf32>
    %104 = vector.extract_strided_slice %86 {offsets = [0, 256], sizes = [8, 128], strides = [1, 1]} : vector<8x384xf32> to vector<8x128xf32>
    %105 = vector.broadcast %11 : vector<1x128xf32> to vector<8x128xf32>
    %106 = arith.addf %104, %105 : vector<8x128xf32>
    %107 = arith.mulf %94, %106 : vector<8x128xf32>
    %108 = arith.addf %103, %107 : vector<8x128xf32>
    %109 = math.tanh %108 : vector<8x128xf32>
    %cst_38 = arith.constant 1.000000e+00 : f32
    %110 = vector.broadcast %cst_38 : f32 to vector<8x128xf32>
    %111 = arith.subf %110, %102 : vector<8x128xf32>
    %112 = arith.mulf %111, %109 : vector<8x128xf32>
    %113 = arith.mulf %102, %79 : vector<8x128xf32>
    %114 = arith.addf %112, %113 : vector<8x128xf32>
    %c2_39 = arith.constant 2 : index
    %c0_40 = arith.constant 0 : index
    %c0_41 = arith.constant 0 : index
    %115 = vector.load %arg13[%c2_39, %c0_40, %c0_41] : memref<8x8x128xf32, #tpu.memory_space<vmem>>, vector<1x8x128xf32>
    %116 = vector.shape_cast %115 : vector<1x8x128xf32> to vector<8x128xf32>
    %117 = vector.shape_cast %114 : vector<8x128xf32> to vector<1x8x128xf32>
    tpu.vector_store %arg13[%c2_39, %c0_40, %c0_41], %117 {strides = array<i32>} : memref<8x8x128xf32, #tpu.memory_space<vmem>>, vector<1x8x128xf32>,
    %c3 = arith.constant 3 : index
    %c0_42 = arith.constant 0 : index
    %c0_43 = arith.constant 0 : index
    %118 = vector.load %arg12[%c3, %c0_42, %c0_43] : memref<8x8x384xf32, #tpu.memory_space<vmem>>, vector<1x8x384xf32>
    %119 = vector.shape_cast %118 : vector<1x8x384xf32> to vector<8x384xf32>
    %120 = arith.truncf %114 : vector<8x128xf32> to vector<8x128xbf16>
    %cst_44 = arith.constant dense<0.000000e+00> : vector<8x384xf32>
    %121 = tpu.matmul %120, %10, %cst_44 {dimension_numbers = #tpu.dot_dimension_numbers<[1], [0], [0], [1], [0, 0, 1, 1], [], []>} : vector<8x128xbf16>, vector<128x384xbf16>, vector<8x384xf32> -> vector<8x384xf32>
    %122 = vector.extract_strided_slice %119 {offsets = [0, 0], sizes = [8, 128], strides = [1, 1]} : vector<8x384xf32> to vector<8x128xf32>
    %123 = vector.extract_strided_slice %121 {offsets = [0, 0], sizes = [8, 128], strides = [1, 1]} : vector<8x384xf32> to vector<8x128xf32>
    %124 = arith.addf %122, %123 : vector<8x128xf32>
    %125 = arith.negf %124 : vector<8x128xf32>
    %126 = math.exp %125 : vector<8x128xf32>
    %cst_45 = arith.constant 1.000000e+00 : f32
    %127 = vector.broadcast %cst_45 : f32 to vector<8x128xf32>
    %128 = arith.addf %127, %126 : vector<8x128xf32>
    %129 = arith.divf %127, %128 : vector<8x128xf32>
    %130 = vector.extract_strided_slice %119 {offsets = [0, 128], sizes = [8, 128], strides = [1, 1]} : vector<8x384xf32> to vector<8x128xf32>
    %131 = vector.extract_strided_slice %121 {offsets = [0, 128], sizes = [8, 128], strides = [1, 1]} : vector<8x384xf32> to vector<8x128xf32>
    %132 = arith.addf %130, %131 : vector<8x128xf32>
    %133 = arith.negf %132 : vector<8x128xf32>
    %134 = math.exp %133 : vector<8x128xf32>
    %cst_46 = arith.constant 1.000000e+00 : f32
    %135 = vector.broadcast %cst_46 : f32 to vector<8x128xf32>
    %136 = arith.addf %135, %134 : vector<8x128xf32>
    %137 = arith.divf %135, %136 : vector<8x128xf32>
    %138 = vector.extract_strided_slice %119 {offsets = [0, 256], sizes = [8, 128], strides = [1, 1]} : vector<8x384xf32> to vector<8x128xf32>
    %139 = vector.extract_strided_slice %121 {offsets = [0, 256], sizes = [8, 128], strides = [1, 1]} : vector<8x384xf32> to vector<8x128xf32>
    %140 = vector.broadcast %11 : vector<1x128xf32> to vector<8x128xf32>
    %141 = arith.addf %139, %140 : vector<8x128xf32>
    %142 = arith.mulf %129, %141 : vector<8x128xf32>
    %143 = arith.addf %138, %142 : vector<8x128xf32>
    %144 = math.tanh %143 : vector<8x128xf32>
    %cst_47 = arith.constant 1.000000e+00 : f32
    %145 = vector.broadcast %cst_47 : f32 to vector<8x128xf32>
    %146 = arith.subf %145, %137 : vector<8x128xf32>
    %147 = arith.mulf %146, %144 : vector<8x128xf32>
    %148 = arith.mulf %137, %114 : vector<8x128xf32>
    %149 = arith.addf %147, %148 : vector<8x128xf32>
    %c3_48 = arith.constant 3 : index
    %c0_49 = arith.constant 0 : index
    %c0_50 = arith.constant 0 : index
    %150 = vector.load %arg13[%c3_48, %c0_49, %c0_50] : memref<8x8x128xf32, #tpu.memory_space<vmem>>, vector<1x8x128xf32>
    %151 = vector.shape_cast %150 : vector<1x8x128xf32> to vector<8x128xf32>
    %152 = vector.shape_cast %149 : vector<8x128xf32> to vector<1x8x128xf32>
    tpu.vector_store %arg13[%c3_48, %c0_49, %c0_50], %152 {strides = array<i32>} : memref<8x8x128xf32, #tpu.memory_space<vmem>>, vector<1x8x128xf32>,
    %c4 = arith.constant 4 : index
    %c0_51 = arith.constant 0 : index
    %c0_52 = arith.constant 0 : index
    %153 = vector.load %arg12[%c4, %c0_51, %c0_52] : memref<8x8x384xf32, #tpu.memory_space<vmem>>, vector<1x8x384xf32>
    %154 = vector.shape_cast %153 : vector<1x8x384xf32> to vector<8x384xf32>
    %155 = arith.truncf %149 : vector<8x128xf32> to vector<8x128xbf16>
    %cst_53 = arith.constant dense<0.000000e+00> : vector<8x384xf32>
    %156 = tpu.matmul %155, %10, %cst_53 {dimension_numbers = #tpu.dot_dimension_numbers<[1], [0], [0], [1], [0, 0, 1, 1], [], []>} : vector<8x128xbf16>, vector<128x384xbf16>, vector<8x384xf32> -> vector<8x384xf32>
    %157 = vector.extract_strided_slice %154 {offsets = [0, 0], sizes = [8, 128], strides = [1, 1]} : vector<8x384xf32> to vector<8x128xf32>
    %158 = vector.extract_strided_slice %156 {offsets = [0, 0], sizes = [8, 128], strides = [1, 1]} : vector<8x384xf32> to vector<8x128xf32>
    %159 = arith.addf %157, %158 : vector<8x128xf32>
    %160 = arith.negf %159 : vector<8x128xf32>
    %161 = math.exp %160 : vector<8x128xf32>
    %cst_54 = arith.constant 1.000000e+00 : f32
    %162 = vector.broadcast %cst_54 : f32 to vector<8x128xf32>
    %163 = arith.addf %162, %161 : vector<8x128xf32>
    %164 = arith.divf %162, %163 : vector<8x128xf32>
    %165 = vector.extract_strided_slice %154 {offsets = [0, 128], sizes = [8, 128], strides = [1, 1]} : vector<8x384xf32> to vector<8x128xf32>
    %166 = vector.extract_strided_slice %156 {offsets = [0, 128], sizes = [8, 128], strides = [1, 1]} : vector<8x384xf32> to vector<8x128xf32>
    %167 = arith.addf %165, %166 : vector<8x128xf32>
    %168 = arith.negf %167 : vector<8x128xf32>
    %169 = math.exp %168 : vector<8x128xf32>
    %cst_55 = arith.constant 1.000000e+00 : f32
    %170 = vector.broadcast %cst_55 : f32 to vector<8x128xf32>
    %171 = arith.addf %170, %169 : vector<8x128xf32>
    %172 = arith.divf %170, %171 : vector<8x128xf32>
    %173 = vector.extract_strided_slice %154 {offsets = [0, 256], sizes = [8, 128], strides = [1, 1]} : vector<8x384xf32> to vector<8x128xf32>
    %174 = vector.extract_strided_slice %156 {offsets = [0, 256], sizes = [8, 128], strides = [1, 1]} : vector<8x384xf32> to vector<8x128xf32>
    %175 = vector.broadcast %11 : vector<1x128xf32> to vector<8x128xf32>
    %176 = arith.addf %174, %175 : vector<8x128xf32>
    %177 = arith.mulf %164, %176 : vector<8x128xf32>
    %178 = arith.addf %173, %177 : vector<8x128xf32>
    %179 = math.tanh %178 : vector<8x128xf32>
    %cst_56 = arith.constant 1.000000e+00 : f32
    %180 = vector.broadcast %cst_56 : f32 to vector<8x128xf32>
    %181 = arith.subf %180, %172 : vector<8x128xf32>
    %182 = arith.mulf %181, %179 : vector<8x128xf32>
    %183 = arith.mulf %172, %149 : vector<8x128xf32>
    %184 = arith.addf %182, %183 : vector<8x128xf32>
    %c4_57 = arith.constant 4 : index
    %c0_58 = arith.constant 0 : index
    %c0_59 = arith.constant 0 : index
    %185 = vector.load %arg13[%c4_57, %c0_58, %c0_59] : memref<8x8x128xf32, #tpu.memory_space<vmem>>, vector<1x8x128xf32>
    %186 = vector.shape_cast %185 : vector<1x8x128xf32> to vector<8x128xf32>
    %187 = vector.shape_cast %184 : vector<8x128xf32> to vector<1x8x128xf32>
    tpu.vector_store %arg13[%c4_57, %c0_58, %c0_59], %187 {strides = array<i32>} : memref<8x8x128xf32, #tpu.memory_space<vmem>>, vector<1x8x128xf32>,
    %c5 = arith.constant 5 : index
    %c0_60 = arith.constant 0 : index
    %c0_61 = arith.constant 0 : index
    %188 = vector.load %arg12[%c5, %c0_60, %c0_61] : memref<8x8x384xf32, #tpu.memory_space<vmem>>, vector<1x8x384xf32>
    %189 = vector.shape_cast %188 : vector<1x8x384xf32> to vector<8x384xf32>
    %190 = arith.truncf %184 : vector<8x128xf32> to vector<8x128xbf16>
    %cst_62 = arith.constant dense<0.000000e+00> : vector<8x384xf32>
    %191 = tpu.matmul %190, %10, %cst_62 {dimension_numbers = #tpu.dot_dimension_numbers<[1], [0], [0], [1], [0, 0, 1, 1], [], []>} : vector<8x128xbf16>, vector<128x384xbf16>, vector<8x384xf32> -> vector<8x384xf32>
    %192 = vector.extract_strided_slice %189 {offsets = [0, 0], sizes = [8, 128], strides = [1, 1]} : vector<8x384xf32> to vector<8x128xf32>
    %193 = vector.extract_strided_slice %191 {offsets = [0, 0], sizes = [8, 128], strides = [1, 1]} : vector<8x384xf32> to vector<8x128xf32>
    %194 = arith.addf %192, %193 : vector<8x128xf32>
    %195 = arith.negf %194 : vector<8x128xf32>
    %196 = math.exp %195 : vector<8x128xf32>
    %cst_63 = arith.constant 1.000000e+00 : f32
    %197 = vector.broadcast %cst_63 : f32 to vector<8x128xf32>
    %198 = arith.addf %197, %196 : vector<8x128xf32>
    %199 = arith.divf %197, %198 : vector<8x128xf32>
    %200 = vector.extract_strided_slice %189 {offsets = [0, 128], sizes = [8, 128], strides = [1, 1]} : vector<8x384xf32> to vector<8x128xf32>
    %201 = vector.extract_strided_slice %191 {offsets = [0, 128], sizes = [8, 128], strides = [1, 1]} : vector<8x384xf32> to vector<8x128xf32>
    %202 = arith.addf %200, %201 : vector<8x128xf32>
    %203 = arith.negf %202 : vector<8x128xf32>
    %204 = math.exp %203 : vector<8x128xf32>
    %cst_64 = arith.constant 1.000000e+00 : f32
    %205 = vector.broadcast %cst_64 : f32 to vector<8x128xf32>
    %206 = arith.addf %205, %204 : vector<8x128xf32>
    %207 = arith.divf %205, %206 : vector<8x128xf32>
    %208 = vector.extract_strided_slice %189 {offsets = [0, 256], sizes = [8, 128], strides = [1, 1]} : vector<8x384xf32> to vector<8x128xf32>
    %209 = vector.extract_strided_slice %191 {offsets = [0, 256], sizes = [8, 128], strides = [1, 1]} : vector<8x384xf32> to vector<8x128xf32>
    %210 = vector.broadcast %11 : vector<1x128xf32> to vector<8x128xf32>
    %211 = arith.addf %209, %210 : vector<8x128xf32>
    %212 = arith.mulf %199, %211 : vector<8x128xf32>
    %213 = arith.addf %208, %212 : vector<8x128xf32>
    %214 = math.tanh %213 : vector<8x128xf32>
    %cst_65 = arith.constant 1.000000e+00 : f32
    %215 = vector.broadcast %cst_65 : f32 to vector<8x128xf32>
    %216 = arith.subf %215, %207 : vector<8x128xf32>
    %217 = arith.mulf %216, %214 : vector<8x128xf32>
    %218 = arith.mulf %207, %184 : vector<8x128xf32>
    %219 = arith.addf %217, %218 : vector<8x128xf32>
    %c5_66 = arith.constant 5 : index
    %c0_67 = arith.constant 0 : index
    %c0_68 = arith.constant 0 : index
    %220 = vector.load %arg13[%c5_66, %c0_67, %c0_68] : memref<8x8x128xf32, #tpu.memory_space<vmem>>, vector<1x8x128xf32>
    %221 = vector.shape_cast %220 : vector<1x8x128xf32> to vector<8x128xf32>
    %222 = vector.shape_cast %219 : vector<8x128xf32> to vector<1x8x128xf32>
    tpu.vector_store %arg13[%c5_66, %c0_67, %c0_68], %222 {strides = array<i32>} : memref<8x8x128xf32, #tpu.memory_space<vmem>>, vector<1x8x128xf32>,
    %c6 = arith.constant 6 : index
    %c0_69 = arith.constant 0 : index
    %c0_70 = arith.constant 0 : index
    %223 = vector.load %arg12[%c6, %c0_69, %c0_70] : memref<8x8x384xf32, #tpu.memory_space<vmem>>, vector<1x8x384xf32>
    %224 = vector.shape_cast %223 : vector<1x8x384xf32> to vector<8x384xf32>
    %225 = arith.truncf %219 : vector<8x128xf32> to vector<8x128xbf16>
    %cst_71 = arith.constant dense<0.000000e+00> : vector<8x384xf32>
    %226 = tpu.matmul %225, %10, %cst_71 {dimension_numbers = #tpu.dot_dimension_numbers<[1], [0], [0], [1], [0, 0, 1, 1], [], []>} : vector<8x128xbf16>, vector<128x384xbf16>, vector<8x384xf32> -> vector<8x384xf32>
    %227 = vector.extract_strided_slice %224 {offsets = [0, 0], sizes = [8, 128], strides = [1, 1]} : vector<8x384xf32> to vector<8x128xf32>
    %228 = vector.extract_strided_slice %226 {offsets = [0, 0], sizes = [8, 128], strides = [1, 1]} : vector<8x384xf32> to vector<8x128xf32>
    %229 = arith.addf %227, %228 : vector<8x128xf32>
    %230 = arith.negf %229 : vector<8x128xf32>
    %231 = math.exp %230 : vector<8x128xf32>
    %cst_72 = arith.constant 1.000000e+00 : f32
    %232 = vector.broadcast %cst_72 : f32 to vector<8x128xf32>
    %233 = arith.addf %232, %231 : vector<8x128xf32>
    %234 = arith.divf %232, %233 : vector<8x128xf32>
    %235 = vector.extract_strided_slice %224 {offsets = [0, 128], sizes = [8, 128], strides = [1, 1]} : vector<8x384xf32> to vector<8x128xf32>
    %236 = vector.extract_strided_slice %226 {offsets = [0, 128], sizes = [8, 128], strides = [1, 1]} : vector<8x384xf32> to vector<8x128xf32>
    %237 = arith.addf %235, %236 : vector<8x128xf32>
    %238 = arith.negf %237 : vector<8x128xf32>
    %239 = math.exp %238 : vector<8x128xf32>
    %cst_73 = arith.constant 1.000000e+00 : f32
    %240 = vector.broadcast %cst_73 : f32 to vector<8x128xf32>
    %241 = arith.addf %240, %239 : vector<8x128xf32>
    %242 = arith.divf %240, %241 : vector<8x128xf32>
    %243 = vector.extract_strided_slice %224 {offsets = [0, 256], sizes = [8, 128], strides = [1, 1]} : vector<8x384xf32> to vector<8x128xf32>
    %244 = vector.extract_strided_slice %226 {offsets = [0, 256], sizes = [8, 128], strides = [1, 1]} : vector<8x384xf32> to vector<8x128xf32>
    %245 = vector.broadcast %11 : vector<1x128xf32> to vector<8x128xf32>
    %246 = arith.addf %244, %245 : vector<8x128xf32>
    %247 = arith.mulf %234, %246 : vector<8x128xf32>
    %248 = arith.addf %243, %247 : vector<8x128xf32>
    %249 = math.tanh %248 : vector<8x128xf32>
    %cst_74 = arith.constant 1.000000e+00 : f32
    %250 = vector.broadcast %cst_74 : f32 to vector<8x128xf32>
    %251 = arith.subf %250, %242 : vector<8x128xf32>
    %252 = arith.mulf %251, %249 : vector<8x128xf32>
    %253 = arith.mulf %242, %219 : vector<8x128xf32>
    %254 = arith.addf %252, %253 : vector<8x128xf32>
    %c6_75 = arith.constant 6 : index
    %c0_76 = arith.constant 0 : index
    %c0_77 = arith.constant 0 : index
    %255 = vector.load %arg13[%c6_75, %c0_76, %c0_77] : memref<8x8x128xf32, #tpu.memory_space<vmem>>, vector<1x8x128xf32>
    %256 = vector.shape_cast %255 : vector<1x8x128xf32> to vector<8x128xf32>
    %257 = vector.shape_cast %254 : vector<8x128xf32> to vector<1x8x128xf32>
    tpu.vector_store %arg13[%c6_75, %c0_76, %c0_77], %257 {strides = array<i32>} : memref<8x8x128xf32, #tpu.memory_space<vmem>>, vector<1x8x128xf32>,
    %c7 = arith.constant 7 : index
    %c0_78 = arith.constant 0 : index
    %c0_79 = arith.constant 0 : index
    %258 = vector.load %arg12[%c7, %c0_78, %c0_79] : memref<8x8x384xf32, #tpu.memory_space<vmem>>, vector<1x8x384xf32>
    %259 = vector.shape_cast %258 : vector<1x8x384xf32> to vector<8x384xf32>
    %260 = arith.truncf %254 : vector<8x128xf32> to vector<8x128xbf16>
    %cst_80 = arith.constant dense<0.000000e+00> : vector<8x384xf32>
    %261 = tpu.matmul %260, %10, %cst_80 {dimension_numbers = #tpu.dot_dimension_numbers<[1], [0], [0], [1], [0, 0, 1, 1], [], []>} : vector<8x128xbf16>, vector<128x384xbf16>, vector<8x384xf32> -> vector<8x384xf32>
    %262 = vector.extract_strided_slice %259 {offsets = [0, 0], sizes = [8, 128], strides = [1, 1]} : vector<8x384xf32> to vector<8x128xf32>
    %263 = vector.extract_strided_slice %261 {offsets = [0, 0], sizes = [8, 128], strides = [1, 1]} : vector<8x384xf32> to vector<8x128xf32>
    %264 = arith.addf %262, %263 : vector<8x128xf32>
    %265 = arith.negf %264 : vector<8x128xf32>
    %266 = math.exp %265 : vector<8x128xf32>
    %cst_81 = arith.constant 1.000000e+00 : f32
    %267 = vector.broadcast %cst_81 : f32 to vector<8x128xf32>
    %268 = arith.addf %267, %266 : vector<8x128xf32>
    %269 = arith.divf %267, %268 : vector<8x128xf32>
    %270 = vector.extract_strided_slice %259 {offsets = [0, 128], sizes = [8, 128], strides = [1, 1]} : vector<8x384xf32> to vector<8x128xf32>
    %271 = vector.extract_strided_slice %261 {offsets = [0, 128], sizes = [8, 128], strides = [1, 1]} : vector<8x384xf32> to vector<8x128xf32>
    %272 = arith.addf %270, %271 : vector<8x128xf32>
    %273 = arith.negf %272 : vector<8x128xf32>
    %274 = math.exp %273 : vector<8x128xf32>
    %cst_82 = arith.constant 1.000000e+00 : f32
    %275 = vector.broadcast %cst_82 : f32 to vector<8x128xf32>
    %276 = arith.addf %275, %274 : vector<8x128xf32>
    %277 = arith.divf %275, %276 : vector<8x128xf32>
    %278 = vector.extract_strided_slice %259 {offsets = [0, 256], sizes = [8, 128], strides = [1, 1]} : vector<8x384xf32> to vector<8x128xf32>
    %279 = vector.extract_strided_slice %261 {offsets = [0, 256], sizes = [8, 128], strides = [1, 1]} : vector<8x384xf32> to vector<8x128xf32>
    %280 = vector.broadcast %11 : vector<1x128xf32> to vector<8x128xf32>
    %281 = arith.addf %279, %280 : vector<8x128xf32>
    %282 = arith.mulf %269, %281 : vector<8x128xf32>
    %283 = arith.addf %278, %282 : vector<8x128xf32>
    %284 = math.tanh %283 : vector<8x128xf32>
    %cst_83 = arith.constant 1.000000e+00 : f32
    %285 = vector.broadcast %cst_83 : f32 to vector<8x128xf32>
    %286 = arith.subf %285, %277 : vector<8x128xf32>
    %287 = arith.mulf %286, %284 : vector<8x128xf32>
    %288 = arith.mulf %277, %254 : vector<8x128xf32>
    %289 = arith.addf %287, %288 : vector<8x128xf32>
    %c7_84 = arith.constant 7 : index
    %c0_85 = arith.constant 0 : index
    %c0_86 = arith.constant 0 : index
    %290 = vector.load %arg13[%c7_84, %c0_85, %c0_86] : memref<8x8x128xf32, #tpu.memory_space<vmem>>, vector<1x8x128xf32>
    %291 = vector.shape_cast %290 : vector<1x8x128xf32> to vector<8x128xf32>
    %292 = vector.shape_cast %289 : vector<8x128xf32> to vector<1x8x128xf32>
    tpu.vector_store %arg13[%c7_84, %c0_85, %c0_86], %292 {strides = array<i32>} : memref<8x8x128xf32, #tpu.memory_space<vmem>>, vector<1x8x128xf32>,
    %c0_87 = arith.constant 0 : index
    %c0_88 = arith.constant 0 : index
    %c0_89 = arith.constant 0 : index
    %293 = vector.load %arg13[%c0_87, %c0_88, %c0_89] : memref<8x8x128xf32, #tpu.memory_space<vmem>>, vector<8x8x128xf32>
    %294 = vector.shape_cast %293 : vector<8x8x128xf32> to vector<64x128xf32>
    %295 = arith.truncf %294 : vector<64x128xf32> to vector<64x128xbf16>
    %c0_90 = arith.constant 0 : index
    %c0_91 = arith.constant 0 : index
    %296 = vector.load %arg5[%c0_90, %c0_91] : memref<128x384xbf16, #tpu.memory_space<vmem>>, vector<128x384xbf16>
    %cst_92 = arith.constant dense<0.000000e+00> : vector<64x384xf32>
    %297 = tpu.matmul %295, %296, %cst_92 {dimension_numbers = #tpu.dot_dimension_numbers<[1], [0], [0], [1], [0, 0, 1, 1], [], []>} : vector<64x128xbf16>, vector<128x384xbf16>, vector<64x384xf32> -> vector<64x384xf32>
    %c0_93 = arith.constant 0 : index
    %c0_94 = arith.constant 0 : index
    %298 = vector.load %arg7[%c0_93, %c0_94] : memref<1x384xf32, #tpu.memory_space<vmem>>, vector<1x384xf32>
    %299 = vector.broadcast %298 : vector<1x384xf32> to vector<64x384xf32>
    %300 = arith.addf %297, %299 : vector<64x384xf32>
    %301 = vector.shape_cast %300 : vector<64x384xf32> to vector<8x8x384xf32>
    %c0_95 = arith.constant 0 : index
    %c0_96 = arith.constant 0 : index
    %c0_97 = arith.constant 0 : index
    %302 = vector.load %arg12[%c0_95, %c0_96, %c0_97] : memref<8x8x384xf32, #tpu.memory_space<vmem>>, vector<8x8x384xf32>
    tpu.vector_store %arg12[%c0_95, %c0_96, %c0_97], %301 {strides = array<i32>} : memref<8x8x384xf32, #tpu.memory_space<vmem>>, vector<8x8x384xf32>,
    %c0_98 = arith.constant 0 : index
    %c0_99 = arith.constant 0 : index
    %303 = vector.load %arg6[%c0_98, %c0_99] : memref<128x384xbf16, #tpu.memory_space<vmem>>, vector<128x384xbf16>
    %c0_100 = arith.constant 0 : index
    %c0_101 = arith.constant 0 : index
    %304 = vector.load %arg8[%c0_100, %c0_101] : memref<1x128xf32, #tpu.memory_space<vmem>>, vector<1x128xf32>
    %cst_102 = arith.constant 0.000000e+00 : f32
    %305 = vector.broadcast %cst_102 : f32 to vector<8x128xf32>
    %c0_103 = arith.constant 0 : index
    %c0_104 = arith.constant 0 : index
    %c0_105 = arith.constant 0 : index
    %306 = vector.load %arg12[%c0_103, %c0_104, %c0_105] : memref<8x8x384xf32, #tpu.memory_space<vmem>>, vector<1x8x384xf32>
    %307 = vector.shape_cast %306 : vector<1x8x384xf32> to vector<8x384xf32>
    %308 = arith.truncf %305 : vector<8x128xf32> to vector<8x128xbf16>
    %cst_106 = arith.constant dense<0.000000e+00> : vector<8x384xf32>
    %309 = tpu.matmul %308, %303, %cst_106 {dimension_numbers = #tpu.dot_dimension_numbers<[1], [0], [0], [1], [0, 0, 1, 1], [], []>} : vector<8x128xbf16>, vector<128x384xbf16>, vector<8x384xf32> -> vector<8x384xf32>
    %310 = vector.extract_strided_slice %307 {offsets = [0, 0], sizes = [8, 128], strides = [1, 1]} : vector<8x384xf32> to vector<8x128xf32>
    %311 = vector.extract_strided_slice %309 {offsets = [0, 0], sizes = [8, 128], strides = [1, 1]} : vector<8x384xf32> to vector<8x128xf32>
    %312 = arith.addf %310, %311 : vector<8x128xf32>
    %313 = arith.negf %312 : vector<8x128xf32>
    %314 = math.exp %313 : vector<8x128xf32>
    %cst_107 = arith.constant 1.000000e+00 : f32
    %315 = vector.broadcast %cst_107 : f32 to vector<8x128xf32>
    %316 = arith.addf %315, %314 : vector<8x128xf32>
    %317 = arith.divf %315, %316 : vector<8x128xf32>
    %318 = vector.extract_strided_slice %307 {offsets = [0, 128], sizes = [8, 128], strides = [1, 1]} : vector<8x384xf32> to vector<8x128xf32>
    %319 = vector.extract_strided_slice %309 {offsets = [0, 128], sizes = [8, 128], strides = [1, 1]} : vector<8x384xf32> to vector<8x128xf32>
    %320 = arith.addf %318, %319 : vector<8x128xf32>
    %321 = arith.negf %320 : vector<8x128xf32>
    %322 = math.exp %321 : vector<8x128xf32>
    %cst_108 = arith.constant 1.000000e+00 : f32
    %323 = vector.broadcast %cst_108 : f32 to vector<8x128xf32>
    %324 = arith.addf %323, %322 : vector<8x128xf32>
    %325 = arith.divf %323, %324 : vector<8x128xf32>
    %326 = vector.extract_strided_slice %307 {offsets = [0, 256], sizes = [8, 128], strides = [1, 1]} : vector<8x384xf32> to vector<8x128xf32>
    %327 = vector.extract_strided_slice %309 {offsets = [0, 256], sizes = [8, 128], strides = [1, 1]} : vector<8x384xf32> to vector<8x128xf32>
    %328 = vector.broadcast %304 : vector<1x128xf32> to vector<8x128xf32>
    %329 = arith.addf %327, %328 : vector<8x128xf32>
    %330 = arith.mulf %317, %329 : vector<8x128xf32>
    %331 = arith.addf %326, %330 : vector<8x128xf32>
    %332 = math.tanh %331 : vector<8x128xf32>
    %cst_109 = arith.constant 1.000000e+00 : f32
    %333 = vector.broadcast %cst_109 : f32 to vector<8x128xf32>
    %334 = arith.subf %333, %325 : vector<8x128xf32>
    %335 = arith.mulf %334, %332 : vector<8x128xf32>
    %336 = arith.mulf %325, %305 : vector<8x128xf32>
    %337 = arith.addf %335, %336 : vector<8x128xf32>
    %c1_110 = arith.constant 1 : index
    %c0_111 = arith.constant 0 : index
    %c0_112 = arith.constant 0 : index
    %338 = vector.load %arg12[%c1_110, %c0_111, %c0_112] : memref<8x8x384xf32, #tpu.memory_space<vmem>>, vector<1x8x384xf32>
    %339 = vector.shape_cast %338 : vector<1x8x384xf32> to vector<8x384xf32>
    %340 = arith.truncf %337 : vector<8x128xf32> to vector<8x128xbf16>
    %cst_113 = arith.constant dense<0.000000e+00> : vector<8x384xf32>
    %341 = tpu.matmul %340, %303, %cst_113 {dimension_numbers = #tpu.dot_dimension_numbers<[1], [0], [0], [1], [0, 0, 1, 1], [], []>} : vector<8x128xbf16>, vector<128x384xbf16>, vector<8x384xf32> -> vector<8x384xf32>
    %342 = vector.extract_strided_slice %339 {offsets = [0, 0], sizes = [8, 128], strides = [1, 1]} : vector<8x384xf32> to vector<8x128xf32>
    %343 = vector.extract_strided_slice %341 {offsets = [0, 0], sizes = [8, 128], strides = [1, 1]} : vector<8x384xf32> to vector<8x128xf32>
    %344 = arith.addf %342, %343 : vector<8x128xf32>
    %345 = arith.negf %344 : vector<8x128xf32>
    %346 = math.exp %345 : vector<8x128xf32>
    %cst_114 = arith.constant 1.000000e+00 : f32
    %347 = vector.broadcast %cst_114 : f32 to vector<8x128xf32>
    %348 = arith.addf %347, %346 : vector<8x128xf32>
    %349 = arith.divf %347, %348 : vector<8x128xf32>
    %350 = vector.extract_strided_slice %339 {offsets = [0, 128], sizes = [8, 128], strides = [1, 1]} : vector<8x384xf32> to vector<8x128xf32>
    %351 = vector.extract_strided_slice %341 {offsets = [0, 128], sizes = [8, 128], strides = [1, 1]} : vector<8x384xf32> to vector<8x128xf32>
    %352 = arith.addf %350, %351 : vector<8x128xf32>
    %353 = arith.negf %352 : vector<8x128xf32>
    %354 = math.exp %353 : vector<8x128xf32>
    %cst_115 = arith.constant 1.000000e+00 : f32
    %355 = vector.broadcast %cst_115 : f32 to vector<8x128xf32>
    %356 = arith.addf %355, %354 : vector<8x128xf32>
    %357 = arith.divf %355, %356 : vector<8x128xf32>
    %358 = vector.extract_strided_slice %339 {offsets = [0, 256], sizes = [8, 128], strides = [1, 1]} : vector<8x384xf32> to vector<8x128xf32>
    %359 = vector.extract_strided_slice %341 {offsets = [0, 256], sizes = [8, 128], strides = [1, 1]} : vector<8x384xf32> to vector<8x128xf32>
    %360 = vector.broadcast %304 : vector<1x128xf32> to vector<8x128xf32>
    %361 = arith.addf %359, %360 : vector<8x128xf32>
    %362 = arith.mulf %349, %361 : vector<8x128xf32>
    %363 = arith.addf %358, %362 : vector<8x128xf32>
    %364 = math.tanh %363 : vector<8x128xf32>
    %cst_116 = arith.constant 1.000000e+00 : f32
    %365 = vector.broadcast %cst_116 : f32 to vector<8x128xf32>
    %366 = arith.subf %365, %357 : vector<8x128xf32>
    %367 = arith.mulf %366, %364 : vector<8x128xf32>
    %368 = arith.mulf %357, %337 : vector<8x128xf32>
    %369 = arith.addf %367, %368 : vector<8x128xf32>
    %c2_117 = arith.constant 2 : index
    %c0_118 = arith.constant 0 : index
    %c0_119 = arith.constant 0 : index
    %370 = vector.load %arg12[%c2_117, %c0_118, %c0_119] : memref<8x8x384xf32, #tpu.memory_space<vmem>>, vector<1x8x384xf32>
    %371 = vector.shape_cast %370 : vector<1x8x384xf32> to vector<8x384xf32>
    %372 = arith.truncf %369 : vector<8x128xf32> to vector<8x128xbf16>
    %cst_120 = arith.constant dense<0.000000e+00> : vector<8x384xf32>
    %373 = tpu.matmul %372, %303, %cst_120 {dimension_numbers = #tpu.dot_dimension_numbers<[1], [0], [0], [1], [0, 0, 1, 1], [], []>} : vector<8x128xbf16>, vector<128x384xbf16>, vector<8x384xf32> -> vector<8x384xf32>
    %374 = vector.extract_strided_slice %371 {offsets = [0, 0], sizes = [8, 128], strides = [1, 1]} : vector<8x384xf32> to vector<8x128xf32>
    %375 = vector.extract_strided_slice %373 {offsets = [0, 0], sizes = [8, 128], strides = [1, 1]} : vector<8x384xf32> to vector<8x128xf32>
    %376 = arith.addf %374, %375 : vector<8x128xf32>
    %377 = arith.negf %376 : vector<8x128xf32>
    %378 = math.exp %377 : vector<8x128xf32>
    %cst_121 = arith.constant 1.000000e+00 : f32
    %379 = vector.broadcast %cst_121 : f32 to vector<8x128xf32>
    %380 = arith.addf %379, %378 : vector<8x128xf32>
    %381 = arith.divf %379, %380 : vector<8x128xf32>
    %382 = vector.extract_strided_slice %371 {offsets = [0, 128], sizes = [8, 128], strides = [1, 1]} : vector<8x384xf32> to vector<8x128xf32>
    %383 = vector.extract_strided_slice %373 {offsets = [0, 128], sizes = [8, 128], strides = [1, 1]} : vector<8x384xf32> to vector<8x128xf32>
    %384 = arith.addf %382, %383 : vector<8x128xf32>
    %385 = arith.negf %384 : vector<8x128xf32>
    %386 = math.exp %385 : vector<8x128xf32>
    %cst_122 = arith.constant 1.000000e+00 : f32
    %387 = vector.broadcast %cst_122 : f32 to vector<8x128xf32>
    %388 = arith.addf %387, %386 : vector<8x128xf32>
    %389 = arith.divf %387, %388 : vector<8x128xf32>
    %390 = vector.extract_strided_slice %371 {offsets = [0, 256], sizes = [8, 128], strides = [1, 1]} : vector<8x384xf32> to vector<8x128xf32>
    %391 = vector.extract_strided_slice %373 {offsets = [0, 256], sizes = [8, 128], strides = [1, 1]} : vector<8x384xf32> to vector<8x128xf32>
    %392 = vector.broadcast %304 : vector<1x128xf32> to vector<8x128xf32>
    %393 = arith.addf %391, %392 : vector<8x128xf32>
    %394 = arith.mulf %381, %393 : vector<8x128xf32>
    %395 = arith.addf %390, %394 : vector<8x128xf32>
    %396 = math.tanh %395 : vector<8x128xf32>
    %cst_123 = arith.constant 1.000000e+00 : f32
    %397 = vector.broadcast %cst_123 : f32 to vector<8x128xf32>
    %398 = arith.subf %397, %389 : vector<8x128xf32>
    %399 = arith.mulf %398, %396 : vector<8x128xf32>
    %400 = arith.mulf %389, %369 : vector<8x128xf32>
    %401 = arith.addf %399, %400 : vector<8x128xf32>
    %c3_124 = arith.constant 3 : index
    %c0_125 = arith.constant 0 : index
    %c0_126 = arith.constant 0 : index
    %402 = vector.load %arg12[%c3_124, %c0_125, %c0_126] : memref<8x8x384xf32, #tpu.memory_space<vmem>>, vector<1x8x384xf32>
    %403 = vector.shape_cast %402 : vector<1x8x384xf32> to vector<8x384xf32>
    %404 = arith.truncf %401 : vector<8x128xf32> to vector<8x128xbf16>
    %cst_127 = arith.constant dense<0.000000e+00> : vector<8x384xf32>
    %405 = tpu.matmul %404, %303, %cst_127 {dimension_numbers = #tpu.dot_dimension_numbers<[1], [0], [0], [1], [0, 0, 1, 1], [], []>} : vector<8x128xbf16>, vector<128x384xbf16>, vector<8x384xf32> -> vector<8x384xf32>
    %406 = vector.extract_strided_slice %403 {offsets = [0, 0], sizes = [8, 128], strides = [1, 1]} : vector<8x384xf32> to vector<8x128xf32>
    %407 = vector.extract_strided_slice %405 {offsets = [0, 0], sizes = [8, 128], strides = [1, 1]} : vector<8x384xf32> to vector<8x128xf32>
    %408 = arith.addf %406, %407 : vector<8x128xf32>
    %409 = arith.negf %408 : vector<8x128xf32>
    %410 = math.exp %409 : vector<8x128xf32>
    %cst_128 = arith.constant 1.000000e+00 : f32
    %411 = vector.broadcast %cst_128 : f32 to vector<8x128xf32>
    %412 = arith.addf %411, %410 : vector<8x128xf32>
    %413 = arith.divf %411, %412 : vector<8x128xf32>
    %414 = vector.extract_strided_slice %403 {offsets = [0, 128], sizes = [8, 128], strides = [1, 1]} : vector<8x384xf32> to vector<8x128xf32>
    %415 = vector.extract_strided_slice %405 {offsets = [0, 128], sizes = [8, 128], strides = [1, 1]} : vector<8x384xf32> to vector<8x128xf32>
    %416 = arith.addf %414, %415 : vector<8x128xf32>
    %417 = arith.negf %416 : vector<8x128xf32>
    %418 = math.exp %417 : vector<8x128xf32>
    %cst_129 = arith.constant 1.000000e+00 : f32
    %419 = vector.broadcast %cst_129 : f32 to vector<8x128xf32>
    %420 = arith.addf %419, %418 : vector<8x128xf32>
    %421 = arith.divf %419, %420 : vector<8x128xf32>
    %422 = vector.extract_strided_slice %403 {offsets = [0, 256], sizes = [8, 128], strides = [1, 1]} : vector<8x384xf32> to vector<8x128xf32>
    %423 = vector.extract_strided_slice %405 {offsets = [0, 256], sizes = [8, 128], strides = [1, 1]} : vector<8x384xf32> to vector<8x128xf32>
    %424 = vector.broadcast %304 : vector<1x128xf32> to vector<8x128xf32>
    %425 = arith.addf %423, %424 : vector<8x128xf32>
    %426 = arith.mulf %413, %425 : vector<8x128xf32>
    %427 = arith.addf %422, %426 : vector<8x128xf32>
    %428 = math.tanh %427 : vector<8x128xf32>
    %cst_130 = arith.constant 1.000000e+00 : f32
    %429 = vector.broadcast %cst_130 : f32 to vector<8x128xf32>
    %430 = arith.subf %429, %421 : vector<8x128xf32>
    %431 = arith.mulf %430, %428 : vector<8x128xf32>
    %432 = arith.mulf %421, %401 : vector<8x128xf32>
    %433 = arith.addf %431, %432 : vector<8x128xf32>
    %c4_131 = arith.constant 4 : index
    %c0_132 = arith.constant 0 : index
    %c0_133 = arith.constant 0 : index
    %434 = vector.load %arg12[%c4_131, %c0_132, %c0_133] : memref<8x8x384xf32, #tpu.memory_space<vmem>>, vector<1x8x384xf32>
    %435 = vector.shape_cast %434 : vector<1x8x384xf32> to vector<8x384xf32>
    %436 = arith.truncf %433 : vector<8x128xf32> to vector<8x128xbf16>
    %cst_134 = arith.constant dense<0.000000e+00> : vector<8x384xf32>
    %437 = tpu.matmul %436, %303, %cst_134 {dimension_numbers = #tpu.dot_dimension_numbers<[1], [0], [0], [1], [0, 0, 1, 1], [], []>} : vector<8x128xbf16>, vector<128x384xbf16>, vector<8x384xf32> -> vector<8x384xf32>
    %438 = vector.extract_strided_slice %435 {offsets = [0, 0], sizes = [8, 128], strides = [1, 1]} : vector<8x384xf32> to vector<8x128xf32>
    %439 = vector.extract_strided_slice %437 {offsets = [0, 0], sizes = [8, 128], strides = [1, 1]} : vector<8x384xf32> to vector<8x128xf32>
    %440 = arith.addf %438, %439 : vector<8x128xf32>
    %441 = arith.negf %440 : vector<8x128xf32>
    %442 = math.exp %441 : vector<8x128xf32>
    %cst_135 = arith.constant 1.000000e+00 : f32
    %443 = vector.broadcast %cst_135 : f32 to vector<8x128xf32>
    %444 = arith.addf %443, %442 : vector<8x128xf32>
    %445 = arith.divf %443, %444 : vector<8x128xf32>
    %446 = vector.extract_strided_slice %435 {offsets = [0, 128], sizes = [8, 128], strides = [1, 1]} : vector<8x384xf32> to vector<8x128xf32>
    %447 = vector.extract_strided_slice %437 {offsets = [0, 128], sizes = [8, 128], strides = [1, 1]} : vector<8x384xf32> to vector<8x128xf32>
    %448 = arith.addf %446, %447 : vector<8x128xf32>
    %449 = arith.negf %448 : vector<8x128xf32>
    %450 = math.exp %449 : vector<8x128xf32>
    %cst_136 = arith.constant 1.000000e+00 : f32
    %451 = vector.broadcast %cst_136 : f32 to vector<8x128xf32>
    %452 = arith.addf %451, %450 : vector<8x128xf32>
    %453 = arith.divf %451, %452 : vector<8x128xf32>
    %454 = vector.extract_strided_slice %435 {offsets = [0, 256], sizes = [8, 128], strides = [1, 1]} : vector<8x384xf32> to vector<8x128xf32>
    %455 = vector.extract_strided_slice %437 {offsets = [0, 256], sizes = [8, 128], strides = [1, 1]} : vector<8x384xf32> to vector<8x128xf32>
    %456 = vector.broadcast %304 : vector<1x128xf32> to vector<8x128xf32>
    %457 = arith.addf %455, %456 : vector<8x128xf32>
    %458 = arith.mulf %445, %457 : vector<8x128xf32>
    %459 = arith.addf %454, %458 : vector<8x128xf32>
    %460 = math.tanh %459 : vector<8x128xf32>
    %cst_137 = arith.constant 1.000000e+00 : f32
    %461 = vector.broadcast %cst_137 : f32 to vector<8x128xf32>
    %462 = arith.subf %461, %453 : vector<8x128xf32>
    %463 = arith.mulf %462, %460 : vector<8x128xf32>
    %464 = arith.mulf %453, %433 : vector<8x128xf32>
    %465 = arith.addf %463, %464 : vector<8x128xf32>
    %c5_138 = arith.constant 5 : index
    %c0_139 = arith.constant 0 : index
    %c0_140 = arith.constant 0 : index
    %466 = vector.load %arg12[%c5_138, %c0_139, %c0_140] : memref<8x8x384xf32, #tpu.memory_space<vmem>>, vector<1x8x384xf32>
    %467 = vector.shape_cast %466 : vector<1x8x384xf32> to vector<8x384xf32>
    %468 = arith.truncf %465 : vector<8x128xf32> to vector<8x128xbf16>
    %cst_141 = arith.constant dense<0.000000e+00> : vector<8x384xf32>
    %469 = tpu.matmul %468, %303, %cst_141 {dimension_numbers = #tpu.dot_dimension_numbers<[1], [0], [0], [1], [0, 0, 1, 1], [], []>} : vector<8x128xbf16>, vector<128x384xbf16>, vector<8x384xf32> -> vector<8x384xf32>
    %470 = vector.extract_strided_slice %467 {offsets = [0, 0], sizes = [8, 128], strides = [1, 1]} : vector<8x384xf32> to vector<8x128xf32>
    %471 = vector.extract_strided_slice %469 {offsets = [0, 0], sizes = [8, 128], strides = [1, 1]} : vector<8x384xf32> to vector<8x128xf32>
    %472 = arith.addf %470, %471 : vector<8x128xf32>
    %473 = arith.negf %472 : vector<8x128xf32>
    %474 = math.exp %473 : vector<8x128xf32>
    %cst_142 = arith.constant 1.000000e+00 : f32
    %475 = vector.broadcast %cst_142 : f32 to vector<8x128xf32>
    %476 = arith.addf %475, %474 : vector<8x128xf32>
    %477 = arith.divf %475, %476 : vector<8x128xf32>
    %478 = vector.extract_strided_slice %467 {offsets = [0, 128], sizes = [8, 128], strides = [1, 1]} : vector<8x384xf32> to vector<8x128xf32>
    %479 = vector.extract_strided_slice %469 {offsets = [0, 128], sizes = [8, 128], strides = [1, 1]} : vector<8x384xf32> to vector<8x128xf32>
    %480 = arith.addf %478, %479 : vector<8x128xf32>
    %481 = arith.negf %480 : vector<8x128xf32>
    %482 = math.exp %481 : vector<8x128xf32>
    %cst_143 = arith.constant 1.000000e+00 : f32
    %483 = vector.broadcast %cst_143 : f32 to vector<8x128xf32>
    %484 = arith.addf %483, %482 : vector<8x128xf32>
    %485 = arith.divf %483, %484 : vector<8x128xf32>
    %486 = vector.extract_strided_slice %467 {offsets = [0, 256], sizes = [8, 128], strides = [1, 1]} : vector<8x384xf32> to vector<8x128xf32>
    %487 = vector.extract_strided_slice %469 {offsets = [0, 256], sizes = [8, 128], strides = [1, 1]} : vector<8x384xf32> to vector<8x128xf32>
    %488 = vector.broadcast %304 : vector<1x128xf32> to vector<8x128xf32>
    %489 = arith.addf %487, %488 : vector<8x128xf32>
    %490 = arith.mulf %477, %489 : vector<8x128xf32>
    %491 = arith.addf %486, %490 : vector<8x128xf32>
    %492 = math.tanh %491 : vector<8x128xf32>
    %cst_144 = arith.constant 1.000000e+00 : f32
    %493 = vector.broadcast %cst_144 : f32 to vector<8x128xf32>
    %494 = arith.subf %493, %485 : vector<8x128xf32>
    %495 = arith.mulf %494, %492 : vector<8x128xf32>
    %496 = arith.mulf %485, %465 : vector<8x128xf32>
    %497 = arith.addf %495, %496 : vector<8x128xf32>
    %c6_145 = arith.constant 6 : index
    %c0_146 = arith.constant 0 : index
    %c0_147 = arith.constant 0 : index
    %498 = vector.load %arg12[%c6_145, %c0_146, %c0_147] : memref<8x8x384xf32, #tpu.memory_space<vmem>>, vector<1x8x384xf32>
    %499 = vector.shape_cast %498 : vector<1x8x384xf32> to vector<8x384xf32>
    %500 = arith.truncf %497 : vector<8x128xf32> to vector<8x128xbf16>
    %cst_148 = arith.constant dense<0.000000e+00> : vector<8x384xf32>
    %501 = tpu.matmul %500, %303, %cst_148 {dimension_numbers = #tpu.dot_dimension_numbers<[1], [0], [0], [1], [0, 0, 1, 1], [], []>} : vector<8x128xbf16>, vector<128x384xbf16>, vector<8x384xf32> -> vector<8x384xf32>
    %502 = vector.extract_strided_slice %499 {offsets = [0, 0], sizes = [8, 128], strides = [1, 1]} : vector<8x384xf32> to vector<8x128xf32>
    %503 = vector.extract_strided_slice %501 {offsets = [0, 0], sizes = [8, 128], strides = [1, 1]} : vector<8x384xf32> to vector<8x128xf32>
    %504 = arith.addf %502, %503 : vector<8x128xf32>
    %505 = arith.negf %504 : vector<8x128xf32>
    %506 = math.exp %505 : vector<8x128xf32>
    %cst_149 = arith.constant 1.000000e+00 : f32
    %507 = vector.broadcast %cst_149 : f32 to vector<8x128xf32>
    %508 = arith.addf %507, %506 : vector<8x128xf32>
    %509 = arith.divf %507, %508 : vector<8x128xf32>
    %510 = vector.extract_strided_slice %499 {offsets = [0, 128], sizes = [8, 128], strides = [1, 1]} : vector<8x384xf32> to vector<8x128xf32>
    %511 = vector.extract_strided_slice %501 {offsets = [0, 128], sizes = [8, 128], strides = [1, 1]} : vector<8x384xf32> to vector<8x128xf32>
    %512 = arith.addf %510, %511 : vector<8x128xf32>
    %513 = arith.negf %512 : vector<8x128xf32>
    %514 = math.exp %513 : vector<8x128xf32>
    %cst_150 = arith.constant 1.000000e+00 : f32
    %515 = vector.broadcast %cst_150 : f32 to vector<8x128xf32>
    %516 = arith.addf %515, %514 : vector<8x128xf32>
    %517 = arith.divf %515, %516 : vector<8x128xf32>
    %518 = vector.extract_strided_slice %499 {offsets = [0, 256], sizes = [8, 128], strides = [1, 1]} : vector<8x384xf32> to vector<8x128xf32>
    %519 = vector.extract_strided_slice %501 {offsets = [0, 256], sizes = [8, 128], strides = [1, 1]} : vector<8x384xf32> to vector<8x128xf32>
    %520 = vector.broadcast %304 : vector<1x128xf32> to vector<8x128xf32>
    %521 = arith.addf %519, %520 : vector<8x128xf32>
    %522 = arith.mulf %509, %521 : vector<8x128xf32>
    %523 = arith.addf %518, %522 : vector<8x128xf32>
    %524 = math.tanh %523 : vector<8x128xf32>
    %cst_151 = arith.constant 1.000000e+00 : f32
    %525 = vector.broadcast %cst_151 : f32 to vector<8x128xf32>
    %526 = arith.subf %525, %517 : vector<8x128xf32>
    %527 = arith.mulf %526, %524 : vector<8x128xf32>
    %528 = arith.mulf %517, %497 : vector<8x128xf32>
    %529 = arith.addf %527, %528 : vector<8x128xf32>
    %c7_152 = arith.constant 7 : index
    %c0_153 = arith.constant 0 : index
    %c0_154 = arith.constant 0 : index
    %530 = vector.load %arg12[%c7_152, %c0_153, %c0_154] : memref<8x8x384xf32, #tpu.memory_space<vmem>>, vector<1x8x384xf32>
    %531 = vector.shape_cast %530 : vector<1x8x384xf32> to vector<8x384xf32>
    %532 = arith.truncf %529 : vector<8x128xf32> to vector<8x128xbf16>
    %cst_155 = arith.constant dense<0.000000e+00> : vector<8x384xf32>
    %533 = tpu.matmul %532, %303, %cst_155 {dimension_numbers = #tpu.dot_dimension_numbers<[1], [0], [0], [1], [0, 0, 1, 1], [], []>} : vector<8x128xbf16>, vector<128x384xbf16>, vector<8x384xf32> -> vector<8x384xf32>
    %534 = vector.extract_strided_slice %531 {offsets = [0, 0], sizes = [8, 128], strides = [1, 1]} : vector<8x384xf32> to vector<8x128xf32>
    %535 = vector.extract_strided_slice %533 {offsets = [0, 0], sizes = [8, 128], strides = [1, 1]} : vector<8x384xf32> to vector<8x128xf32>
    %536 = arith.addf %534, %535 : vector<8x128xf32>
    %537 = arith.negf %536 : vector<8x128xf32>
    %538 = math.exp %537 : vector<8x128xf32>
    %cst_156 = arith.constant 1.000000e+00 : f32
    %539 = vector.broadcast %cst_156 : f32 to vector<8x128xf32>
    %540 = arith.addf %539, %538 : vector<8x128xf32>
    %541 = arith.divf %539, %540 : vector<8x128xf32>
    %542 = vector.extract_strided_slice %531 {offsets = [0, 128], sizes = [8, 128], strides = [1, 1]} : vector<8x384xf32> to vector<8x128xf32>
    %543 = vector.extract_strided_slice %533 {offsets = [0, 128], sizes = [8, 128], strides = [1, 1]} : vector<8x384xf32> to vector<8x128xf32>
    %544 = arith.addf %542, %543 : vector<8x128xf32>
    %545 = arith.negf %544 : vector<8x128xf32>
    %546 = math.exp %545 : vector<8x128xf32>
    %cst_157 = arith.constant 1.000000e+00 : f32
    %547 = vector.broadcast %cst_157 : f32 to vector<8x128xf32>
    %548 = arith.addf %547, %546 : vector<8x128xf32>
    %549 = arith.divf %547, %548 : vector<8x128xf32>
    %550 = vector.extract_strided_slice %531 {offsets = [0, 256], sizes = [8, 128], strides = [1, 1]} : vector<8x384xf32> to vector<8x128xf32>
    %551 = vector.extract_strided_slice %533 {offsets = [0, 256], sizes = [8, 128], strides = [1, 1]} : vector<8x384xf32> to vector<8x128xf32>
    %552 = vector.broadcast %304 : vector<1x128xf32> to vector<8x128xf32>
    %553 = arith.addf %551, %552 : vector<8x128xf32>
    %554 = arith.mulf %541, %553 : vector<8x128xf32>
    %555 = arith.addf %550, %554 : vector<8x128xf32>
    %556 = math.tanh %555 : vector<8x128xf32>
    %cst_158 = arith.constant 1.000000e+00 : f32
    %557 = vector.broadcast %cst_158 : f32 to vector<8x128xf32>
    %558 = arith.subf %557, %549 : vector<8x128xf32>
    %559 = arith.mulf %558, %556 : vector<8x128xf32>
    %560 = arith.mulf %549, %529 : vector<8x128xf32>
    %561 = arith.addf %559, %560 : vector<8x128xf32>
    %562 = arith.truncf %561 : vector<8x128xf32> to vector<8x128xbf16>
    %c0_159 = arith.constant 0 : index
    %c0_160 = arith.constant 0 : index
    %563 = vector.load %arg9[%c0_159, %c0_160] : memref<128x128xbf16, #tpu.memory_space<vmem>>, vector<128x128xbf16>
    %cst_161 = arith.constant dense<0.000000e+00> : vector<8x128xf32>
    %564 = tpu.matmul %562, %563, %cst_161 {dimension_numbers = #tpu.dot_dimension_numbers<[1], [0], [0], [1], [0, 0, 1, 1], [], []>} : vector<8x128xbf16>, vector<128x128xbf16>, vector<8x128xf32> -> vector<8x128xf32>
    %c0_162 = arith.constant 0 : index
    %c0_163 = arith.constant 0 : index
    %565 = vector.load %arg10[%c0_162, %c0_163] : memref<1x128xf32, #tpu.memory_space<vmem>>, vector<1x128xf32>
    %566 = vector.broadcast %565 : vector<1x128xf32> to vector<8x128xf32>
    %567 = arith.addf %564, %566 : vector<8x128xf32>
    %c0_164 = arith.constant 0 : index
    %c0_165 = arith.constant 0 : index
    %568 = vector.load %arg11[%c0_164, %c0_165] : memref<8x128xf32, #tpu.memory_space<vmem>>, vector<8x128xf32>
    tpu.vector_store %arg11[%c0_164, %c0_165], %567 {strides = array<i32>} : memref<8x128xf32, #tpu.memory_space<vmem>>, vector<8x128xf32>,
    return
  }
}

</mosaic_0001>

<llo_original>
// kernel: tpu_custom_call.1
$region0: #{tpu_custom_call.1}
  #allocation0 [shape = 'u32[]', space=smem, size = 0x4, offset = 0x4, fixed_abs, tag = 'smem constant byte address 0x4 - core index']
  #allocation1 [shape = 'u32[144,128]{1,0:T(1,128)}', space=vmem, size = 0x12000, scoped, tag = 'internal scratch']
  #allocation2 [shape = 'f32[8,8,384]{2,1,0:T(8,128)}', space=vmem, size = 0x18000, scoped, tag = 'scratch operand']
  #allocation3 [shape = 'f32[8,8,128]{2,1,0:T(8,128)}', space=vmem, size = 0x8000, scoped, tag = 'scratch operand']
  %s0 = inlined_call_operand.hbm [shape: f32[8,8,128], index: 0, kind: input, shape index: {}]
  %s1 = inlined_call_operand.hbm [shape: bf16[128,384], index: 1, kind: input, shape index: {}]
  %s2 = inlined_call_operand.hbm [shape: bf16[128,384], index: 2, kind: input, shape index: {}]
  %s3 = inlined_call_operand.vmem [shape: f32[1,384], index: 3, kind: input, shape index: {}]
  %s4 = inlined_call_operand.vmem [shape: f32[1,128], index: 4, kind: input, shape index: {}]
  %s5 = inlined_call_operand.hbm [shape: bf16[128,384], index: 5, kind: input, shape index: {}]
  %s6 = inlined_call_operand.hbm [shape: bf16[128,384], index: 6, kind: input, shape index: {}]
  %s7 = inlined_call_operand.vmem [shape: f32[1,384], index: 7, kind: input, shape index: {}]
  %s8 = inlined_call_operand.vmem [shape: f32[1,128], index: 8, kind: input, shape index: {}]
  %s9 = inlined_call_operand.hbm [shape: bf16[128,128], index: 9, kind: input, shape index: {}]
  %s10 = inlined_call_operand.vmem [shape: f32[1,128], index: 10, kind: input, shape index: {}]
  %s11 = inlined_call_operand.hbm [shape: f32[8,128], index: 11, kind: output, shape index: {}]
  %s12 = sld [smem:[#allocation0]]
  $region78: #{tpu_custom_call.1} parent=0
    _
  %s14 = ssub.s32 1, %s12
  %s15 = scalar_select 0, %s14, %s12
  $region1: #{tpu_custom_call.1} parent=0
    #allocation4 [shape = 'u8[32768]{0}', space=vmem, size = 0x8000, scoped, tag = 'input window, operand 0, single buffered']
    #allocation5 [shape = 's32[1]{0}', space=sflag, size = 0x4, scoped, tag = 'scoped memory for tpu_custom_call.1']
    #allocation6 [shape = 's32[1]{0}', space=sflag, size = 0x4, scoped, tag = 'scoped memory for tpu_custom_call.1']
    #allocation7 [shape = 'u8[98304]{0}', space=vmem, size = 0x18000, scoped, tag = 'input window, operand 1, single buffered']
    #allocation8 [shape = 's32[1]{0}', space=sflag, size = 0x4, scoped, tag = 'scoped memory for tpu_custom_call.1']
    #allocation9 [shape = 'u8[98304]{0}', space=vmem, size = 0x18000, scoped, tag = 'input window, operand 2, single buffered']
    #allocation10 [shape = 'u8[98304]{0}', space=vmem, size = 0x18000, scoped, tag = 'input window, operand 5, single buffered']
    #allocation11 [shape = 's32[1]{0}', space=sflag, size = 0x4, scoped, tag = 'scoped memory for tpu_custom_call.1']
    #allocation12 [shape = 'u8[98304]{0}', space=vmem, size = 0x18000, scoped, tag = 'input window, operand 6, single buffered']
    #allocation13 [shape = 'u8[32768]{0}', space=vmem, size = 0x8000, scoped, tag = 'input window, operand 9, single buffered']
    #allocation14 [shape = 's32[1]{0}', space=sflag, size = 0x4, scoped, tag = 'scoped memory for tpu_custom_call.1']
    #allocation15 [shape = 'u8[4096]{0}', space=vmem, size = 0x1000, scoped, tag = 'output window, operand 0, single buffered']
    %16 = vsyncpa [#allocation5], 0
    %17 = vsyncpa [#allocation8], 0
    %18 = vsyncpa [#allocation11], 0
    %19 = vsyncpa [#allocation14], 0
    %20 = vsyncpa [#allocation6], 0
    // Predicated region
    $region2: #{tpu_custom_call.1} parent=1 // pred_check
      _
    $region3: #{tpu_custom_call.1} parent=1 // pred_check_branch
      %22 = sbr.rel (0) target = $region5
    $region4: #{tpu_custom_call.1} parent=1 // pred_region
      %s24 = ssub.s32 1024, 1024
      %25 = vsyncadd [#allocation5], %s24
      %s26 = sshll.u32 [#allocation4], 4
      %s27 = int_to_ptr.vmem [resolvable:$true] %s26
      %32 = dma.hbm_to_vmem [thread:$0]  %s0, 1024, %s27, [#allocation5], 128, 128, 8
    $region5: #{tpu_custom_call.1} parent=1 // pred_fallthru
      _
    // Predicated region
    $region6: #{tpu_custom_call.1} parent=1 // pred_check
      _
    $region7: #{tpu_custom_call.1} parent=1 // pred_check_branch
      %34 = sbr.rel (0) target = $region9
    $region8: #{tpu_custom_call.1} parent=1 // pred_region
      %s36 = ssub.s32 3072, 3072
      %37 = vsyncadd [#allocation8], %s36
      %s38 = sshll.u32 [#allocation7], 4
      %s39 = int_to_ptr.vmem [resolvable:$true] %s38
      %44 = dma.hbm_to_vmem [thread:$0]  %s1, 3072, %s39, [#allocation8], 192, 192, 12
    $region9: #{tpu_custom_call.1} parent=1 // pred_fallthru
      _
    // Predicated region
    $region10: #{tpu_custom_call.1} parent=1 // pred_check
      _
    $region11: #{tpu_custom_call.1} parent=1 // pred_check_branch
      %46 = sbr.rel (0) target = $region13
    $region12: #{tpu_custom_call.1} parent=1 // pred_region
      %s48 = ssub.s32 3072, 3072
      %49 = vsyncadd [#allocation8], %s48
      %s50 = sshll.u32 [#allocation9], 4
      %s51 = int_to_ptr.vmem [resolvable:$true] %s50
      %56 = dma.hbm_to_vmem [thread:$0]  %s2, 3072, %s51, [#allocation8], 192, 192, 12
    $region13: #{tpu_custom_call.1} parent=1 // pred_fallthru
      _
    // Predicated region
    $region14: #{tpu_custom_call.1} parent=1 // pred_check
      _
    $region15: #{tpu_custom_call.1} parent=1 // pred_check_branch
      %58 = sbr.rel (0) target = $region17
    $region16: #{tpu_custom_call.1} parent=1 // pred_region
      _
    $region17: #{tpu_custom_call.1} parent=1 // pred_fallthru
      _
    // Predicated region
    $region18: #{tpu_custom_call.1} parent=1 // pred_check
      _
    $region19: #{tpu_custom_call.1} parent=1 // pred_check_branch
      %60 = sbr.rel (0) target = $region21
    $region20: #{tpu_custom_call.1} parent=1 // pred_region
      _
    $region21: #{tpu_custom_call.1} parent=1 // pred_fallthru
      _
    // Predicated region
    $region22: #{tpu_custom_call.1} parent=1 // pred_check
      _
    $region23: #{tpu_custom_call.1} parent=1 // pred_check_branch
      %62 = sbr.rel (0) target = $region25
    $region24: #{tpu_custom_call.1} parent=1 // pred_region
      %s64 = ssub.s32 3072, 3072
      %65 = vsyncadd [#allocation11], %s64
      %s66 = sshll.u32 [#allocation10], 4
      %s67 = int_to_ptr.vmem [resolvable:$true] %s66
      %72 = dma.hbm_to_vmem [thread:$0]  %s5, 3072, %s67, [#allocation11], 192, 192, 12
    $region25: #{tpu_custom_call.1} parent=1 // pred_fallthru
      _
    // Predicated region
    $region26: #{tpu_custom_call.1} parent=1 // pred_check
      _
    $region27: #{tpu_custom_call.1} parent=1 // pred_check_branch
      %74 = sbr.rel (0) target = $region29
    $region28: #{tpu_custom_call.1} parent=1 // pred_region
      %s76 = ssub.s32 3072, 3072
      %77 = vsyncadd [#allocation11], %s76
      %s78 = sshll.u32 [#allocation12], 4
      %s79 = int_to_ptr.vmem [resolvable:$true] %s78
      %84 = dma.hbm_to_vmem [thread:$0]  %s6, 3072, %s79, [#allocation11], 192, 192, 12
    $region29: #{tpu_custom_call.1} parent=1 // pred_fallthru
      _
    // Predicated region
    $region30: #{tpu_custom_call.1} parent=1 // pred_check
      _
    $region31: #{tpu_custom_call.1} parent=1 // pred_check_branch
      %86 = sbr.rel (0) target = $region33
    $region32: #{tpu_custom_call.1} parent=1 // pred_region
      _
    $region33: #{tpu_custom_call.1} parent=1 // pred_fallthru
      _
    // Predicated region
    $region34: #{tpu_custom_call.1} parent=1 // pred_check
      _
    $region35: #{tpu_custom_call.1} parent=1 // pred_check_branch
      %88 = sbr.rel (0) target = $region37
    $region36: #{tpu_custom_call.1} parent=1 // pred_region
      _
    $region37: #{tpu_custom_call.1} parent=1 // pred_fallthru
      _
    // Predicated region
    $region38: #{tpu_custom_call.1} parent=1 // pred_check
      _
    $region39: #{tpu_custom_call.1} parent=1 // pred_check_branch
      %90 = sbr.rel (0) target = $region41
    $region40: #{tpu_custom_call.1} parent=1 // pred_region
      %s92 = ssub.s32 1024, 1024
      %93 = vsyncadd [#allocation14], %s92
      %s94 = sshll.u32 [#allocation13], 4
      %s95 = int_to_ptr.vmem [resolvable:$true] %s94
      %100 = dma.hbm_to_vmem [thread:$0]  %s9, 1024, %s95, [#allocation14], 64, 64, 4
    $region41: #{tpu_custom_call.1} parent=1 // pred_fallthru
      _
    // Predicated region
    $region42: #{tpu_custom_call.1} parent=1 // pred_check
      _
    $region43: #{tpu_custom_call.1} parent=1 // pred_check_branch
      %102 = sbr.rel (0) target = $region45
    $region44: #{tpu_custom_call.1} parent=1 // pred_region
      _
    $region45: #{tpu_custom_call.1} parent=1 // pred_fallthru
      _
    // Predicated region
    $region46: #{tpu_custom_call.1} parent=1 // pred_check
      _
    $region47: #{tpu_custom_call.1} parent=1 // pred_check_branch
      %104 = sbr.rel (0) target = $region49
    $region48: #{tpu_custom_call.1} parent=1 // pred_region
      %105 = dma.done [#allocation5], 1024
    $region49: #{tpu_custom_call.1} parent=1 // pred_fallthru
      _
    // Predicated region
    $region50: #{tpu_custom_call.1} parent=1 // pred_check
      _
    $region51: #{tpu_custom_call.1} parent=1 // pred_check_branch
      %107 = sbr.rel (0) target = $region53
    $region52: #{tpu_custom_call.1} parent=1 // pred_region
      %108 = dma.done [#allocation8], 3072
    $region53: #{tpu_custom_call.1} parent=1 // pred_fallthru
      _
    // Predicated region
    $region54: #{tpu_custom_call.1} parent=1 // pred_check
      _
    $region55: #{tpu_custom_call.1} parent=1 // pred_check_branch
      %110 = sbr.rel (0) target = $region57
    $region56: #{tpu_custom_call.1} parent=1 // pred_region
      %111 = dma.done [#allocation8], 3072
    $region57: #{tpu_custom_call.1} parent=1 // pred_fallthru
      _
    // Predicated region
    $region58: #{tpu_custom_call.1} parent=1 // pred_check
      _
    $region59: #{tpu_custom_call.1} parent=1 // pred_check_branch
      %113 = sbr.rel (0) target = $region61
    $region60: #{tpu_custom_call.1} parent=1 // pred_region
      %114 = dma.done [#allocation11], 3072
    $region61: #{tpu_custom_call.1} parent=1 // pred_fallthru
      _
    // Predicated region
    $region62: #{tpu_custom_call.1} parent=1 // pred_check
      _
    $region63: #{tpu_custom_call.1} parent=1 // pred_check_branch
      %116 = sbr.rel (0) target = $region65
    $region64: #{tpu_custom_call.1} parent=1 // pred_region
      %117 = dma.done [#allocation11], 3072
    $region65: #{tpu_custom_call.1} parent=1 // pred_fallthru
      _
    // Predicated region
    $region66: #{tpu_custom_call.1} parent=1 // pred_check
      _
    $region67: #{tpu_custom_call.1} parent=1 // pred_check_branch
      %119 = sbr.rel (0) target = $region69
    $region68: #{tpu_custom_call.1} parent=1 // pred_region
      %120 = dma.done [#allocation14], 1024
    $region69: #{tpu_custom_call.1} parent=1 // pred_fallthru
      _
    %v122 = vld [vmem:[#allocation4] sm:$0xff]
    %v123 = vld [vmem:[#allocation4 + $0x8] sm:$0xff]
    %v124 = vld [vmem:[#allocation4 + $0x10] sm:$0xff]
    %v125 = vld [vmem:[#allocation4 + $0x18] sm:$0xff]
    %v126 = vld [vmem:[#allocation4 + $0x20] sm:$0xff]
    %v127 = vld [vmem:[#allocation4 + $0x28] sm:$0xff]
    %v128 = vld [vmem:[#allocation4 + $0x30] sm:$0xff]
    %v129 = vld [vmem:[#allocation4 + $0x38] sm:$0xff]
    %v130 = vpack.c.bf16 %v123, %v122
    %v131 = vpack.c.bf16 %v125, %v124
    %v132 = vpack.c.bf16 %v127, %v126
    %v133 = vpack.c.bf16 %v129, %v128
    %v134 = vld [vmem:[#allocation7] sm:$0xff]
    %v135 = vld [vmem:[#allocation7 + $0x8] sm:$0xf]
    %v136 = vld [vmem:[#allocation7 + $0xc] sm:$0xff]
    %v137 = vld [vmem:[#allocation7 + $0x14] sm:$0xf]
    %v138 = vld [vmem:[#allocation7 + $0x18] sm:$0xff]
    %v139 = vld [vmem:[#allocation7 + $0x20] sm:$0xf]
    %v140 = vld [vmem:[#allocation7 + $0x24] sm:$0xff]
    %v141 = vld [vmem:[#allocation7 + $0x2c] sm:$0xf]
    %v142 = vld [vmem:[#allocation7 + $0x30] sm:$0xff]
    %v143 = vld [vmem:[#allocation7 + $0x38] sm:$0xf]
    %v144 = vld [vmem:[#allocation7 + $0x3c] sm:$0xff]
    %v145 = vld [vmem:[#allocation7 + $0x44] sm:$0xf]
    %v146 = vld [vmem:[#allocation7 + $0x48] sm:$0xff]
    %v147 = vld [vmem:[#allocation7 + $0x50] sm:$0xf]
    %v148 = vld [vmem:[#allocation7 + $0x54] sm:$0xff]
    %v149 = vld [vmem:[#allocation7 + $0x5c] sm:$0xf]
    %v150 = vld [vmem:[#allocation7 + $0x60] sm:$0xff]
    %v151 = vld [vmem:[#allocation7 + $0x68] sm:$0xf]
    %v152 = vld [vmem:[#allocation7 + $0x6c] sm:$0xff]
    %v153 = vld [vmem:[#allocation7 + $0x74] sm:$0xf]
    %v154 = vld [vmem:[#allocation7 + $0x78] sm:$0xff]
    %v155 = vld [vmem:[#allocation7 + $0x80] sm:$0xf]
    %v156 = vld [vmem:[#allocation7 + $0x84] sm:$0xff]
    %v157 = vld [vmem:[#allocation7 + $0x8c] sm:$0xf]
    %v158 = vld [vmem:[#allocation7 + $0x90] sm:$0xff]
    %v159 = vld [vmem:[#allocation7 + $0x98] sm:$0xf]
    %v160 = vld [vmem:[#allocation7 + $0x9c] sm:$0xff]
    %v161 = vld [vmem:[#allocation7 + $0xa4] sm:$0xf]
    %v162 = vld [vmem:[#allocation7 + $0xa8] sm:$0xff]
    %v163 = vld [vmem:[#allocation7 + $0xb0] sm:$0xf]
    %v164 = vld [vmem:[#allocation7 + $0xb4] sm:$0xff]
    %v165 = vld [vmem:[#allocation7 + $0xbc] sm:$0xf]
    %v166 = vld [vmem:[%s3] sm:$0x7]
    %v168 = vlaneseq
    %v169 = vshrl.u32 %v168, 7
    %v170 = vsub.s32 0, %v169
    %v171 = vrot.slane %v166, %v170
    %v172 = vlaneseq
    %v173 = vshrl.u32 %v172, 7
    %v174 = vsub.s32 1, %v173
    %v175 = vrot.slane %v166, %v174
    %v176 = vlaneseq
    %v177 = vshrl.u32 %v176, 7
    %v178 = vsub.s32 2, %v177
    %v179 = vrot.slane %v166, %v178
    %v215 = vunpack.c.l.b16 %v134
    %v216 = vunpack.c.h.b16 %v134
    %v217 = vunpack.c.l.b16 %v135
    %v218 = vunpack.c.l.b16 %v136
    %v219 = vunpack.c.h.b16 %v136
    %v220 = vunpack.c.l.b16 %v137
    %v221 = vunpack.c.l.b16 %v138
    %v222 = vunpack.c.h.b16 %v138
    %v223 = vunpack.c.l.b16 %v139
    %v224 = vunpack.c.l.b16 %v140
    %v225 = vunpack.c.h.b16 %v140
    %v226 = vunpack.c.l.b16 %v141
    %v227 = vunpack.c.l.b16 %v142
    %v228 = vunpack.c.h.b16 %v142
    %v229 = vunpack.c.l.b16 %v143
    %v230 = vunpack.c.l.b16 %v144
    %v231 = vunpack.c.h.b16 %v144
    %v232 = vunpack.c.l.b16 %v145
    %v233 = vunpack.c.l.b16 %v146
    %v234 = vunpack.c.h.b16 %v146
    %v235 = vunpack.c.l.b16 %v147
    %v236 = vunpack.c.l.b16 %v148
    %v237 = vunpack.c.h.b16 %v148
    %v238 = vunpack.c.l.b16 %v149
    %v239 = vunpack.c.l.b16 %v150
    %v240 = vunpack.c.h.b16 %v150
    %v241 = vunpack.c.l.b16 %v151
    %v242 = vunpack.c.l.b16 %v152
    %v243 = vunpack.c.h.b16 %v152
    %v244 = vunpack.c.l.b16 %v153
    %v245 = vunpack.c.l.b16 %v154
    %v246 = vunpack.c.h.b16 %v154
    %v247 = vunpack.c.l.b16 %v155
    %v248 = vunpack.c.l.b16 %v156
    %v249 = vunpack.c.h.b16 %v156
    %v250 = vunpack.c.l.b16 %v157
    %v251 = vunpack.c.l.b16 %v158
    %v252 = vunpack.c.h.b16 %v158
    %v253 = vunpack.c.l.b16 %v159
    %v254 = vunpack.c.l.b16 %v160
    %v255 = vunpack.c.h.b16 %v160
    %v256 = vunpack.c.l.b16 %v161
    %v257 = vunpack.c.l.b16 %v162
    %v258 = vunpack.c.h.b16 %v162
    %v259 = vunpack.c.l.b16 %v163
    %v260 = vunpack.c.l.b16 %v164
    %v261 = vunpack.c.h.b16 %v164
    %v262 = vunpack.c.l.b16 %v165
    %v263 = vpack.c.b16 %v218, %v215
    %v264 = vpack.c.b16 %v219, %v216
    %v265 = vpack.c.b16 %v220, %v217
    %v266 = vpack.c.b16 %v224, %v221
    %v267 = vpack.c.b16 %v225, %v222
    %v268 = vpack.c.b16 %v226, %v223
    %v269 = vpack.c.b16 %v230, %v227
    %v270 = vpack.c.b16 %v231, %v228
    %v271 = vpack.c.b16 %v232, %v229
    %v272 = vpack.c.b16 %v236, %v233
    %v273 = vpack.c.b16 %v237, %v234
    %v274 = vpack.c.b16 %v238, %v235
    %v275 = vpack.c.b16 %v242, %v239
    %v276 = vpack.c.b16 %v243, %v240
    %v277 = vpack.c.b16 %v244, %v241
    %v278 = vpack.c.b16 %v248, %v245
    %v279 = vpack.c.b16 %v249, %v246
    %v280 = vpack.c.b16 %v250, %v247
    %v281 = vpack.c.b16 %v254, %v251
    %v282 = vpack.c.b16 %v255, %v252
    %v283 = vpack.c.b16 %v256, %v253
    %v284 = vpack.c.b16 %v260, %v257
    %v285 = vpack.c.b16 %v261, %v258
    %v286 = vpack.c.b16 %v262, %v259
    %311 = vmatprep.subr.bf16.mxu0 %v264
    %312 = vmatpush1.bf16.msra.mxu0 %v263
    %313 = vmatprep.subr.bf16.mxu0 %v267
    %314 = vmatpush1.bf16.msra.mxu0 %v266
    %315 = vmatprep.subr.bf16.mxu0 %v270
    %316 = vmatpush1.bf16.msra.mxu0 %v269
    %317 = vmatprep.subr.bf16.mxu0 %v273
    %318 = vmatpush1.bf16.msra.mxu0 %v272
    %319 = vmatprep.subr.bf16.mxu0 %v276
    %320 = vmatpush1.bf16.msra.mxu0 %v275
    %321 = vmatprep.subr.bf16.mxu0 %v279
    %322 = vmatpush1.bf16.msra.mxu0 %v278
    %323 = vmatprep.subr.bf16.mxu0 %v282
    %324 = vmatpush1.bf16.msra.mxu0 %v281
    %325 = vmatprep.subr.bf16.mxu0 %v285
    %326 = vmatpush1.bf16.msra.mxu0 %v284
    %327 = vmatprep.subr.bf16.mxu0 0
    %328 = vmatpush1.bf16.msra.mxu0 0
    %329 = vmatprep.subr.bf16.mxu0 0
    %330 = vmatpush1.bf16.msra.mxu0 0
    %331 = vmatprep.subr.bf16.mxu0 0
    %332 = vmatpush1.bf16.msra.mxu0 0
    %333 = vmatprep.subr.bf16.mxu0 0
    %334 = vmatpush1.bf16.msra.mxu0 0
    %335 = vmatprep.subr.bf16.mxu0 0
    %336 = vmatpush1.bf16.msra.mxu0 0
    %337 = vmatprep.subr.bf16.mxu0 0
    %338 = vmatpush1.bf16.msra.mxu0 0
    %339 = vmatprep.subr.bf16.mxu0 0
    %340 = vmatpush1.bf16.msra.mxu0 0
    %341 = vmatprep.subr.bf16.mxu0 0
    %342 = vmatpush1.bf16.msra.mxu0 0
    %343 = vmatprep.mubr.bf16.mxu0 0
    %344 = vmatmul.mubr.bf16.gmra.mrb[0].mxu0 %v130
    %v345 = vpop.f32.mrb[0].mxu0
    %v346 = vadd.f32 %v171, %v345
    %v347 = vpop.f32.mrb[0].mxu0
    %v348 = vadd.f32 %v175, %v347
    %v349 = vpop.f32.mrb[0].mxu0
    %v350 = vadd.f32 %v171, %v349
    %v351 = vpop.f32.mrb[0].mxu0
    %v352 = vadd.f32 %v175, %v351
    %353 = vmatprep.mubr.bf16.mxu0 0
    %354 = vmatmul.mubr.bf16.gmra.mrb[0].mxu0 %v131
    %v355 = vpop.f32.mrb[0].mxu0
    %v356 = vadd.f32 %v171, %v355
    %v357 = vpop.f32.mrb[0].mxu0
    %v358 = vadd.f32 %v175, %v357
    %v359 = vpop.f32.mrb[0].mxu0
    %v360 = vadd.f32 %v171, %v359
    %v361 = vpop.f32.mrb[0].mxu0
    %v362 = vadd.f32 %v175, %v361
    %363 = vmatprep.mubr.bf16.mxu0 0
    %364 = vmatmul.mubr.bf16.gmra.mrb[0].mxu0 %v132
    %v365 = vpop.f32.mrb[0].mxu0
    %v366 = vadd.f32 %v171, %v365
    %v367 = vpop.f32.mrb[0].mxu0
    %v368 = vadd.f32 %v175, %v367
    %v369 = vpop.f32.mrb[0].mxu0
    %v370 = vadd.f32 %v171, %v369
    %v371 = vpop.f32.mrb[0].mxu0
    %v372 = vadd.f32 %v175, %v371
    %373 = vmatprep.mubr.bf16.mxu0 0
    %374 = vmatmul.mubr.bf16.gmra.mrb[0].mxu0 %v133
    %v375 = vpop.f32.mrb[0].mxu0
    %v376 = vadd.f32 %v171, %v375
    %v377 = vpop.f32.mrb[0].mxu0
    %v378 = vadd.f32 %v175, %v377
    %v379 = vpop.f32.mrb[0].mxu0
    %v380 = vadd.f32 %v171, %v379
    %v381 = vpop.f32.mrb[0].mxu0
    %v382 = vadd.f32 %v175, %v381
    %383 = vdwg.mxu0
    %384 = vmatprep.subr.bf16.mxu0 0
    %385 = vmatpush1.bf16.msra.mxu0 %v265
    %386 = vmatprep.subr.bf16.mxu0 0
    %387 = vmatpush1.bf16.msra.mxu0 %v268
    %388 = vmatprep.subr.bf16.mxu0 0
    %389 = vmatpush1.bf16.msra.mxu0 %v271
    %390 = vmatprep.subr.bf16.mxu0 0
    %391 = vmatpush1.bf16.msra.mxu0 %v274
    %392 = vmatprep.subr.bf16.mxu0 0
    %393 = vmatpush1.bf16.msra.mxu0 %v277
    %394 = vmatprep.subr.bf16.mxu0 0
    %395 = vmatpush1.bf16.msra.mxu0 %v280
    %396 = vmatprep.subr.bf16.mxu0 0
    %397 = vmatpush1.bf16.msra.mxu0 %v283
    %398 = vmatprep.subr.bf16.mxu0 0
    %399 = vmatpush1.bf16.msra.mxu0 %v286
    %400 = vmatprep.subr.bf16.mxu0 0
    %401 = vmatpush1.bf16.msra.mxu0 0
    %402 = vmatprep.subr.bf16.mxu0 0
    %403 = vmatpush1.bf16.msra.mxu0 0
    %404 = vmatprep.subr.bf16.mxu0 0
    %405 = vmatpush1.bf16.msra.mxu0 0
    %406 = vmatprep.subr.bf16.mxu0 0
    %407 = vmatpush1.bf16.msra.mxu0 0
    %408 = vmatprep.subr.bf16.mxu0 0
    %409 = vmatpush1.bf16.msra.mxu0 0
    %410 = vmatprep.subr.bf16.mxu0 0
    %411 = vmatpush1.bf16.msra.mxu0 0
    %412 = vmatprep.subr.bf16.mxu0 0
    %413 = vmatpush1.bf16.msra.mxu0 0
    %414 = vmatprep.subr.bf16.mxu0 0
    %415 = vmatpush1.bf16.msra.mxu0 0
    %416 = vmatprep.mubr.bf16.mxu0 0
    %417 = vmatmul.mubr.bf16.gmra.mrb[0].mxu0 %v130
    %v418 = vpop.f32.mrb[0].mxu0
    %v419 = vadd.f32 %v179, %v418
    %v420 = vpop.f32.mrb[0].mxu0
    %v421 = vpop.f32.mrb[0].mxu0
    %v422 = vadd.f32 %v179, %v421
    %v423 = vpop.f32.mrb[0].mxu0
    %424 = vmatprep.mubr.bf16.mxu0 0
    %425 = vmatmul.mubr.bf16.gmra.mrb[0].mxu0 %v131
    %v426 = vpop.f32.mrb[0].mxu0
    %v427 = vadd.f32 %v179, %v426
    %v428 = vpop.f32.mrb[0].mxu0
    %v429 = vpop.f32.mrb[0].mxu0
    %v430 = vadd.f32 %v179, %v429
    %v431 = vpop.f32.mrb[0].mxu0
    %432 = vmatprep.mubr.bf16.mxu0 0
    %433 = vmatmul.mubr.bf16.gmra.mrb[0].mxu0 %v132
    %v434 = vpop.f32.mrb[0].mxu0
    %v435 = vadd.f32 %v179, %v434
    %v436 = vpop.f32.mrb[0].mxu0
    %v437 = vpop.f32.mrb[0].mxu0
    %v438 = vadd.f32 %v179, %v437
    %v439 = vpop.f32.mrb[0].mxu0
    %440 = vmatprep.mubr.bf16.mxu0 0
    %441 = vmatmul.mubr.bf16.gmra.mrb[0].mxu0 %v133
    %v442 = vpop.f32.mrb[0].mxu0
    %v443 = vadd.f32 %v179, %v442
    %v444 = vpop.f32.mrb[0].mxu0
    %v445 = vpop.f32.mrb[0].mxu0
    %v446 = vadd.f32 %v179, %v445
    %v447 = vpop.f32.mrb[0].mxu0
    %448 = vdwg.mxu0
    %449 = vst [vmem:[#allocation2] sm:$0xff] %v346
    %450 = vst [vmem:[#allocation2 + $0x8] sm:$0xff] %v348
    %451 = vst [vmem:[#allocation2 + $0x10] sm:$0xff] %v419
    %452 = vst [vmem:[#allocation2 + $0x18] sm:$0xff] %v350
    %453 = vst [vmem:[#allocation2 + $0x20] sm:$0xff] %v352
    %454 = vst [vmem:[#allocation2 + $0x28] sm:$0xff] %v422
    %455 = vst [vmem:[#allocation2 + $0x30] sm:$0xff] %v356
    %456 = vst [vmem:[#allocation2 + $0x38] sm:$0xff] %v358
    %457 = vst [vmem:[#allocation2 + $0x40] sm:$0xff] %v427
    %458 = vst [vmem:[#allocation2 + $0x48] sm:$0xff] %v360
    %459 = vst [vmem:[#allocation2 + $0x50] sm:$0xff] %v362
    %460 = vst [vmem:[#allocation2 + $0x58] sm:$0xff] %v430
    %461 = vst [vmem:[#allocation2 + $0x60] sm:$0xff] %v366
    %462 = vst [vmem:[#allocation2 + $0x68] sm:$0xff] %v368
    %463 = vst [vmem:[#allocation2 + $0x70] sm:$0xff] %v435
    %464 = vst [vmem:[#allocation2 + $0x78] sm:$0xff] %v370
    %465 = vst [vmem:[#allocation2 + $0x80] sm:$0xff] %v372
    %466 = vst [vmem:[#allocation2 + $0x88] sm:$0xff] %v438
    %467 = vst [vmem:[#allocation2 + $0x90] sm:$0xff] %v376
    %468 = vst [vmem:[#allocation2 + $0x98] sm:$0xff] %v378
    %469 = vst [vmem:[#allocation2 + $0xa0] sm:$0xff] %v443
    %470 = vst [vmem:[#allocation2 + $0xa8] sm:$0xff] %v380
    %471 = vst [vmem:[#allocation2 + $0xb0] sm:$0xff] %v382
    %472 = vst [vmem:[#allocation2 + $0xb8] sm:$0xff] %v446
    %v473 = vld [vmem:[#allocation9] sm:$0xff]
    %v474 = vld [vmem:[#allocation9 + $0x8] sm:$0xf]
    %v475 = vld [vmem:[#allocation9 + $0xc] sm:$0xff]
    %v476 = vld [vmem:[#allocation9 + $0x14] sm:$0xf]
    %v477 = vld [vmem:[#allocation9 + $0x18] sm:$0xff]
    %v478 = vld [vmem:[#allocation9 + $0x20] sm:$0xf]
    %v479 = vld [vmem:[#allocation9 + $0x24] sm:$0xff]
    %v480 = vld [vmem:[#allocation9 + $0x2c] sm:$0xf]
    %v481 = vld [vmem:[#allocation9 + $0x30] sm:$0xff]
    %v482 = vld [vmem:[#allocation9 + $0x38] sm:$0xf]
    %v483 = vld [vmem:[#allocation9 + $0x3c] sm:$0xff]
    %v484 = vld [vmem:[#allocation9 + $0x44] sm:$0xf]
    %v485 = vld [vmem:[#allocation9 + $0x48] sm:$0xff]
    %v486 = vld [vmem:[#allocation9 + $0x50] sm:$0xf]
    %v487 = vld [vmem:[#allocation9 + $0x54] sm:$0xff]
    %v488 = vld [vmem:[#allocation9 + $0x5c] sm:$0xf]
    %v489 = vld [vmem:[#allocation9 + $0x60] sm:$0xff]
    %v490 = vld [vmem:[#allocation9 + $0x68] sm:$0xf]
    %v491 = vld [vmem:[#allocation9 + $0x6c] sm:$0xff]
    %v492 = vld [vmem:[#allocation9 + $0x74] sm:$0xf]
    %v493 = vld [vmem:[#allocation9 + $0x78] sm:$0xff]
    %v494 = vld [vmem:[#allocation9 + $0x80] sm:$0xf]
    %v495 = vld [vmem:[#allocation9 + $0x84] sm:$0xff]
    %v496 = vld [vmem:[#allocation9 + $0x8c] sm:$0xf]
    %v497 = vld [vmem:[#allocation9 + $0x90] sm:$0xff]
    %v498 = vld [vmem:[#allocation9 + $0x98] sm:$0xf]
    %v499 = vld [vmem:[#allocation9 + $0x9c] sm:$0xff]
    %v500 = vld [vmem:[#allocation9 + $0xa4] sm:$0xf]
    %v501 = vld [vmem:[#allocation9 + $0xa8] sm:$0xff]
    %v502 = vld [vmem:[#allocation9 + $0xb0] sm:$0xf]
    %v503 = vld [vmem:[#allocation9 + $0xb4] sm:$0xff]
    %v504 = vld [vmem:[#allocation9 + $0xbc] sm:$0xf]
    %v505 = vld [vmem:[%s4] sm:$0x1]
    %v506 = vld [vmem:[#allocation2] sm:$0xff]
    %v507 = vld [vmem:[#allocation2 + $0x8] sm:$0xff]
    %v508 = vld [vmem:[#allocation2 + $0x10] sm:$0xff]
    %v541 = vunpack.c.l.b16 %v473
    %v542 = vunpack.c.h.b16 %v473
    %v543 = vunpack.c.l.b16 %v474
    %v544 = vunpack.c.l.b16 %v475
    %v545 = vunpack.c.h.b16 %v475
    %v546 = vunpack.c.l.b16 %v476
    %v547 = vunpack.c.l.b16 %v477
    %v548 = vunpack.c.h.b16 %v477
    %v549 = vunpack.c.l.b16 %v478
    %v550 = vunpack.c.l.b16 %v479
    %v551 = vunpack.c.h.b16 %v479
    %v552 = vunpack.c.l.b16 %v480
    %v553 = vunpack.c.l.b16 %v481
    %v554 = vunpack.c.h.b16 %v481
    %v555 = vunpack.c.l.b16 %v482
    %v556 = vunpack.c.l.b16 %v483
    %v557 = vunpack.c.h.b16 %v483
    %v558 = vunpack.c.l.b16 %v484
    %v559 = vunpack.c.l.b16 %v485
    %v560 = vunpack.c.h.b16 %v485
    %v561 = vunpack.c.l.b16 %v486
    %v562 = vunpack.c.l.b16 %v487
    %v563 = vunpack.c.h.b16 %v487
    %v564 = vunpack.c.l.b16 %v488
    %v565 = vunpack.c.l.b16 %v489
    %v566 = vunpack.c.h.b16 %v489
    %v567 = vunpack.c.l.b16 %v490
    %v568 = vunpack.c.l.b16 %v491
    %v569 = vunpack.c.h.b16 %v491
    %v570 = vunpack.c.l.b16 %v492
    %v571 = vunpack.c.l.b16 %v493
    %v572 = vunpack.c.h.b16 %v493
    %v573 = vunpack.c.l.b16 %v494
    %v574 = vunpack.c.l.b16 %v495
    %v575 = vunpack.c.h.b16 %v495
    %v576 = vunpack.c.l.b16 %v496
    %v577 = vunpack.c.l.b16 %v497
    %v578 = vunpack.c.h.b16 %v497
    %v579 = vunpack.c.l.b16 %v498
    %v580 = vunpack.c.l.b16 %v499
    %v581 = vunpack.c.h.b16 %v499
    %v582 = vunpack.c.l.b16 %v500
    %v583 = vunpack.c.l.b16 %v501
    %v584 = vunpack.c.h.b16 %v501
    %v585 = vunpack.c.l.b16 %v502
    %v586 = vunpack.c.l.b16 %v503
    %v587 = vunpack.c.h.b16 %v503
    %v588 = vunpack.c.l.b16 %v504
    %v589 = vpack.c.b16 %v544, %v541
    %v590 = vpack.c.b16 %v545, %v542
    %v591 = vpack.c.b16 %v546, %v543
    %v592 = vpack.c.b16 %v550, %v547
    %v593 = vpack.c.b16 %v551, %v548
    %v594 = vpack.c.b16 %v552, %v549
    %v595 = vpack.c.b16 %v556, %v553
    %v596 = vpack.c.b16 %v557, %v554
    %v597 = vpack.c.b16 %v558, %v555
    %v598 = vpack.c.b16 %v562, %v559
    %v599 = vpack.c.b16 %v563, %v560
    %v600 = vpack.c.b16 %v564, %v561
    %v601 = vpack.c.b16 %v568, %v565
    %v602 = vpack.c.b16 %v569, %v566
    %v603 = vpack.c.b16 %v570, %v567
    %v604 = vpack.c.b16 %v574, %v571
    %v605 = vpack.c.b16 %v575, %v572
    %v606 = vpack.c.b16 %v576, %v573
    %v607 = vpack.c.b16 %v580, %v577
    %v608 = vpack.c.b16 %v581, %v578
    %v609 = vpack.c.b16 %v582, %v579
    %v610 = vpack.c.b16 %v586, %v583
    %v611 = vpack.c.b16 %v587, %v584
    %v612 = vpack.c.b16 %v588, %v585
    %637 = vmatprep.subr.bf16.mxu0 %v590
    %638 = vmatpush1.bf16.msra.mxu0 %v589
    %639 = vmatprep.subr.bf16.mxu0 %v593
    %640 = vmatpush1.bf16.msra.mxu0 %v592
    %641 = vmatprep.subr.bf16.mxu0 %v596
    %642 = vmatpush1.bf16.msra.mxu0 %v595
    %643 = vmatprep.subr.bf16.mxu0 %v599
    %644 = vmatpush1.bf16.msra.mxu0 %v598
    %645 = vmatprep.subr.bf16.mxu0 %v602
    %646 = vmatpush1.bf16.msra.mxu0 %v601
    %647 = vmatprep.subr.bf16.mxu0 %v605
    %648 = vmatpush1.bf16.msra.mxu0 %v604
    %649 = vmatprep.subr.bf16.mxu0 %v608
    %650 = vmatpush1.bf16.msra.mxu0 %v607
    %651 = vmatprep.subr.bf16.mxu0 %v611
    %652 = vmatpush1.bf16.msra.mxu0 %v610
    %653 = vmatprep.subr.bf16.mxu0 0
    %654 = vmatpush1.bf16.msra.mxu0 0
    %655 = vmatprep.subr.bf16.mxu0 0
    %656 = vmatpush1.bf16.msra.mxu0 0
    %657 = vmatprep.subr.bf16.mxu0 0
    %658 = vmatpush1.bf16.msra.mxu0 0
    %659 = vmatprep.subr.bf16.mxu0 0
    %660 = vmatpush1.bf16.msra.mxu0 0
    %661 = vmatprep.subr.bf16.mxu0 0
    %662 = vmatpush1.bf16.msra.mxu0 0
    %663 = vmatprep.subr.bf16.mxu0 0
    %664 = vmatpush1.bf16.msra.mxu0 0
    %665 = vmatprep.subr.bf16.mxu0 0
    %666 = vmatpush1.bf16.msra.mxu0 0
    %667 = vmatprep.subr.bf16.mxu0 0
    %668 = vmatpush1.bf16.msra.mxu0 0
    %669 = vmatprep.mubr.bf16.mxu0 0
    %670 = vmatmul.mubr.bf16.gmra.mrb[0].mxu0 0
    %v671 = vpop.f32.mrb[0].mxu0
    %v672 = vadd.f32 0.0, %v671
    %v673 = vpop.f32.mrb[0].mxu0
    %v674 = vadd.f32 0.0, %v673
    %v675 = vpop.f32.mrb[0].mxu0
    %v676 = vpop.f32.mrb[0].mxu0
    %677 = vdwg.mxu0
    %678 = vmatprep.subr.bf16.mxu0 0
    %679 = vmatpush1.bf16.msra.mxu0 %v591
    %680 = vmatprep.subr.bf16.mxu0 0
    %681 = vmatpush1.bf16.msra.mxu0 %v594
    %682 = vmatprep.subr.bf16.mxu0 0
    %683 = vmatpush1.bf16.msra.mxu0 %v597
    %684 = vmatprep.subr.bf16.mxu0 0
    %685 = vmatpush1.bf16.msra.mxu0 %v600
    %686 = vmatprep.subr.bf16.mxu0 0
    %687 = vmatpush1.bf16.msra.mxu0 %v603
    %688 = vmatprep.subr.bf16.mxu0 0
    %689 = vmatpush1.bf16.msra.mxu0 %v606
    %690 = vmatprep.subr.bf16.mxu0 0
    %691 = vmatpush1.bf16.msra.mxu0 %v609
    %692 = vmatprep.subr.bf16.mxu0 0
    %693 = vmatpush1.bf16.msra.mxu0 %v612
    %694 = vmatprep.subr.bf16.mxu0 0
    %695 = vmatpush1.bf16.msra.mxu0 0
    %696 = vmatprep.subr.bf16.mxu0 0
    %697 = vmatpush1.bf16.msra.mxu0 0
    %698 = vmatprep.subr.bf16.mxu0 0
    %699 = vmatpush1.bf16.msra.mxu0 0
    %700 = vmatprep.subr.bf16.mxu0 0
    %701 = vmatpush1.bf16.msra.mxu0 0
    %702 = vmatprep.subr.bf16.mxu0 0
    %703 = vmatpush1.bf16.msra.mxu0 0
    %704 = vmatprep.subr.bf16.mxu0 0
    %705 = vmatpush1.bf16.msra.mxu0 0
    %706 = vmatprep.subr.bf16.mxu0 0
    %707 = vmatpush1.bf16.msra.mxu0 0
    %708 = vmatprep.subr.bf16.mxu0 0
    %709 = vmatpush1.bf16.msra.mxu0 0
    %710 = vmatprep.mubr.bf16.mxu0 0
    %711 = vmatmul.mubr.bf16.gmra.mrb[0].mxu0 0
    %v712 = vpop.f32.mrb[0].mxu0
    %v713 = vadd.f32 0.0, %v712
    %v714 = vpop.f32.mrb[0].mxu0
    %v715 = vpop.f32.mrb[0].mxu0
    %v716 = vpop.f32.mrb[0].mxu0
    %717 = vdwg.mxu0
    %v718 = vadd.f32 %v506, %v672
    %v719 = vxor.u32 %v718, 2147483648
    %v720 = vmul.f32 %v719, 1.442695
    %v721 = vpow.pop %v720
    %v722 = vadd.f32 %v721, 1.0
    %v723 = vrcp.pop %v722
    %v724 = vmul.f32 1.0, %v723
    %v725 = vadd.f32 %v507, %v674
    %v726 = vxor.u32 %v725, 2147483648
    %v727 = vmul.f32 %v726, 1.442695
    %v728 = vpow.pop %v727
    %v729 = vadd.f32 %v728, 1.0
    %v730 = vrcp.pop %v729
    %v731 = vmul.f32 1.0, %v730
    %v733 = vlaneseq
    %v734 = vshrl.u32 %v733, 7
    %v735 = vsub.s32 0, %v734
    %v736 = vrot.slane %v505, %v735
    %v738 = vadd.f32 %v713, %v736
    %v739 = vmul.f32 %v724, %v738
    %v740 = vadd.f32 %v508, %v739
    %v741 = vtanh.pop %v740
    %v742 = vsub.f32 1.0, %v731
    %v743 = vmul.f32 %v742, %v741
    %v744 = vmul.f32 %v731, 0.0
    %v745 = vadd.f32 %v743, %v744
    %746 = vst [vmem:[#allocation3] sm:$0xff] %v745
    %s747 = scalar_lea.vmem [#allocation2], 24
    %v748 = vld [vmem:[%s747] sm:$0xff]
    %v749 = vld [vmem:[%s747 + $0x8] sm:$0xff]
    %v750 = vld [vmem:[%s747 + $0x10] sm:$0xff]
    %v751 = vpack.c.bf16 %v745, %v745
    %752 = vmatprep.subr.bf16.mxu0 %v590
    %753 = vmatpush1.bf16.msra.mxu0 %v589
    %754 = vmatprep.subr.bf16.mxu0 %v593
    %755 = vmatpush1.bf16.msra.mxu0 %v592
    %756 = vmatprep.subr.bf16.mxu0 %v596
    %757 = vmatpush1.bf16.msra.mxu0 %v595
    %758 = vmatprep.subr.bf16.mxu0 %v599
    %759 = vmatpush1.bf16.msra.mxu0 %v598
    %760 = vmatprep.subr.bf16.mxu0 %v602
    %761 = vmatpush1.bf16.msra.mxu0 %v601
    %762 = vmatprep.subr.bf16.mxu0 %v605
    %763 = vmatpush1.bf16.msra.mxu0 %v604
    %764 = vmatprep.subr.bf16.mxu0 %v608
    %765 = vmatpush1.bf16.msra.mxu0 %v607
    %766 = vmatprep.subr.bf16.mxu0 %v611
    %767 = vmatpush1.bf16.msra.mxu0 %v610
    %768 = vmatprep.subr.bf16.mxu0 0
    %769 = vmatpush1.bf16.msra.mxu0 0
    %770 = vmatprep.subr.bf16.mxu0 0
    %771 = vmatpush1.bf16.msra.mxu0 0
    %772 = vmatprep.subr.bf16.mxu0 0
    %773 = vmatpush1.bf16.msra.mxu0 0
    %774 = vmatprep.subr.bf16.mxu0 0
    %775 = vmatpush1.bf16.msra.mxu0 0
    %776 = vmatprep.subr.bf16.mxu0 0
    %777 = vmatpush1.bf16.msra.mxu0 0
    %778 = vmatprep.subr.bf16.mxu0 0
    %779 = vmatpush1.bf16.msra.mxu0 0
    %780 = vmatprep.subr.bf16.mxu0 0
    %781 = vmatpush1.bf16.msra.mxu0 0
    %782 = vmatprep.subr.bf16.mxu0 0
    %783 = vmatpush1.bf16.msra.mxu0 0
    %784 = vmatprep.mubr.bf16.mxu0 0
    %785 = vmatmul.mubr.bf16.gmra.mrb[0].mxu0 %v751
    %v786 = vpop.f32.mrb[0].mxu0
    %v787 = vadd.f32 0.0, %v786
    %v788 = vpop.f32.mrb[0].mxu0
    %v789 = vadd.f32 0.0, %v788
    %v790 = vpop.f32.mrb[0].mxu0
    %v791 = vpop.f32.mrb[0].mxu0
    %792 = vdwg.mxu0
    %793 = vmatprep.subr.bf16.mxu0 0
    %794 = vmatpush1.bf16.msra.mxu0 %v591
    %795 = vmatprep.subr.bf16.mxu0 0
    %796 = vmatpush1.bf16.msra.mxu0 %v594
    %797 = vmatprep.subr.bf16.mxu0 0
    %798 = vmatpush1.bf16.msra.mxu0 %v597
    %799 = vmatprep.subr.bf16.mxu0 0
    %800 = vmatpush1.bf16.msra.mxu0 %v600
    %801 = vmatprep.subr.bf16.mxu0 0
    %802 = vmatpush1.bf16.msra.mxu0 %v603
    %803 = vmatprep.subr.bf16.mxu0 0
    %804 = vmatpush1.bf16.msra.mxu0 %v606
    %805 = vmatprep.subr.bf16.mxu0 0
    %806 = vmatpush1.bf16.msra.mxu0 %v609
    %807 = vmatprep.subr.bf16.mxu0 0
    %808 = vmatpush1.bf16.msra.mxu0 %v612
    %809 = vmatprep.subr.bf16.mxu0 0
    %810 = vmatpush1.bf16.msra.mxu0 0
    %811 = vmatprep.subr.bf16.mxu0 0
    %812 = vmatpush1.bf16.msra.mxu0 0
    %813 = vmatprep.subr.bf16.mxu0 0
    %814 = vmatpush1.bf16.msra.mxu0 0
    %815 = vmatprep.subr.bf16.mxu0 0
    %816 = vmatpush1.bf16.msra.mxu0 0
    %817 = vmatprep.subr.bf16.mxu0 0
    %818 = vmatpush1.bf16.msra.mxu0 0
    %819 = vmatprep.subr.bf16.mxu0 0
    %820 = vmatpush1.bf16.msra.mxu0 0
    %821 = vmatprep.subr.bf16.mxu0 0
    %822 = vmatpush1.bf16.msra.mxu0 0
    %823 = vmatprep.subr.bf16.mxu0 0
    %824 = vmatpush1.bf16.msra.mxu0 0
    %825 = vmatprep.mubr.bf16.mxu0 0
    %826 = vmatmul.mubr.bf16.gmra.mrb[0].mxu0 %v751
    %v827 = vpop.f32.mrb[0].mxu0
    %v828 = vadd.f32 0.0, %v827
    %v829 = vpop.f32.mrb[0].mxu0
    %v830 = vpop.f32.mrb[0].mxu0
    %v831 = vpop.f32.mrb[0].mxu0
    %832 = vdwg.mxu0
    %v833 = vadd.f32 %v748, %v787
    %v834 = vxor.u32 %v833, 2147483648
    %v835 = vmul.f32 %v834, 1.442695
    %v836 = vpow.pop %v835
    %v837 = vadd.f32 %v836, 1.0
    %v838 = vrcp.pop %v837
    %v839 = vmul.f32 1.0, %v838
    %v840 = vadd.f32 %v749, %v789
    %v841 = vxor.u32 %v840, 2147483648
    %v842 = vmul.f32 %v841, 1.442695
    %v843 = vpow.pop %v842
    %v844 = vadd.f32 %v843, 1.0
    %v845 = vrcp.pop %v844
    %v846 = vmul.f32 1.0, %v845
    %v847 = vadd.f32 %v828, %v736
    %v848 = vmul.f32 %v839, %v847
    %v849 = vadd.f32 %v750, %v848
    %v850 = vtanh.pop %v849
    %v851 = vsub.f32 1.0, %v846
    %v852 = vmul.f32 %v851, %v850
    %v853 = vmul.f32 %v846, %v745
    %v854 = vadd.f32 %v852, %v853
    %s855 = scalar_lea.vmem [#allocation3], 8
    %856 = vst [vmem:[%s855] sm:$0xff] %v854
    %s857 = scalar_lea.vmem [#allocation2], 48
    %v858 = vld [vmem:[%s857] sm:$0xff]
    %v859 = vld [vmem:[%s857 + $0x8] sm:$0xff]
    %v860 = vld [vmem:[%s857 + $0x10] sm:$0xff]
    %v861 = vpack.c.bf16 %v854, %v854
    %862 = vmatprep.subr.bf16.mxu0 %v590
    %863 = vmatpush1.bf16.msra.mxu0 %v589
    %864 = vmatprep.subr.bf16.mxu0 %v593
    %865 = vmatpush1.bf16.msra.mxu0 %v592
    %866 = vmatprep.subr.bf16.mxu0 %v596
    %867 = vmatpush1.bf16.msra.mxu0 %v595
    %868 = vmatprep.subr.bf16.mxu0 %v599
    %869 = vmatpush1.bf16.msra.mxu0 %v598
    %870 = vmatprep.subr.bf16.mxu0 %v602
    %871 = vmatpush1.bf16.msra.mxu0 %v601
    %872 = vmatprep.subr.bf16.mxu0 %v605
    %873 = vmatpush1.bf16.msra.mxu0 %v604
    %874 = vmatprep.subr.bf16.mxu0 %v608
    %875 = vmatpush1.bf16.msra.mxu0 %v607
    %876 = vmatprep.subr.bf16.mxu0 %v611
    %877 = vmatpush1.bf16.msra.mxu0 %v610
    %878 = vmatprep.subr.bf16.mxu0 0
    %879 = vmatpush1.bf16.msra.mxu0 0
    %880 = vmatprep.subr.bf16.mxu0 0
    %881 = vmatpush1.bf16.msra.mxu0 0
    %882 = vmatprep.subr.bf16.mxu0 0
    %883 = vmatpush1.bf16.msra.mxu0 0
    %884 = vmatprep.subr.bf16.mxu0 0
    %885 = vmatpush1.bf16.msra.mxu0 0
    %886 = vmatprep.subr.bf16.mxu0 0
    %887 = vmatpush1.bf16.msra.mxu0 0
    %888 = vmatprep.subr.bf16.mxu0 0
    %889 = vmatpush1.bf16.msra.mxu0 0
    %890 = vmatprep.subr.bf16.mxu0 0
    %891 = vmatpush1.bf16.msra.mxu0 0
    %892 = vmatprep.subr.bf16.mxu0 0
    %893 = vmatpush1.bf16.msra.mxu0 0
    %894 = vmatprep.mubr.bf16.mxu0 0
    %895 = vmatmul.mubr.bf16.gmra.mrb[0].mxu0 %v861
    %v896 = vpop.f32.mrb[0].mxu0
    %v897 = vadd.f32 0.0, %v896
    %v898 = vpop.f32.mrb[0].mxu0
    %v899 = vadd.f32 0.0, %v898
    %v900 = vpop.f32.mrb[0].mxu0
    %v901 = vpop.f32.mrb[0].mxu0
    %902 = vdwg.mxu0
    %903 = vmatprep.subr.bf16.mxu0 0
    %904 = vmatpush1.bf16.msra.mxu0 %v591
    %905 = vmatprep.subr.bf16.mxu0 0
    %906 = vmatpush1.bf16.msra.mxu0 %v594
    %907 = vmatprep.subr.bf16.mxu0 0
    %908 = vmatpush1.bf16.msra.mxu0 %v597
    %909 = vmatprep.subr.bf16.mxu0 0
    %910 = vmatpush1.bf16.msra.mxu0 %v600
    %911 = vmatprep.subr.bf16.mxu0 0
    %912 = vmatpush1.bf16.msra.mxu0 %v603
    %913 = vmatprep.subr.bf16.mxu0 0
    %914 = vmatpush1.bf16.msra.mxu0 %v606
    %915 = vmatprep.subr.bf16.mxu0 0
    %916 = vmatpush1.bf16.msra.mxu0 %v609
    %917 = vmatprep.subr.bf16.mxu0 0
    %918 = vmatpush1.bf16.msra.mxu0 %v612
    %919 = vmatprep.subr.bf16.mxu0 0
    %920 = vmatpush1.bf16.msra.mxu0 0
    %921 = vmatprep.subr.bf16.mxu0 0
    %922 = vmatpush1.bf16.msra.mxu0 0
    %923 = vmatprep.subr.bf16.mxu0 0
    %924 = vmatpush1.bf16.msra.mxu0 0
    %925 = vmatprep.subr.bf16.mxu0 0
    %926 = vmatpush1.bf16.msra.mxu0 0
    %927 = vmatprep.subr.bf16.mxu0 0
    %928 = vmatpush1.bf16.msra.mxu0 0
    %929 = vmatprep.subr.bf16.mxu0 0
    %930 = vmatpush1.bf16.msra.mxu0 0
    %931 = vmatprep.subr.bf16.mxu0 0
    %932 = vmatpush1.bf16.msra.mxu0 0
    %933 = vmatprep.subr.bf16.mxu0 0
    %934 = vmatpush1.bf16.msra.mxu0 0
    %935 = vmatprep.mubr.bf16.mxu0 0
    %936 = vmatmul.mubr.bf16.gmra.mrb[0].mxu0 %v861
    %v937 = vpop.f32.mrb[0].mxu0
    %v938 = vadd.f32 0.0, %v937
    %v939 = vpop.f32.mrb[0].mxu0
    %v940 = vpop.f32.mrb[0].mxu0
    %v941 = vpop.f32.mrb[0].mxu0
    %942 = vdwg.mxu0
    %v943 = vadd.f32 %v858, %v897
    %v944 = vxor.u32 %v943, 2147483648
    %v945 = vmul.f32 %v944, 1.442695
    %v946 = vpow.pop %v945
    %v947 = vadd.f32 %v946, 1.0
    %v948 = vrcp.pop %v947
    %v949 = vmul.f32 1.0, %v948
    %v950 = vadd.f32 %v859, %v899
    %v951 = vxor.u32 %v950, 2147483648
    %v952 = vmul.f32 %v951, 1.442695
    %v953 = vpow.pop %v952
    %v954 = vadd.f32 %v953, 1.0
    %v955 = vrcp.pop %v954
    %v956 = vmul.f32 1.0, %v955
    %v957 = vadd.f32 %v938, %v736
    %v958 = vmul.f32 %v949, %v957
    %v959 = vadd.f32 %v860, %v958
    %v960 = vtanh.pop %v959
    %v961 = vsub.f32 1.0, %v956
    %v962 = vmul.f32 %v961, %v960
    %v963 = vmul.f32 %v956, %v854
    %v964 = vadd.f32 %v962, %v963
    %s965 = scalar_lea.vmem [#allocation3], 16
    %966 = vst [vmem:[%s965] sm:$0xff] %v964
    %s967 = scalar_lea.vmem [#allocation2], 72
    %v968 = vld [vmem:[%s967] sm:$0xff]
    %v969 = vld [vmem:[%s967 + $0x8] sm:$0xff]
    %v970 = vld [vmem:[%s967 + $0x10] sm:$0xff]
    %v971 = vpack.c.bf16 %v964, %v964
    %972 = vmatprep.subr.bf16.mxu0 %v590
    %973 = vmatpush1.bf16.msra.mxu0 %v589
    %974 = vmatprep.subr.bf16.mxu0 %v593
    %975 = vmatpush1.bf16.msra.mxu0 %v592
    %976 = vmatprep.subr.bf16.mxu0 %v596
    %977 = vmatpush1.bf16.msra.mxu0 %v595
    %978 = vmatprep.subr.bf16.mxu0 %v599
    %979 = vmatpush1.bf16.msra.mxu0 %v598
    %980 = vmatprep.subr.bf16.mxu0 %v602
    %981 = vmatpush1.bf16.msra.mxu0 %v601
    %982 = vmatprep.subr.bf16.mxu0 %v605
    %983 = vmatpush1.bf16.msra.mxu0 %v604
    %984 = vmatprep.subr.bf16.mxu0 %v608
    %985 = vmatpush1.bf16.msra.mxu0 %v607
    %986 = vmatprep.subr.bf16.mxu0 %v611
    %987 = vmatpush1.bf16.msra.mxu0 %v610
    %988 = vmatprep.subr.bf16.mxu0 0
    %989 = vmatpush1.bf16.msra.mxu0 0
    %990 = vmatprep.subr.bf16.mxu0 0
    %991 = vmatpush1.bf16.msra.mxu0 0
    %992 = vmatprep.subr.bf16.mxu0 0
    %993 = vmatpush1.bf16.msra.mxu0 0
    %994 = vmatprep.subr.bf16.mxu0 0
    %995 = vmatpush1.bf16.msra.mxu0 0
    %996 = vmatprep.subr.bf16.mxu0 0
    %997 = vmatpush1.bf16.msra.mxu0 0
    %998 = vmatprep.subr.bf16.mxu0 0
    %999 = vmatpush1.bf16.msra.mxu0 0
    %1000 = vmatprep.subr.bf16.mxu0 0
    %1001 = vmatpush1.bf16.msra.mxu0 0
    %1002 = vmatprep.subr.bf16.mxu0 0
    %1003 = vmatpush1.bf16.msra.mxu0 0
    %1004 = vmatprep.mubr.bf16.mxu0 0
    %1005 = vmatmul.mubr.bf16.gmra.mrb[0].mxu0 %v971
    %v1006 = vpop.f32.mrb[0].mxu0
    %v1007 = vadd.f32 0.0, %v1006
    %v1008 = vpop.f32.mrb[0].mxu0
    %v1009 = vadd.f32 0.0, %v1008
    %v1010 = vpop.f32.mrb[0].mxu0
    %v1011 = vpop.f32.mrb[0].mxu0
    %1012 = vdwg.mxu0
    %1013 = vmatprep.subr.bf16.mxu0 0
    %1014 = vmatpush1.bf16.msra.mxu0 %v591
    %1015 = vmatprep.subr.bf16.mxu0 0
    %1016 = vmatpush1.bf16.msra.mxu0 %v594
    %1017 = vmatprep.subr.bf16.mxu0 0
    %1018 = vmatpush1.bf16.msra.mxu0 %v597
    %1019 = vmatprep.subr.bf16.mxu0 0
    %1020 = vmatpush1.bf16.msra.mxu0 %v600
    %1021 = vmatprep.subr.bf16.mxu0 0
    %1022 = vmatpush1.bf16.msra.mxu0 %v603
    %1023 = vmatprep.subr.bf16.mxu0 0
    %1024 = vmatpush1.bf16.msra.mxu0 %v606
    %1025 = vmatprep.subr.bf16.mxu0 0
    %1026 = vmatpush1.bf16.msra.mxu0 %v609
    %1027 = vmatprep.subr.bf16.mxu0 0
    %1028 = vmatpush1.bf16.msra.mxu0 %v612
    %1029 = vmatprep.subr.bf16.mxu0 0
    %1030 = vmatpush1.bf16.msra.mxu0 0
    %1031 = vmatprep.subr.bf16.mxu0 0
    %1032 = vmatpush1.bf16.msra.mxu0 0
    %1033 = vmatprep.subr.bf16.mxu0 0
    %1034 = vmatpush1.bf16.msra.mxu0 0
    %1035 = vmatprep.subr.bf16.mxu0 0
    %1036 = vmatpush1.bf16.msra.mxu0 0
    %1037 = vmatprep.subr.bf16.mxu0 0
    %1038 = vmatpush1.bf16.msra.mxu0 0
    %1039 = vmatprep.subr.bf16.mxu0 0
    %1040 = vmatpush1.bf16.msra.mxu0 0
    %1041 = vmatprep.subr.bf16.mxu0 0
    %1042 = vmatpush1.bf16.msra.mxu0 0
    %1043 = vmatprep.subr.bf16.mxu0 0
    %1044 = vmatpush1.bf16.msra.mxu0 0
    %1045 = vmatprep.mubr.bf16.mxu0 0
    %1046 = vmatmul.mubr.bf16.gmra.mrb[0].mxu0 %v971
    %v1047 = vpop.f32.mrb[0].mxu0
    %v1048 = vadd.f32 0.0, %v1047
    %v1049 = vpop.f32.mrb[0].mxu0
    %v1050 = vpop.f32.mrb[0].mxu0
    %v1051 = vpop.f32.mrb[0].mxu0
    %1052 = vdwg.mxu0
    %v1053 = vadd.f32 %v968, %v1007
    %v1054 = vxor.u32 %v1053, 2147483648
    %v1055 = vmul.f32 %v1054, 1.442695
    %v1056 = vpow.pop %v1055
    %v1057 = vadd.f32 %v1056, 1.0
    %v1058 = vrcp.pop %v1057
    %v1059 = vmul.f32 1.0, %v1058
    %v1060 = vadd.f32 %v969, %v1009
    %v1061 = vxor.u32 %v1060, 2147483648
    %v1062 = vmul.f32 %v1061, 1.442695
    %v1063 = vpow.pop %v1062
    %v1064 = vadd.f32 %v1063, 1.0
    %v1065 = vrcp.pop %v1064
    %v1066 = vmul.f32 1.0, %v1065
    %v1067 = vadd.f32 %v1048, %v736
    %v1068 = vmul.f32 %v1059, %v1067
    %v1069 = vadd.f32 %v970, %v1068
    %v1070 = vtanh.pop %v1069
    %v1071 = vsub.f32 1.0, %v1066
    %v1072 = vmul.f32 %v1071, %v1070
    %v1073 = vmul.f32 %v1066, %v964
    %v1074 = vadd.f32 %v1072, %v1073
    %s1075 = scalar_lea.vmem [#allocation3], 24
    %1076 = vst [vmem:[%s1075] sm:$0xff] %v1074
    %s1077 = scalar_lea.vmem [#allocation2], 96
    %v1078 = vld [vmem:[%s1077] sm:$0xff]
    %v1079 = vld [vmem:[%s1077 + $0x8] sm:$0xff]
    %v1080 = vld [vmem:[%s1077 + $0x10] sm:$0xff]
    %v1081 = vpack.c.bf16 %v1074, %v1074
    %1082 = vmatprep.subr.bf16.mxu0 %v590
    %1083 = vmatpush1.bf16.msra.mxu0 %v589
    %1084 = vmatprep.subr.bf16.mxu0 %v593
    %1085 = vmatpush1.bf16.msra.mxu0 %v592
    %1086 = vmatprep.subr.bf16.mxu0 %v596
    %1087 = vmatpush1.bf16.msra.mxu0 %v595
    %1088 = vmatprep.subr.bf16.mxu0 %v599
    %1089 = vmatpush1.bf16.msra.mxu0 %v598
    %1090 = vmatprep.subr.bf16.mxu0 %v602
    %1091 = vmatpush1.bf16.msra.mxu0 %v601
    %1092 = vmatprep.subr.bf16.mxu0 %v605
    %1093 = vmatpush1.bf16.msra.mxu0 %v604
    %1094 = vmatprep.subr.bf16.mxu0 %v608
    %1095 = vmatpush1.bf16.msra.mxu0 %v607
    %1096 = vmatprep.subr.bf16.mxu0 %v611
    %1097 = vmatpush1.bf16.msra.mxu0 %v610
    %1098 = vmatprep.subr.bf16.mxu0 0
    %1099 = vmatpush1.bf16.msra.mxu0 0
    %1100 = vmatprep.subr.bf16.mxu0 0
    %1101 = vmatpush1.bf16.msra.mxu0 0
    %1102 = vmatprep.subr.bf16.mxu0 0
    %1103 = vmatpush1.bf16.msra.mxu0 0
    %1104 = vmatprep.subr.bf16.mxu0 0
    %1105 = vmatpush1.bf16.msra.mxu0 0
    %1106 = vmatprep.subr.bf16.mxu0 0
    %1107 = vmatpush1.bf16.msra.mxu0 0
    %1108 = vmatprep.subr.bf16.mxu0 0
    %1109 = vmatpush1.bf16.msra.mxu0 0
    %1110 = vmatprep.subr.bf16.mxu0 0
    %1111 = vmatpush1.bf16.msra.mxu0 0
    %1112 = vmatprep.subr.bf16.mxu0 0
    %1113 = vmatpush1.bf16.msra.mxu0 0
    %1114 = vmatprep.mubr.bf16.mxu0 0
    %1115 = vmatmul.mubr.bf16.gmra.mrb[0].mxu0 %v1081
    %v1116 = vpop.f32.mrb[0].mxu0
    %v1117 = vadd.f32 0.0, %v1116
    %v1118 = vpop.f32.mrb[0].mxu0
    %v1119 = vadd.f32 0.0, %v1118
    %v1120 = vpop.f32.mrb[0].mxu0
    %v1121 = vpop.f32.mrb[0].mxu0
    %1122 = vdwg.mxu0
    %1123 = vmatprep.subr.bf16.mxu0 0
    %1124 = vmatpush1.bf16.msra.mxu0 %v591
    %1125 = vmatprep.subr.bf16.mxu0 0
    %1126 = vmatpush1.bf16.msra.mxu0 %v594
    %1127 = vmatprep.subr.bf16.mxu0 0
    %1128 = vmatpush1.bf16.msra.mxu0 %v597
    %1129 = vmatprep.subr.bf16.mxu0 0
    %1130 = vmatpush1.bf16.msra.mxu0 %v600
    %1131 = vmatprep.subr.bf16.mxu0 0
    %1132 = vmatpush1.bf16.msra.mxu0 %v603
    %1133 = vmatprep.subr.bf16.mxu0 0
    %1134 = vmatpush1.bf16.msra.mxu0 %v606
    %1135 = vmatprep.subr.bf16.mxu0 0
    %1136 = vmatpush1.bf16.msra.mxu0 %v609
    %1137 = vmatprep.subr.bf16.mxu0 0
    %1138 = vmatpush1.bf16.msra.mxu0 %v612
    %1139 = vmatprep.subr.bf16.mxu0 0
    %1140 = vmatpush1.bf16.msra.mxu0 0
    %1141 = vmatprep.subr.bf16.mxu0 0
    %1142 = vmatpush1.bf16.msra.mxu0 0
    %1143 = vmatprep.subr.bf16.mxu0 0
    %1144 = vmatpush1.bf16.msra.mxu0 0
    %1145 = vmatprep.subr.bf16.mxu0 0
    %1146 = vmatpush1.bf16.msra.mxu0 0
    %1147 = vmatprep.subr.bf16.mxu0 0
    %1148 = vmatpush1.bf16.msra.mxu0 0
    %1149 = vmatprep.subr.bf16.mxu0 0
    %1150 = vmatpush1.bf16.msra.mxu0 0
    %1151 = vmatprep.subr.bf16.mxu0 0
    %1152 = vmatpush1.bf16.msra.mxu0 0
    %1153 = vmatprep.subr.bf16.mxu0 0
    %1154 = vmatpush1.bf16.msra.mxu0 0
    %1155 = vmatprep.mubr.bf16.mxu0 0
    %1156 = vmatmul.mubr.bf16.gmra.mrb[0].mxu0 %v1081
    %v1157 = vpop.f32.mrb[0].mxu0
    %v1158 = vadd.f32 0.0, %v1157
    %v1159 = vpop.f32.mrb[0].mxu0
    %v1160 = vpop.f32.mrb[0].mxu0
    %v1161 = vpop.f32.mrb[0].mxu0
    %1162 = vdwg.mxu0
    %v1163 = vadd.f32 %v1078, %v1117
    %v1164 = vxor.u32 %v1163, 2147483648
    %v1165 = vmul.f32 %v1164, 1.442695
    %v1166 = vpow.pop %v1165
    %v1167 = vadd.f32 %v1166, 1.0
    %v1168 = vrcp.pop %v1167
    %v1169 = vmul.f32 1.0, %v1168
    %v1170 = vadd.f32 %v1079, %v1119
    %v1171 = vxor.u32 %v1170, 2147483648
    %v1172 = vmul.f32 %v1171, 1.442695
    %v1173 = vpow.pop %v1172
    %v1174 = vadd.f32 %v1173, 1.0
    %v1175 = vrcp.pop %v1174
    %v1176 = vmul.f32 1.0, %v1175
    %v1177 = vadd.f32 %v1158, %v736
    %v1178 = vmul.f32 %v1169, %v1177
    %v1179 = vadd.f32 %v1080, %v1178
    %v1180 = vtanh.pop %v1179
    %v1181 = vsub.f32 1.0, %v1176
    %v1182 = vmul.f32 %v1181, %v1180
    %v1183 = vmul.f32 %v1176, %v1074
    %v1184 = vadd.f32 %v1182, %v1183
    %s1185 = scalar_lea.vmem [#allocation3], 32
    %1186 = vst [vmem:[%s1185] sm:$0xff] %v1184
    %s1187 = scalar_lea.vmem [#allocation2], 120
    %v1188 = vld [vmem:[%s1187] sm:$0xff]
    %v1189 = vld [vmem:[%s1187 + $0x8] sm:$0xff]
    %v1190 = vld [vmem:[%s1187 + $0x10] sm:$0xff]
    %v1191 = vpack.c.bf16 %v1184, %v1184
    %1192 = vmatprep.subr.bf16.mxu0 %v590
    %1193 = vmatpush1.bf16.msra.mxu0 %v589
    %1194 = vmatprep.subr.bf16.mxu0 %v593
    %1195 = vmatpush1.bf16.msra.mxu0 %v592
    %1196 = vmatprep.subr.bf16.mxu0 %v596
    %1197 = vmatpush1.bf16.msra.mxu0 %v595
    %1198 = vmatprep.subr.bf16.mxu0 %v599
    %1199 = vmatpush1.bf16.msra.mxu0 %v598
    %1200 = vmatprep.subr.bf16.mxu0 %v602
    %1201 = vmatpush1.bf16.msra.mxu0 %v601
    %1202 = vmatprep.subr.bf16.mxu0 %v605
    %1203 = vmatpush1.bf16.msra.mxu0 %v604
    %1204 = vmatprep.subr.bf16.mxu0 %v608
    %1205 = vmatpush1.bf16.msra.mxu0 %v607
    %1206 = vmatprep.subr.bf16.mxu0 %v611
    %1207 = vmatpush1.bf16.msra.mxu0 %v610
    %1208 = vmatprep.subr.bf16.mxu0 0
    %1209 = vmatpush1.bf16.msra.mxu0 0
    %1210 = vmatprep.subr.bf16.mxu0 0
    %1211 = vmatpush1.bf16.msra.mxu0 0
    %1212 = vmatprep.subr.bf16.mxu0 0
    %1213 = vmatpush1.bf16.msra.mxu0 0
    %1214 = vmatprep.subr.bf16.mxu0 0
    %1215 = vmatpush1.bf16.msra.mxu0 0
    %1216 = vmatprep.subr.bf16.mxu0 0
    %1217 = vmatpush1.bf16.msra.mxu0 0
    %1218 = vmatprep.subr.bf16.mxu0 0
    %1219 = vmatpush1.bf16.msra.mxu0 0
    %1220 = vmatprep.subr.bf16.mxu0 0
    %1221 = vmatpush1.bf16.msra.mxu0 0
    %1222 = vmatprep.subr.bf16.mxu0 0
    %1223 = vmatpush1.bf16.msra.mxu0 0
    %1224 = vmatprep.mubr.bf16.mxu0 0
    %1225 = vmatmul.mubr.bf16.gmra.mrb[0].mxu0 %v1191
    %v1226 = vpop.f32.mrb[0].mxu0
    %v1227 = vadd.f32 0.0, %v1226
    %v1228 = vpop.f32.mrb[0].mxu0
    %v1229 = vadd.f32 0.0, %v1228
    %v1230 = vpop.f32.mrb[0].mxu0
    %v1231 = vpop.f32.mrb[0].mxu0
    %1232 = vdwg.mxu0
    %1233 = vmatprep.subr.bf16.mxu0 0
    %1234 = vmatpush1.bf16.msra.mxu0 %v591
    %1235 = vmatprep.subr.bf16.mxu0 0
    %1236 = vmatpush1.bf16.msra.mxu0 %v594
    %1237 = vmatprep.subr.bf16.mxu0 0
    %1238 = vmatpush1.bf16.msra.mxu0 %v597
    %1239 = vmatprep.subr.bf16.mxu0 0
    %1240 = vmatpush1.bf16.msra.mxu0 %v600
    %1241 = vmatprep.subr.bf16.mxu0 0
    %1242 = vmatpush1.bf16.msra.mxu0 %v603
    %1243 = vmatprep.subr.bf16.mxu0 0
    %1244 = vmatpush1.bf16.msra.mxu0 %v606
    %1245 = vmatprep.subr.bf16.mxu0 0
    %1246 = vmatpush1.bf16.msra.mxu0 %v609
    %1247 = vmatprep.subr.bf16.mxu0 0
    %1248 = vmatpush1.bf16.msra.mxu0 %v612
    %1249 = vmatprep.subr.bf16.mxu0 0
    %1250 = vmatpush1.bf16.msra.mxu0 0
    %1251 = vmatprep.subr.bf16.mxu0 0
    %1252 = vmatpush1.bf16.msra.mxu0 0
    %1253 = vmatprep.subr.bf16.mxu0 0
    %1254 = vmatpush1.bf16.msra.mxu0 0
    %1255 = vmatprep.subr.bf16.mxu0 0
    %1256 = vmatpush1.bf16.msra.mxu0 0
    %1257 = vmatprep.subr.bf16.mxu0 0
    %1258 = vmatpush1.bf16.msra.mxu0 0
    %1259 = vmatprep.subr.bf16.mxu0 0
    %1260 = vmatpush1.bf16.msra.mxu0 0
    %1261 = vmatprep.subr.bf16.mxu0 0
    %1262 = vmatpush1.bf16.msra.mxu0 0
    %1263 = vmatprep.subr.bf16.mxu0 0
    %1264 = vmatpush1.bf16.msra.mxu0 0
    %1265 = vmatprep.mubr.bf16.mxu0 0
    %1266 = vmatmul.mubr.bf16.gmra.mrb[0].mxu0 %v1191
    %v1267 = vpop.f32.mrb[0].mxu0
    %v1268 = vadd.f32 0.0, %v1267
    %v1269 = vpop.f32.mrb[0].mxu0
    %v1270 = vpop.f32.mrb[0].mxu0
    %v1271 = vpop.f32.mrb[0].mxu0
    %1272 = vdwg.mxu0
    %v1273 = vadd.f32 %v1188, %v1227
    %v1274 = vxor.u32 %v1273, 2147483648
    %v1275 = vmul.f32 %v1274, 1.442695
    %v1276 = vpow.pop %v1275
    %v1277 = vadd.f32 %v1276, 1.0
    %v1278 = vrcp.pop %v1277
    %v1279 = vmul.f32 1.0, %v1278
    %v1280 = vadd.f32 %v1189, %v1229
    %v1281 = vxor.u32 %v1280, 2147483648
    %v1282 = vmul.f32 %v1281, 1.442695
    %v1283 = vpow.pop %v1282
    %v1284 = vadd.f32 %v1283, 1.0
    %v1285 = vrcp.pop %v1284
    %v1286 = vmul.f32 1.0, %v1285
    %v1287 = vadd.f32 %v1268, %v736
    %v1288 = vmul.f32 %v1279, %v1287
    %v1289 = vadd.f32 %v1190, %v1288
    %v1290 = vtanh.pop %v1289
    %v1291 = vsub.f32 1.0, %v1286
    %v1292 = vmul.f32 %v1291, %v1290
    %v1293 = vmul.f32 %v1286, %v1184
    %v1294 = vadd.f32 %v1292, %v1293
    %s1295 = scalar_lea.vmem [#allocation3], 40
    %1296 = vst [vmem:[%s1295] sm:$0xff] %v1294
    %s1297 = scalar_lea.vmem [#allocation2], 144
    %v1298 = vld [vmem:[%s1297] sm:$0xff]
    %v1299 = vld [vmem:[%s1297 + $0x8] sm:$0xff]
    %v1300 = vld [vmem:[%s1297 + $0x10] sm:$0xff]
    %v1301 = vpack.c.bf16 %v1294, %v1294
    %1302 = vmatprep.subr.bf16.mxu0 %v590
    %1303 = vmatpush1.bf16.msra.mxu0 %v589
    %1304 = vmatprep.subr.bf16.mxu0 %v593
    %1305 = vmatpush1.bf16.msra.mxu0 %v592
    %1306 = vmatprep.subr.bf16.mxu0 %v596
    %1307 = vmatpush1.bf16.msra.mxu0 %v595
    %1308 = vmatprep.subr.bf16.mxu0 %v599
    %1309 = vmatpush1.bf16.msra.mxu0 %v598
    %1310 = vmatprep.subr.bf16.mxu0 %v602
    %1311 = vmatpush1.bf16.msra.mxu0 %v601
    %1312 = vmatprep.subr.bf16.mxu0 %v605
    %1313 = vmatpush1.bf16.msra.mxu0 %v604
    %1314 = vmatprep.subr.bf16.mxu0 %v608
    %1315 = vmatpush1.bf16.msra.mxu0 %v607
    %1316 = vmatprep.subr.bf16.mxu0 %v611
    %1317 = vmatpush1.bf16.msra.mxu0 %v610
    %1318 = vmatprep.subr.bf16.mxu0 0
    %1319 = vmatpush1.bf16.msra.mxu0 0
    %1320 = vmatprep.subr.bf16.mxu0 0
    %1321 = vmatpush1.bf16.msra.mxu0 0
    %1322 = vmatprep.subr.bf16.mxu0 0
    %1323 = vmatpush1.bf16.msra.mxu0 0
    %1324 = vmatprep.subr.bf16.mxu0 0
    %1325 = vmatpush1.bf16.msra.mxu0 0
    %1326 = vmatprep.subr.bf16.mxu0 0
    %1327 = vmatpush1.bf16.msra.mxu0 0
    %1328 = vmatprep.subr.bf16.mxu0 0
    %1329 = vmatpush1.bf16.msra.mxu0 0
    %1330 = vmatprep.subr.bf16.mxu0 0
    %1331 = vmatpush1.bf16.msra.mxu0 0
    %1332 = vmatprep.subr.bf16.mxu0 0
    %1333 = vmatpush1.bf16.msra.mxu0 0
    %1334 = vmatprep.mubr.bf16.mxu0 0
    %1335 = vmatmul.mubr.bf16.gmra.mrb[0].mxu0 %v1301
    %v1336 = vpop.f32.mrb[0].mxu0
    %v1337 = vadd.f32 0.0, %v1336
    %v1338 = vpop.f32.mrb[0].mxu0
    %v1339 = vadd.f32 0.0, %v1338
    %v1340 = vpop.f32.mrb[0].mxu0
    %v1341 = vpop.f32.mrb[0].mxu0
    %1342 = vdwg.mxu0
    %1343 = vmatprep.subr.bf16.mxu0 0
    %1344 = vmatpush1.bf16.msra.mxu0 %v591
    %1345 = vmatprep.subr.bf16.mxu0 0
    %1346 = vmatpush1.bf16.msra.mxu0 %v594
    %1347 = vmatprep.subr.bf16.mxu0 0
    %1348 = vmatpush1.bf16.msra.mxu0 %v597
    %1349 = vmatprep.subr.bf16.mxu0 0
    %1350 = vmatpush1.bf16.msra.mxu0 %v600
    %1351 = vmatprep.subr.bf16.mxu0 0
    %1352 = vmatpush1.bf16.msra.mxu0 %v603
    %1353 = vmatprep.subr.bf16.mxu0 0
    %1354 = vmatpush1.bf16.msra.mxu0 %v606
    %1355 = vmatprep.subr.bf16.mxu0 0
    %1356 = vmatpush1.bf16.msra.mxu0 %v609
    %1357 = vmatprep.subr.bf16.mxu0 0
    %1358 = vmatpush1.bf16.msra.mxu0 %v612
    %1359 = vmatprep.subr.bf16.mxu0 0
    %1360 = vmatpush1.bf16.msra.mxu0 0
    %1361 = vmatprep.subr.bf16.mxu0 0
    %1362 = vmatpush1.bf16.msra.mxu0 0
    %1363 = vmatprep.subr.bf16.mxu0 0
    %1364 = vmatpush1.bf16.msra.mxu0 0
    %1365 = vmatprep.subr.bf16.mxu0 0
    %1366 = vmatpush1.bf16.msra.mxu0 0
    %1367 = vmatprep.subr.bf16.mxu0 0
    %1368 = vmatpush1.bf16.msra.mxu0 0
    %1369 = vmatprep.subr.bf16.mxu0 0
    %1370 = vmatpush1.bf16.msra.mxu0 0
    %1371 = vmatprep.subr.bf16.mxu0 0
    %1372 = vmatpush1.bf16.msra.mxu0 0
    %1373 = vmatprep.subr.bf16.mxu0 0
    %1374 = vmatpush1.bf16.msra.mxu0 0
    %1375 = vmatprep.mubr.bf16.mxu0 0
    %1376 = vmatmul.mubr.bf16.gmra.mrb[0].mxu0 %v1301
    %v1377 = vpop.f32.mrb[0].mxu0
    %v1378 = vadd.f32 0.0, %v1377
    %v1379 = vpop.f32.mrb[0].mxu0
    %v1380 = vpop.f32.mrb[0].mxu0
    %v1381 = vpop.f32.mrb[0].mxu0
    %1382 = vdwg.mxu0
    %v1383 = vadd.f32 %v1298, %v1337
    %v1384 = vxor.u32 %v1383, 2147483648
    %v1385 = vmul.f32 %v1384, 1.442695
    %v1386 = vpow.pop %v1385
    %v1387 = vadd.f32 %v1386, 1.0
    %v1388 = vrcp.pop %v1387
    %v1389 = vmul.f32 1.0, %v1388
    %v1390 = vadd.f32 %v1299, %v1339
    %v1391 = vxor.u32 %v1390, 2147483648
    %v1392 = vmul.f32 %v1391, 1.442695
    %v1393 = vpow.pop %v1392
    %v1394 = vadd.f32 %v1393, 1.0
    %v1395 = vrcp.pop %v1394
    %v1396 = vmul.f32 1.0, %v1395
    %v1397 = vadd.f32 %v1378, %v736
    %v1398 = vmul.f32 %v1389, %v1397
    %v1399 = vadd.f32 %v1300, %v1398
    %v1400 = vtanh.pop %v1399
    %v1401 = vsub.f32 1.0, %v1396
    %v1402 = vmul.f32 %v1401, %v1400
    %v1403 = vmul.f32 %v1396, %v1294
    %v1404 = vadd.f32 %v1402, %v1403
    %s1405 = scalar_lea.vmem [#allocation3], 48
    %1406 = vst [vmem:[%s1405] sm:$0xff] %v1404
    %s1407 = scalar_lea.vmem [#allocation2], 168
    %v1408 = vld [vmem:[%s1407] sm:$0xff]
    %v1409 = vld [vmem:[%s1407 + $0x8] sm:$0xff]
    %v1410 = vld [vmem:[%s1407 + $0x10] sm:$0xff]
    %v1411 = vpack.c.bf16 %v1404, %v1404
    %1412 = vmatprep.subr.bf16.mxu0 %v590
    %1413 = vmatpush1.bf16.msra.mxu0 %v589
    %1414 = vmatprep.subr.bf16.mxu0 %v593
    %1415 = vmatpush1.bf16.msra.mxu0 %v592
    %1416 = vmatprep.subr.bf16.mxu0 %v596
    %1417 = vmatpush1.bf16.msra.mxu0 %v595
    %1418 = vmatprep.subr.bf16.mxu0 %v599
    %1419 = vmatpush1.bf16.msra.mxu0 %v598
    %1420 = vmatprep.subr.bf16.mxu0 %v602
    %1421 = vmatpush1.bf16.msra.mxu0 %v601
    %1422 = vmatprep.subr.bf16.mxu0 %v605
    %1423 = vmatpush1.bf16.msra.mxu0 %v604
    %1424 = vmatprep.subr.bf16.mxu0 %v608
    %1425 = vmatpush1.bf16.msra.mxu0 %v607
    %1426 = vmatprep.subr.bf16.mxu0 %v611
    %1427 = vmatpush1.bf16.msra.mxu0 %v610
    %1428 = vmatprep.subr.bf16.mxu0 0
    %1429 = vmatpush1.bf16.msra.mxu0 0
    %1430 = vmatprep.subr.bf16.mxu0 0
    %1431 = vmatpush1.bf16.msra.mxu0 0
    %1432 = vmatprep.subr.bf16.mxu0 0
    %1433 = vmatpush1.bf16.msra.mxu0 0
    %1434 = vmatprep.subr.bf16.mxu0 0
    %1435 = vmatpush1.bf16.msra.mxu0 0
    %1436 = vmatprep.subr.bf16.mxu0 0
    %1437 = vmatpush1.bf16.msra.mxu0 0
    %1438 = vmatprep.subr.bf16.mxu0 0
    %1439 = vmatpush1.bf16.msra.mxu0 0
    %1440 = vmatprep.subr.bf16.mxu0 0
    %1441 = vmatpush1.bf16.msra.mxu0 0
    %1442 = vmatprep.subr.bf16.mxu0 0
    %1443 = vmatpush1.bf16.msra.mxu0 0
    %1444 = vmatprep.mubr.bf16.mxu0 0
    %1445 = vmatmul.mubr.bf16.gmra.mrb[0].mxu0 %v1411
    %v1446 = vpop.f32.mrb[0].mxu0
    %v1447 = vadd.f32 0.0, %v1446
    %v1448 = vpop.f32.mrb[0].mxu0
    %v1449 = vadd.f32 0.0, %v1448
    %v1450 = vpop.f32.mrb[0].mxu0
    %v1451 = vpop.f32.mrb[0].mxu0
    %1452 = vdwg.mxu0
    %1453 = vmatprep.subr.bf16.mxu0 0
    %1454 = vmatpush1.bf16.msra.mxu0 %v591
    %1455 = vmatprep.subr.bf16.mxu0 0
    %1456 = vmatpush1.bf16.msra.mxu0 %v594
    %1457 = vmatprep.subr.bf16.mxu0 0
    %1458 = vmatpush1.bf16.msra.mxu0 %v597
    %1459 = vmatprep.subr.bf16.mxu0 0
    %1460 = vmatpush1.bf16.msra.mxu0 %v600
    %1461 = vmatprep.subr.bf16.mxu0 0
    %1462 = vmatpush1.bf16.msra.mxu0 %v603
    %1463 = vmatprep.subr.bf16.mxu0 0
    %1464 = vmatpush1.bf16.msra.mxu0 %v606
    %1465 = vmatprep.subr.bf16.mxu0 0
    %1466 = vmatpush1.bf16.msra.mxu0 %v609
    %1467 = vmatprep.subr.bf16.mxu0 0
    %1468 = vmatpush1.bf16.msra.mxu0 %v612
    %1469 = vmatprep.subr.bf16.mxu0 0
    %1470 = vmatpush1.bf16.msra.mxu0 0
    %1471 = vmatprep.subr.bf16.mxu0 0
    %1472 = vmatpush1.bf16.msra.mxu0 0
    %1473 = vmatprep.subr.bf16.mxu0 0
    %1474 = vmatpush1.bf16.msra.mxu0 0
    %1475 = vmatprep.subr.bf16.mxu0 0
    %1476 = vmatpush1.bf16.msra.mxu0 0
    %1477 = vmatprep.subr.bf16.mxu0 0
    %1478 = vmatpush1.bf16.msra.mxu0 0
    %1479 = vmatprep.subr.bf16.mxu0 0
    %1480 = vmatpush1.bf16.msra.mxu0 0
    %1481 = vmatprep.subr.bf16.mxu0 0
    %1482 = vmatpush1.bf16.msra.mxu0 0
    %1483 = vmatprep.subr.bf16.mxu0 0
    %1484 = vmatpush1.bf16.msra.mxu0 0
    %1485 = vmatprep.mubr.bf16.mxu0 0
    %1486 = vmatmul.mubr.bf16.gmra.mrb[0].mxu0 %v1411
    %v1487 = vpop.f32.mrb[0].mxu0
    %v1488 = vadd.f32 0.0, %v1487
    %v1489 = vpop.f32.mrb[0].mxu0
    %v1490 = vpop.f32.mrb[0].mxu0
    %v1491 = vpop.f32.mrb[0].mxu0
    %1492 = vdwg.mxu0
    %v1493 = vadd.f32 %v1408, %v1447
    %v1494 = vxor.u32 %v1493, 2147483648
    %v1495 = vmul.f32 %v1494, 1.442695
    %v1496 = vpow.pop %v1495
    %v1497 = vadd.f32 %v1496, 1.0
    %v1498 = vrcp.pop %v1497
    %v1499 = vmul.f32 1.0, %v1498
    %v1500 = vadd.f32 %v1409, %v1449
    %v1501 = vxor.u32 %v1500, 2147483648
    %v1502 = vmul.f32 %v1501, 1.442695
    %v1503 = vpow.pop %v1502
    %v1504 = vadd.f32 %v1503, 1.0
    %v1505 = vrcp.pop %v1504
    %v1506 = vmul.f32 1.0, %v1505
    %v1507 = vadd.f32 %v1488, %v736
    %v1508 = vmul.f32 %v1499, %v1507
    %v1509 = vadd.f32 %v1410, %v1508
    %v1510 = vtanh.pop %v1509
    %v1511 = vsub.f32 1.0, %v1506
    %v1512 = vmul.f32 %v1511, %v1510
    %v1513 = vmul.f32 %v1506, %v1404
    %v1514 = vadd.f32 %v1512, %v1513
    %s1515 = scalar_lea.vmem [#allocation3], 56
    %1516 = vst [vmem:[%s1515] sm:$0xff] %v1514
    %v1517 = vld [vmem:[#allocation3] sm:$0xff]
    %v1518 = vld [vmem:[#allocation3 + $0x8] sm:$0xff]
    %v1519 = vld [vmem:[#allocation3 + $0x10] sm:$0xff]
    %v1520 = vld [vmem:[#allocation3 + $0x18] sm:$0xff]
    %v1521 = vld [vmem:[#allocation3 + $0x20] sm:$0xff]
    %v1522 = vld [vmem:[#allocation3 + $0x28] sm:$0xff]
    %v1523 = vld [vmem:[#allocation3 + $0x30] sm:$0xff]
    %v1524 = vld [vmem:[#allocation3 + $0x38] sm:$0xff]
    %v1525 = vpack.c.bf16 %v1518, %v1517
    %v1526 = vpack.c.bf16 %v1520, %v1519
    %v1527 = vpack.c.bf16 %v1522, %v1521
    %v1528 = vpack.c.bf16 %v1524, %v1523
    %v1529 = vld [vmem:[#allocation10] sm:$0xff]
    %v1530 = vld [vmem:[#allocation10 + $0x8] sm:$0xf]
    %v1531 = vld [vmem:[#allocation10 + $0xc] sm:$0xff]
    %v1532 = vld [vmem:[#allocation10 + $0x14] sm:$0xf]
    %v1533 = vld [vmem:[#allocation10 + $0x18] sm:$0xff]
    %v1534 = vld [vmem:[#allocation10 + $0x20] sm:$0xf]
    %v1535 = vld [vmem:[#allocation10 + $0x24] sm:$0xff]
    %v1536 = vld [vmem:[#allocation10 + $0x2c] sm:$0xf]
    %v1537 = vld [vmem:[#allocation10 + $0x30] sm:$0xff]
    %v1538 = vld [vmem:[#allocation10 + $0x38] sm:$0xf]
    %v1539 = vld [vmem:[#allocation10 + $0x3c] sm:$0xff]
    %v1540 = vld [vmem:[#allocation10 + $0x44] sm:$0xf]
    %v1541 = vld [vmem:[#allocation10 + $0x48] sm:$0xff]
    %v1542 = vld [vmem:[#allocation10 + $0x50] sm:$0xf]
    %v1543 = vld [vmem:[#allocation10 + $0x54] sm:$0xff]
    %v1544 = vld [vmem:[#allocation10 + $0x5c] sm:$0xf]
    %v1545 = vld [vmem:[#allocation10 + $0x60] sm:$0xff]
    %v1546 = vld [vmem:[#allocation10 + $0x68] sm:$0xf]
    %v1547 = vld [vmem:[#allocation10 + $0x6c] sm:$0xff]
    %v1548 = vld [vmem:[#allocation10 + $0x74] sm:$0xf]
    %v1549 = vld [vmem:[#allocation10 + $0x78] sm:$0xff]
    %v1550 = vld [vmem:[#allocation10 + $0x80] sm:$0xf]
    %v1551 = vld [vmem:[#allocation10 + $0x84] sm:$0xff]
    %v1552 = vld [vmem:[#allocation10 + $0x8c] sm:$0xf]
    %v1553 = vld [vmem:[#allocation10 + $0x90] sm:$0xff]
    %v1554 = vld [vmem:[#allocation10 + $0x98] sm:$0xf]
    %v1555 = vld [vmem:[#allocation10 + $0x9c] sm:$0xff]
    %v1556 = vld [vmem:[#allocation10 + $0xa4] sm:$0xf]
    %v1557 = vld [vmem:[#allocation10 + $0xa8] sm:$0xff]
    %v1558 = vld [vmem:[#allocation10 + $0xb0] sm:$0xf]
    %v1559 = vld [vmem:[#allocation10 + $0xb4] sm:$0xff]
    %v1560 = vld [vmem:[#allocation10 + $0xbc] sm:$0xf]
    %v1561 = vld [vmem:[%s7] sm:$0x7]
    %v1563 = vlaneseq
    %v1564 = vshrl.u32 %v1563, 7
    %v1565 = vsub.s32 0, %v1564
    %v1566 = vrot.slane %v1561, %v1565
    %v1567 = vlaneseq
    %v1568 = vshrl.u32 %v1567, 7
    %v1569 = vsub.s32 1, %v1568
    %v1570 = vrot.slane %v1561, %v1569
    %v1571 = vlaneseq
    %v1572 = vshrl.u32 %v1571, 7
    %v1573 = vsub.s32 2, %v1572
    %v1574 = vrot.slane %v1561, %v1573
    %v1610 = vunpack.c.l.b16 %v1529
    %v1611 = vunpack.c.h.b16 %v1529
    %v1612 = vunpack.c.l.b16 %v1530
    %v1613 = vunpack.c.l.b16 %v1531
    %v1614 = vunpack.c.h.b16 %v1531
    %v1615 = vunpack.c.l.b16 %v1532
    %v1616 = vunpack.c.l.b16 %v1533
    %v1617 = vunpack.c.h.b16 %v1533
    %v1618 = vunpack.c.l.b16 %v1534
    %v1619 = vunpack.c.l.b16 %v1535
    %v1620 = vunpack.c.h.b16 %v1535
    %v1621 = vunpack.c.l.b16 %v1536
    %v1622 = vunpack.c.l.b16 %v1537
    %v1623 = vunpack.c.h.b16 %v1537
    %v1624 = vunpack.c.l.b16 %v1538
    %v1625 = vunpack.c.l.b16 %v1539
    %v1626 = vunpack.c.h.b16 %v1539
    %v1627 = vunpack.c.l.b16 %v1540
    %v1628 = vunpack.c.l.b16 %v1541
    %v1629 = vunpack.c.h.b16 %v1541
    %v1630 = vunpack.c.l.b16 %v1542
    %v1631 = vunpack.c.l.b16 %v1543
    %v1632 = vunpack.c.h.b16 %v1543
    %v1633 = vunpack.c.l.b16 %v1544
    %v1634 = vunpack.c.l.b16 %v1545
    %v1635 = vunpack.c.h.b16 %v1545
    %v1636 = vunpack.c.l.b16 %v1546
    %v1637 = vunpack.c.l.b16 %v1547
    %v1638 = vunpack.c.h.b16 %v1547
    %v1639 = vunpack.c.l.b16 %v1548
    %v1640 = vunpack.c.l.b16 %v1549
    %v1641 = vunpack.c.h.b16 %v1549
    %v1642 = vunpack.c.l.b16 %v1550
    %v1643 = vunpack.c.l.b16 %v1551
    %v1644 = vunpack.c.h.b16 %v1551
    %v1645 = vunpack.c.l.b16 %v1552
    %v1646 = vunpack.c.l.b16 %v1553
    %v1647 = vunpack.c.h.b16 %v1553
    %v1648 = vunpack.c.l.b16 %v1554
    %v1649 = vunpack.c.l.b16 %v1555
    %v1650 = vunpack.c.h.b16 %v1555
    %v1651 = vunpack.c.l.b16 %v1556
    %v1652 = vunpack.c.l.b16 %v1557
    %v1653 = vunpack.c.h.b16 %v1557
    %v1654 = vunpack.c.l.b16 %v1558
    %v1655 = vunpack.c.l.b16 %v1559
    %v1656 = vunpack.c.h.b16 %v1559
    %v1657 = vunpack.c.l.b16 %v1560
    %v1658 = vpack.c.b16 %v1613, %v1610
    %v1659 = vpack.c.b16 %v1614, %v1611
    %v1660 = vpack.c.b16 %v1615, %v1612
    %v1661 = vpack.c.b16 %v1619, %v1616
    %v1662 = vpack.c.b16 %v1620, %v1617
    %v1663 = vpack.c.b16 %v1621, %v1618
    %v1664 = vpack.c.b16 %v1625, %v1622
    %v1665 = vpack.c.b16 %v1626, %v1623
    %v1666 = vpack.c.b16 %v1627, %v1624
    %v1667 = vpack.c.b16 %v1631, %v1628
    %v1668 = vpack.c.b16 %v1632, %v1629
    %v1669 = vpack.c.b16 %v1633, %v1630
    %v1670 = vpack.c.b16 %v1637, %v1634
    %v1671 = vpack.c.b16 %v1638, %v1635
    %v1672 = vpack.c.b16 %v1639, %v1636
    %v1673 = vpack.c.b16 %v1643, %v1640
    %v1674 = vpack.c.b16 %v1644, %v1641
    %v1675 = vpack.c.b16 %v1645, %v1642
    %v1676 = vpack.c.b16 %v1649, %v1646
    %v1677 = vpack.c.b16 %v1650, %v1647
    %v1678 = vpack.c.b16 %v1651, %v1648
    %v1679 = vpack.c.b16 %v1655, %v1652
    %v1680 = vpack.c.b16 %v1656, %v1653
    %v1681 = vpack.c.b16 %v1657, %v1654
    %1706 = vmatprep.subr.bf16.mxu0 %v1659
    %1707 = vmatpush1.bf16.msra.mxu0 %v1658
    %1708 = vmatprep.subr.bf16.mxu0 %v1662
    %1709 = vmatpush1.bf16.msra.mxu0 %v1661
    %1710 = vmatprep.subr.bf16.mxu0 %v1665
    %1711 = vmatpush1.bf16.msra.mxu0 %v1664
    %1712 = vmatprep.subr.bf16.mxu0 %v1668
    %1713 = vmatpush1.bf16.msra.mxu0 %v1667
    %1714 = vmatprep.subr.bf16.mxu0 %v1671
    %1715 = vmatpush1.bf16.msra.mxu0 %v1670
    %1716 = vmatprep.subr.bf16.mxu0 %v1674
    %1717 = vmatpush1.bf16.msra.mxu0 %v1673
    %1718 = vmatprep.subr.bf16.mxu0 %v1677
    %1719 = vmatpush1.bf16.msra.mxu0 %v1676
    %1720 = vmatprep.subr.bf16.mxu0 %v1680
    %1721 = vmatpush1.bf16.msra.mxu0 %v1679
    %1722 = vmatprep.subr.bf16.mxu0 0
    %1723 = vmatpush1.bf16.msra.mxu0 0
    %1724 = vmatprep.subr.bf16.mxu0 0
    %1725 = vmatpush1.bf16.msra.mxu0 0
    %1726 = vmatprep.subr.bf16.mxu0 0
    %1727 = vmatpush1.bf16.msra.mxu0 0
    %1728 = vmatprep.subr.bf16.mxu0 0
    %1729 = vmatpush1.bf16.msra.mxu0 0
    %1730 = vmatprep.subr.bf16.mxu0 0
    %1731 = vmatpush1.bf16.msra.mxu0 0
    %1732 = vmatprep.subr.bf16.mxu0 0
    %1733 = vmatpush1.bf16.msra.mxu0 0
    %1734 = vmatprep.subr.bf16.mxu0 0
    %1735 = vmatpush1.bf16.msra.mxu0 0
    %1736 = vmatprep.subr.bf16.mxu0 0
    %1737 = vmatpush1.bf16.msra.mxu0 0
    %1738 = vmatprep.mubr.bf16.mxu0 0
    %1739 = vmatmul.mubr.bf16.gmra.mrb[0].mxu0 %v1525
    %v1740 = vpop.f32.mrb[0].mxu0
    %v1741 = vadd.f32 %v1566, %v1740
    %v1742 = vpop.f32.mrb[0].mxu0
    %v1743 = vadd.f32 %v1570, %v1742
    %v1744 = vpop.f32.mrb[0].mxu0
    %v1745 = vadd.f32 %v1566, %v1744
    %v1746 = vpop.f32.mrb[0].mxu0
    %v1747 = vadd.f32 %v1570, %v1746
    %1748 = vmatprep.mubr.bf16.mxu0 0
    %1749 = vmatmul.mubr.bf16.gmra.mrb[0].mxu0 %v1526
    %v1750 = vpop.f32.mrb[0].mxu0
    %v1751 = vadd.f32 %v1566, %v1750
    %v1752 = vpop.f32.mrb[0].mxu0
    %v1753 = vadd.f32 %v1570, %v1752
    %v1754 = vpop.f32.mrb[0].mxu0
    %v1755 = vadd.f32 %v1566, %v1754
    %v1756 = vpop.f32.mrb[0].mxu0
    %v1757 = vadd.f32 %v1570, %v1756
    %1758 = vmatprep.mubr.bf16.mxu0 0
    %1759 = vmatmul.mubr.bf16.gmra.mrb[0].mxu0 %v1527
    %v1760 = vpop.f32.mrb[0].mxu0
    %v1761 = vadd.f32 %v1566, %v1760
    %v1762 = vpop.f32.mrb[0].mxu0
    %v1763 = vadd.f32 %v1570, %v1762
    %v1764 = vpop.f32.mrb[0].mxu0
    %v1765 = vadd.f32 %v1566, %v1764
    %v1766 = vpop.f32.mrb[0].mxu0
    %v1767 = vadd.f32 %v1570, %v1766
    %1768 = vmatprep.mubr.bf16.mxu0 0
    %1769 = vmatmul.mubr.bf16.gmra.mrb[0].mxu0 %v1528
    %v1770 = vpop.f32.mrb[0].mxu0
    %v1771 = vadd.f32 %v1566, %v1770
    %v1772 = vpop.f32.mrb[0].mxu0
    %v1773 = vadd.f32 %v1570, %v1772
    %v1774 = vpop.f32.mrb[0].mxu0
    %v1775 = vadd.f32 %v1566, %v1774
    %v1776 = vpop.f32.mrb[0].mxu0
    %v1777 = vadd.f32 %v1570, %v1776
    %1778 = vdwg.mxu0
    %1779 = vmatprep.subr.bf16.mxu0 0
    %1780 = vmatpush1.bf16.msra.mxu0 %v1660
    %1781 = vmatprep.subr.bf16.mxu0 0
    %1782 = vmatpush1.bf16.msra.mxu0 %v1663
    %1783 = vmatprep.subr.bf16.mxu0 0
    %1784 = vmatpush1.bf16.msra.mxu0 %v1666
    %1785 = vmatprep.subr.bf16.mxu0 0
    %1786 = vmatpush1.bf16.msra.mxu0 %v1669
    %1787 = vmatprep.subr.bf16.mxu0 0
    %1788 = vmatpush1.bf16.msra.mxu0 %v1672
    %1789 = vmatprep.subr.bf16.mxu0 0
    %1790 = vmatpush1.bf16.msra.mxu0 %v1675
    %1791 = vmatprep.subr.bf16.mxu0 0
    %1792 = vmatpush1.bf16.msra.mxu0 %v1678
    %1793 = vmatprep.subr.bf16.mxu0 0
    %1794 = vmatpush1.bf16.msra.mxu0 %v1681
    %1795 = vmatprep.subr.bf16.mxu0 0
    %1796 = vmatpush1.bf16.msra.mxu0 0
    %1797 = vmatprep.subr.bf16.mxu0 0
    %1798 = vmatpush1.bf16.msra.mxu0 0
    %1799 = vmatprep.subr.bf16.mxu0 0
    %1800 = vmatpush1.bf16.msra.mxu0 0
    %1801 = vmatprep.subr.bf16.mxu0 0
    %1802 = vmatpush1.bf16.msra.mxu0 0
    %1803 = vmatprep.subr.bf16.mxu0 0
    %1804 = vmatpush1.bf16.msra.mxu0 0
    %1805 = vmatprep.subr.bf16.mxu0 0
    %1806 = vmatpush1.bf16.msra.mxu0 0
    %1807 = vmatprep.subr.bf16.mxu0 0
    %1808 = vmatpush1.bf16.msra.mxu0 0
    %1809 = vmatprep.subr.bf16.mxu0 0
    %1810 = vmatpush1.bf16.msra.mxu0 0
    %1811 = vmatprep.mubr.bf16.mxu0 0
    %1812 = vmatmul.mubr.bf16.gmra.mrb[0].mxu0 %v1525
    %v1813 = vpop.f32.mrb[0].mxu0
    %v1814 = vadd.f32 %v1574, %v1813
    %v1815 = vpop.f32.mrb[0].mxu0
    %v1816 = vpop.f32.mrb[0].mxu0
    %v1817 = vadd.f32 %v1574, %v1816
    %v1818 = vpop.f32.mrb[0].mxu0
    %1819 = vmatprep.mubr.bf16.mxu0 0
    %1820 = vmatmul.mubr.bf16.gmra.mrb[0].mxu0 %v1526
    %v1821 = vpop.f32.mrb[0].mxu0
    %v1822 = vadd.f32 %v1574, %v1821
    %v1823 = vpop.f32.mrb[0].mxu0
    %v1824 = vpop.f32.mrb[0].mxu0
    %v1825 = vadd.f32 %v1574, %v1824
    %v1826 = vpop.f32.mrb[0].mxu0
    %1827 = vmatprep.mubr.bf16.mxu0 0
    %1828 = vmatmul.mubr.bf16.gmra.mrb[0].mxu0 %v1527
    %v1829 = vpop.f32.mrb[0].mxu0
    %v1830 = vadd.f32 %v1574, %v1829
    %v1831 = vpop.f32.mrb[0].mxu0
    %v1832 = vpop.f32.mrb[0].mxu0
    %v1833 = vadd.f32 %v1574, %v1832
    %v1834 = vpop.f32.mrb[0].mxu0
    %1835 = vmatprep.mubr.bf16.mxu0 0
    %1836 = vmatmul.mubr.bf16.gmra.mrb[0].mxu0 %v1528
    %v1837 = vpop.f32.mrb[0].mxu0
    %v1838 = vadd.f32 %v1574, %v1837
    %v1839 = vpop.f32.mrb[0].mxu0
    %v1840 = vpop.f32.mrb[0].mxu0
    %v1841 = vadd.f32 %v1574, %v1840
    %v1842 = vpop.f32.mrb[0].mxu0
    %1843 = vdwg.mxu0
    %1844 = vst [vmem:[#allocation2] sm:$0xff] %v1741
    %1845 = vst [vmem:[#allocation2 + $0x8] sm:$0xff] %v1743
    %1846 = vst [vmem:[#allocation2 + $0x10] sm:$0xff] %v1814
    %1847 = vst [vmem:[#allocation2 + $0x18] sm:$0xff] %v1745
    %1848 = vst [vmem:[#allocation2 + $0x20] sm:$0xff] %v1747
    %1849 = vst [vmem:[#allocation2 + $0x28] sm:$0xff] %v1817
    %1850 = vst [vmem:[#allocation2 + $0x30] sm:$0xff] %v1751
    %1851 = vst [vmem:[#allocation2 + $0x38] sm:$0xff] %v1753
    %1852 = vst [vmem:[#allocation2 + $0x40] sm:$0xff] %v1822
    %1853 = vst [vmem:[#allocation2 + $0x48] sm:$0xff] %v1755
    %1854 = vst [vmem:[#allocation2 + $0x50] sm:$0xff] %v1757
    %1855 = vst [vmem:[#allocation2 + $0x58] sm:$0xff] %v1825
    %1856 = vst [vmem:[#allocation2 + $0x60] sm:$0xff] %v1761
    %1857 = vst [vmem:[#allocation2 + $0x68] sm:$0xff] %v1763
    %1858 = vst [vmem:[#allocation2 + $0x70] sm:$0xff] %v1830
    %1859 = vst [vmem:[#allocation2 + $0x78] sm:$0xff] %v1765
    %1860 = vst [vmem:[#allocation2 + $0x80] sm:$0xff] %v1767
    %1861 = vst [vmem:[#allocation2 + $0x88] sm:$0xff] %v1833
    %1862 = vst [vmem:[#allocation2 + $0x90] sm:$0xff] %v1771
    %1863 = vst [vmem:[#allocation2 + $0x98] sm:$0xff] %v1773
    %1864 = vst [vmem:[#allocation2 + $0xa0] sm:$0xff] %v1838
    %1865 = vst [vmem:[#allocation2 + $0xa8] sm:$0xff] %v1775
    %1866 = vst [vmem:[#allocation2 + $0xb0] sm:$0xff] %v1777
    %1867 = vst [vmem:[#allocation2 + $0xb8] sm:$0xff] %v1841
    %v1868 = vld [vmem:[#allocation12] sm:$0xff]
    %v1869 = vld [vmem:[#allocation12 + $0x8] sm:$0xf]
    %v1870 = vld [vmem:[#allocation12 + $0xc] sm:$0xff]
    %v1871 = vld [vmem:[#allocation12 + $0x14] sm:$0xf]
    %v1872 = vld [vmem:[#allocation12 + $0x18] sm:$0xff]
    %v1873 = vld [vmem:[#allocation12 + $0x20] sm:$0xf]
    %v1874 = vld [vmem:[#allocation12 + $0x24] sm:$0xff]
    %v1875 = vld [vmem:[#allocation12 + $0x2c] sm:$0xf]
    %v1876 = vld [vmem:[#allocation12 + $0x30] sm:$0xff]
    %v1877 = vld [vmem:[#allocation12 + $0x38] sm:$0xf]
    %v1878 = vld [vmem:[#allocation12 + $0x3c] sm:$0xff]
    %v1879 = vld [vmem:[#allocation12 + $0x44] sm:$0xf]
    %v1880 = vld [vmem:[#allocation12 + $0x48] sm:$0xff]
    %v1881 = vld [vmem:[#allocation12 + $0x50] sm:$0xf]
    %v1882 = vld [vmem:[#allocation12 + $0x54] sm:$0xff]
    %v1883 = vld [vmem:[#allocation12 + $0x5c] sm:$0xf]
    %v1884 = vld [vmem:[#allocation12 + $0x60] sm:$0xff]
    %v1885 = vld [vmem:[#allocation12 + $0x68] sm:$0xf]
    %v1886 = vld [vmem:[#allocation12 + $0x6c] sm:$0xff]
    %v1887 = vld [vmem:[#allocation12 + $0x74] sm:$0xf]
    %v1888 = vld [vmem:[#allocation12 + $0x78] sm:$0xff]
    %v1889 = vld [vmem:[#allocation12 + $0x80] sm:$0xf]
    %v1890 = vld [vmem:[#allocation12 + $0x84] sm:$0xff]
    %v1891 = vld [vmem:[#allocation12 + $0x8c] sm:$0xf]
    %v1892 = vld [vmem:[#allocation12 + $0x90] sm:$0xff]
    %v1893 = vld [vmem:[#allocation12 + $0x98] sm:$0xf]
    %v1894 = vld [vmem:[#allocation12 + $0x9c] sm:$0xff]
    %v1895 = vld [vmem:[#allocation12 + $0xa4] sm:$0xf]
    %v1896 = vld [vmem:[#allocation12 + $0xa8] sm:$0xff]
    %v1897 = vld [vmem:[#allocation12 + $0xb0] sm:$0xf]
    %v1898 = vld [vmem:[#allocation12 + $0xb4] sm:$0xff]
    %v1899 = vld [vmem:[#allocation12 + $0xbc] sm:$0xf]
    %v1900 = vld [vmem:[%s8] sm:$0x1]
    %v1901 = vld [vmem:[#allocation2] sm:$0xff]
    %v1902 = vld [vmem:[#allocation2 + $0x8] sm:$0xff]
    %v1903 = vld [vmem:[#allocation2 + $0x10] sm:$0xff]
    %v1936 = vunpack.c.l.b16 %v1868
    %v1937 = vunpack.c.h.b16 %v1868
    %v1938 = vunpack.c.l.b16 %v1869
    %v1939 = vunpack.c.l.b16 %v1870
    %v1940 = vunpack.c.h.b16 %v1870
    %v1941 = vunpack.c.l.b16 %v1871
    %v1942 = vunpack.c.l.b16 %v1872
    %v1943 = vunpack.c.h.b16 %v1872
    %v1944 = vunpack.c.l.b16 %v1873
    %v1945 = vunpack.c.l.b16 %v1874
    %v1946 = vunpack.c.h.b16 %v1874
    %v1947 = vunpack.c.l.b16 %v1875
    %v1948 = vunpack.c.l.b16 %v1876
    %v1949 = vunpack.c.h.b16 %v1876
    %v1950 = vunpack.c.l.b16 %v1877
    %v1951 = vunpack.c.l.b16 %v1878
    %v1952 = vunpack.c.h.b16 %v1878
    %v1953 = vunpack.c.l.b16 %v1879
    %v1954 = vunpack.c.l.b16 %v1880
    %v1955 = vunpack.c.h.b16 %v1880
    %v1956 = vunpack.c.l.b16 %v1881
    %v1957 = vunpack.c.l.b16 %v1882
    %v1958 = vunpack.c.h.b16 %v1882
    %v1959 = vunpack.c.l.b16 %v1883
    %v1960 = vunpack.c.l.b16 %v1884
    %v1961 = vunpack.c.h.b16 %v1884
    %v1962 = vunpack.c.l.b16 %v1885
    %v1963 = vunpack.c.l.b16 %v1886
    %v1964 = vunpack.c.h.b16 %v1886
    %v1965 = vunpack.c.l.b16 %v1887
    %v1966 = vunpack.c.l.b16 %v1888
    %v1967 = vunpack.c.h.b16 %v1888
    %v1968 = vunpack.c.l.b16 %v1889
    %v1969 = vunpack.c.l.b16 %v1890
    %v1970 = vunpack.c.h.b16 %v1890
    %v1971 = vunpack.c.l.b16 %v1891
    %v1972 = vunpack.c.l.b16 %v1892
    %v1973 = vunpack.c.h.b16 %v1892
    %v1974 = vunpack.c.l.b16 %v1893
    %v1975 = vunpack.c.l.b16 %v1894
    %v1976 = vunpack.c.h.b16 %v1894
    %v1977 = vunpack.c.l.b16 %v1895
    %v1978 = vunpack.c.l.b16 %v1896
    %v1979 = vunpack.c.h.b16 %v1896
    %v1980 = vunpack.c.l.b16 %v1897
    %v1981 = vunpack.c.l.b16 %v1898
    %v1982 = vunpack.c.h.b16 %v1898
    %v1983 = vunpack.c.l.b16 %v1899
    %v1984 = vpack.c.b16 %v1939, %v1936
    %v1985 = vpack.c.b16 %v1940, %v1937
    %v1986 = vpack.c.b16 %v1941, %v1938
    %v1987 = vpack.c.b16 %v1945, %v1942
    %v1988 = vpack.c.b16 %v1946, %v1943
    %v1989 = vpack.c.b16 %v1947, %v1944
    %v1990 = vpack.c.b16 %v1951, %v1948
    %v1991 = vpack.c.b16 %v1952, %v1949
    %v1992 = vpack.c.b16 %v1953, %v1950
    %v1993 = vpack.c.b16 %v1957, %v1954
    %v1994 = vpack.c.b16 %v1958, %v1955
    %v1995 = vpack.c.b16 %v1959, %v1956
    %v1996 = vpack.c.b16 %v1963, %v1960
    %v1997 = vpack.c.b16 %v1964, %v1961
    %v1998 = vpack.c.b16 %v1965, %v1962
    %v1999 = vpack.c.b16 %v1969, %v1966
    %v2000 = vpack.c.b16 %v1970, %v1967
    %v2001 = vpack.c.b16 %v1971, %v1968
    %v2002 = vpack.c.b16 %v1975, %v1972
    %v2003 = vpack.c.b16 %v1976, %v1973
    %v2004 = vpack.c.b16 %v1977, %v1974
    %v2005 = vpack.c.b16 %v1981, %v1978
    %v2006 = vpack.c.b16 %v1982, %v1979
    %v2007 = vpack.c.b16 %v1983, %v1980
    %2032 = vmatprep.subr.bf16.mxu0 %v1985
    %2033 = vmatpush1.bf16.msra.mxu0 %v1984
    %2034 = vmatprep.subr.bf16.mxu0 %v1988
    %2035 = vmatpush1.bf16.msra.mxu0 %v1987
    %2036 = vmatprep.subr.bf16.mxu0 %v1991
    %2037 = vmatpush1.bf16.msra.mxu0 %v1990
    %2038 = vmatprep.subr.bf16.mxu0 %v1994
    %2039 = vmatpush1.bf16.msra.mxu0 %v1993
    %2040 = vmatprep.subr.bf16.mxu0 %v1997
    %2041 = vmatpush1.bf16.msra.mxu0 %v1996
    %2042 = vmatprep.subr.bf16.mxu0 %v2000
    %2043 = vmatpush1.bf16.msra.mxu0 %v1999
    %2044 = vmatprep.subr.bf16.mxu0 %v2003
    %2045 = vmatpush1.bf16.msra.mxu0 %v2002
    %2046 = vmatprep.subr.bf16.mxu0 %v2006
    %2047 = vmatpush1.bf16.msra.mxu0 %v2005
    %2048 = vmatprep.subr.bf16.mxu0 0
    %2049 = vmatpush1.bf16.msra.mxu0 0
    %2050 = vmatprep.subr.bf16.mxu0 0
    %2051 = vmatpush1.bf16.msra.mxu0 0
    %2052 = vmatprep.subr.bf16.mxu0 0
    %2053 = vmatpush1.bf16.msra.mxu0 0
    %2054 = vmatprep.subr.bf16.mxu0 0
    %2055 = vmatpush1.bf16.msra.mxu0 0
    %2056 = vmatprep.subr.bf16.mxu0 0
    %2057 = vmatpush1.bf16.msra.mxu0 0
    %2058 = vmatprep.subr.bf16.mxu0 0
    %2059 = vmatpush1.bf16.msra.mxu0 0
    %2060 = vmatprep.subr.bf16.mxu0 0
    %2061 = vmatpush1.bf16.msra.mxu0 0
    %2062 = vmatprep.subr.bf16.mxu0 0
    %2063 = vmatpush1.bf16.msra.mxu0 0
    %2064 = vmatprep.mubr.bf16.mxu0 0
    %2065 = vmatmul.mubr.bf16.gmra.mrb[0].mxu0 0
    %v2066 = vpop.f32.mrb[0].mxu0
    %v2067 = vadd.f32 0.0, %v2066
    %v2068 = vpop.f32.mrb[0].mxu0
    %v2069 = vadd.f32 0.0, %v2068
    %v2070 = vpop.f32.mrb[0].mxu0
    %v2071 = vpop.f32.mrb[0].mxu0
    %2072 = vdwg.mxu0
    %2073 = vmatprep.subr.bf16.mxu0 0
    %2074 = vmatpush1.bf16.msra.mxu0 %v1986
    %2075 = vmatprep.subr.bf16.mxu0 0
    %2076 = vmatpush1.bf16.msra.mxu0 %v1989
    %2077 = vmatprep.subr.bf16.mxu0 0
    %2078 = vmatpush1.bf16.msra.mxu0 %v1992
    %2079 = vmatprep.subr.bf16.mxu0 0
    %2080 = vmatpush1.bf16.msra.mxu0 %v1995
    %2081 = vmatprep.subr.bf16.mxu0 0
    %2082 = vmatpush1.bf16.msra.mxu0 %v1998
    %2083 = vmatprep.subr.bf16.mxu0 0
    %2084 = vmatpush1.bf16.msra.mxu0 %v2001
    %2085 = vmatprep.subr.bf16.mxu0 0
    %2086 = vmatpush1.bf16.msra.mxu0 %v2004
    %2087 = vmatprep.subr.bf16.mxu0 0
    %2088 = vmatpush1.bf16.msra.mxu0 %v2007
    %2089 = vmatprep.subr.bf16.mxu0 0
    %2090 = vmatpush1.bf16.msra.mxu0 0
    %2091 = vmatprep.subr.bf16.mxu0 0
    %2092 = vmatpush1.bf16.msra.mxu0 0
    %2093 = vmatprep.subr.bf16.mxu0 0
    %2094 = vmatpush1.bf16.msra.mxu0 0
    %2095 = vmatprep.subr.bf16.mxu0 0
    %2096 = vmatpush1.bf16.msra.mxu0 0
    %2097 = vmatprep.subr.bf16.mxu0 0
    %2098 = vmatpush1.bf16.msra.mxu0 0
    %2099 = vmatprep.subr.bf16.mxu0 0
    %2100 = vmatpush1.bf16.msra.mxu0 0
    %2101 = vmatprep.subr.bf16.mxu0 0
    %2102 = vmatpush1.bf16.msra.mxu0 0
    %2103 = vmatprep.subr.bf16.mxu0 0
    %2104 = vmatpush1.bf16.msra.mxu0 0
    %2105 = vmatprep.mubr.bf16.mxu0 0
    %2106 = vmatmul.mubr.bf16.gmra.mrb[0].mxu0 0
    %v2107 = vpop.f32.mrb[0].mxu0
    %v2108 = vadd.f32 0.0, %v2107
    %v2109 = vpop.f32.mrb[0].mxu0
    %v2110 = vpop.f32.mrb[0].mxu0
    %v2111 = vpop.f32.mrb[0].mxu0
    %2112 = vdwg.mxu0
    %v2113 = vadd.f32 %v1901, %v2067
    %v2114 = vxor.u32 %v2113, 2147483648
    %v2115 = vmul.f32 %v2114, 1.442695
    %v2116 = vpow.pop %v2115
    %v2117 = vadd.f32 %v2116, 1.0
    %v2118 = vrcp.pop %v2117
    %v2119 = vmul.f32 1.0, %v2118
    %v2120 = vadd.f32 %v1902, %v2069
    %v2121 = vxor.u32 %v2120, 2147483648
    %v2122 = vmul.f32 %v2121, 1.442695
    %v2123 = vpow.pop %v2122
    %v2124 = vadd.f32 %v2123, 1.0
    %v2125 = vrcp.pop %v2124
    %v2126 = vmul.f32 1.0, %v2125
    %v2128 = vlaneseq
    %v2129 = vshrl.u32 %v2128, 7
    %v2130 = vsub.s32 0, %v2129
    %v2131 = vrot.slane %v1900, %v2130
    %v2133 = vadd.f32 %v2108, %v2131
    %v2134 = vmul.f32 %v2119, %v2133
    %v2135 = vadd.f32 %v1903, %v2134
    %v2136 = vtanh.pop %v2135
    %v2137 = vsub.f32 1.0, %v2126
    %v2138 = vmul.f32 %v2137, %v2136
    %v2139 = vmul.f32 %v2126, 0.0
    %v2140 = vadd.f32 %v2138, %v2139
    %v2141 = vld [vmem:[%s747] sm:$0xff]
    %v2142 = vld [vmem:[%s747 + $0x8] sm:$0xff]
    %v2143 = vld [vmem:[%s747 + $0x10] sm:$0xff]
    %v2144 = vpack.c.bf16 %v2140, %v2140
    %2145 = vmatprep.subr.bf16.mxu0 %v1985
    %2146 = vmatpush1.bf16.msra.mxu0 %v1984
    %2147 = vmatprep.subr.bf16.mxu0 %v1988
    %2148 = vmatpush1.bf16.msra.mxu0 %v1987
    %2149 = vmatprep.subr.bf16.mxu0 %v1991
    %2150 = vmatpush1.bf16.msra.mxu0 %v1990
    %2151 = vmatprep.subr.bf16.mxu0 %v1994
    %2152 = vmatpush1.bf16.msra.mxu0 %v1993
    %2153 = vmatprep.subr.bf16.mxu0 %v1997
    %2154 = vmatpush1.bf16.msra.mxu0 %v1996
    %2155 = vmatprep.subr.bf16.mxu0 %v2000
    %2156 = vmatpush1.bf16.msra.mxu0 %v1999
    %2157 = vmatprep.subr.bf16.mxu0 %v2003
    %2158 = vmatpush1.bf16.msra.mxu0 %v2002
    %2159 = vmatprep.subr.bf16.mxu0 %v2006
    %2160 = vmatpush1.bf16.msra.mxu0 %v2005
    %2161 = vmatprep.subr.bf16.mxu0 0
    %2162 = vmatpush1.bf16.msra.mxu0 0
    %2163 = vmatprep.subr.bf16.mxu0 0
    %2164 = vmatpush1.bf16.msra.mxu0 0
    %2165 = vmatprep.subr.bf16.mxu0 0
    %2166 = vmatpush1.bf16.msra.mxu0 0
    %2167 = vmatprep.subr.bf16.mxu0 0
    %2168 = vmatpush1.bf16.msra.mxu0 0
    %2169 = vmatprep.subr.bf16.mxu0 0
    %2170 = vmatpush1.bf16.msra.mxu0 0
    %2171 = vmatprep.subr.bf16.mxu0 0
    %2172 = vmatpush1.bf16.msra.mxu0 0
    %2173 = vmatprep.subr.bf16.mxu0 0
    %2174 = vmatpush1.bf16.msra.mxu0 0
    %2175 = vmatprep.subr.bf16.mxu0 0
    %2176 = vmatpush1.bf16.msra.mxu0 0
    %2177 = vmatprep.mubr.bf16.mxu0 0
    %2178 = vmatmul.mubr.bf16.gmra.mrb[0].mxu0 %v2144
    %v2179 = vpop.f32.mrb[0].mxu0
    %v2180 = vadd.f32 0.0, %v2179
    %v2181 = vpop.f32.mrb[0].mxu0
    %v2182 = vadd.f32 0.0, %v2181
    %v2183 = vpop.f32.mrb[0].mxu0
    %v2184 = vpop.f32.mrb[0].mxu0
    %2185 = vdwg.mxu0
    %2186 = vmatprep.subr.bf16.mxu0 0
    %2187 = vmatpush1.bf16.msra.mxu0 %v1986
    %2188 = vmatprep.subr.bf16.mxu0 0
    %2189 = vmatpush1.bf16.msra.mxu0 %v1989
    %2190 = vmatprep.subr.bf16.mxu0 0
    %2191 = vmatpush1.bf16.msra.mxu0 %v1992
    %2192 = vmatprep.subr.bf16.mxu0 0
    %2193 = vmatpush1.bf16.msra.mxu0 %v1995
    %2194 = vmatprep.subr.bf16.mxu0 0
    %2195 = vmatpush1.bf16.msra.mxu0 %v1998
    %2196 = vmatprep.subr.bf16.mxu0 0
    %2197 = vmatpush1.bf16.msra.mxu0 %v2001
    %2198 = vmatprep.subr.bf16.mxu0 0
    %2199 = vmatpush1.bf16.msra.mxu0 %v2004
    %2200 = vmatprep.subr.bf16.mxu0 0
    %2201 = vmatpush1.bf16.msra.mxu0 %v2007
    %2202 = vmatprep.subr.bf16.mxu0 0
    %2203 = vmatpush1.bf16.msra.mxu0 0
    %2204 = vmatprep.subr.bf16.mxu0 0
    %2205 = vmatpush1.bf16.msra.mxu0 0
    %2206 = vmatprep.subr.bf16.mxu0 0
    %2207 = vmatpush1.bf16.msra.mxu0 0
    %2208 = vmatprep.subr.bf16.mxu0 0
    %2209 = vmatpush1.bf16.msra.mxu0 0
    %2210 = vmatprep.subr.bf16.mxu0 0
    %2211 = vmatpush1.bf16.msra.mxu0 0
    %2212 = vmatprep.subr.bf16.mxu0 0
    %2213 = vmatpush1.bf16.msra.mxu0 0
    %2214 = vmatprep.subr.bf16.mxu0 0
    %2215 = vmatpush1.bf16.msra.mxu0 0
    %2216 = vmatprep.subr.bf16.mxu0 0
    %2217 = vmatpush1.bf16.msra.mxu0 0
    %2218 = vmatprep.mubr.bf16.mxu0 0
    %2219 = vmatmul.mubr.bf16.gmra.mrb[0].mxu0 %v2144
    %v2220 = vpop.f32.mrb[0].mxu0
    %v2221 = vadd.f32 0.0, %v2220
    %v2222 = vpop.f32.mrb[0].mxu0
    %v2223 = vpop.f32.mrb[0].mxu0
    %v2224 = vpop.f32.mrb[0].mxu0
    %2225 = vdwg.mxu0
    %v2226 = vadd.f32 %v2141, %v2180
    %v2227 = vxor.u32 %v2226, 2147483648
    %v2228 = vmul.f32 %v2227, 1.442695
    %v2229 = vpow.pop %v2228
    %v2230 = vadd.f32 %v2229, 1.0
    %v2231 = vrcp.pop %v2230
    %v2232 = vmul.f32 1.0, %v2231
    %v2233 = vadd.f32 %v2142, %v2182
    %v2234 = vxor.u32 %v2233, 2147483648
    %v2235 = vmul.f32 %v2234, 1.442695
    %v2236 = vpow.pop %v2235
    %v2237 = vadd.f32 %v2236, 1.0
    %v2238 = vrcp.pop %v2237
    %v2239 = vmul.f32 1.0, %v2238
    %v2240 = vadd.f32 %v2221, %v2131
    %v2241 = vmul.f32 %v2232, %v2240
    %v2242 = vadd.f32 %v2143, %v2241
    %v2243 = vtanh.pop %v2242
    %v2244 = vsub.f32 1.0, %v2239
    %v2245 = vmul.f32 %v2244, %v2243
    %v2246 = vmul.f32 %v2239, %v2140
    %v2247 = vadd.f32 %v2245, %v2246
    %v2248 = vld [vmem:[%s857] sm:$0xff]
    %v2249 = vld [vmem:[%s857 + $0x8] sm:$0xff]
    %v2250 = vld [vmem:[%s857 + $0x10] sm:$0xff]
    %v2251 = vpack.c.bf16 %v2247, %v2247
    %2252 = vmatprep.subr.bf16.mxu0 %v1985
    %2253 = vmatpush1.bf16.msra.mxu0 %v1984
    %2254 = vmatprep.subr.bf16.mxu0 %v1988
    %2255 = vmatpush1.bf16.msra.mxu0 %v1987
    %2256 = vmatprep.subr.bf16.mxu0 %v1991
    %2257 = vmatpush1.bf16.msra.mxu0 %v1990
    %2258 = vmatprep.subr.bf16.mxu0 %v1994
    %2259 = vmatpush1.bf16.msra.mxu0 %v1993
    %2260 = vmatprep.subr.bf16.mxu0 %v1997
    %2261 = vmatpush1.bf16.msra.mxu0 %v1996
    %2262 = vmatprep.subr.bf16.mxu0 %v2000
    %2263 = vmatpush1.bf16.msra.mxu0 %v1999
    %2264 = vmatprep.subr.bf16.mxu0 %v2003
    %2265 = vmatpush1.bf16.msra.mxu0 %v2002
    %2266 = vmatprep.subr.bf16.mxu0 %v2006
    %2267 = vmatpush1.bf16.msra.mxu0 %v2005
    %2268 = vmatprep.subr.bf16.mxu0 0
    %2269 = vmatpush1.bf16.msra.mxu0 0
    %2270 = vmatprep.subr.bf16.mxu0 0
    %2271 = vmatpush1.bf16.msra.mxu0 0
    %2272 = vmatprep.subr.bf16.mxu0 0
    %2273 = vmatpush1.bf16.msra.mxu0 0
    %2274 = vmatprep.subr.bf16.mxu0 0
    %2275 = vmatpush1.bf16.msra.mxu0 0
    %2276 = vmatprep.subr.bf16.mxu0 0
    %2277 = vmatpush1.bf16.msra.mxu0 0
    %2278 = vmatprep.subr.bf16.mxu0 0
    %2279 = vmatpush1.bf16.msra.mxu0 0
    %2280 = vmatprep.subr.bf16.mxu0 0
    %2281 = vmatpush1.bf16.msra.mxu0 0
    %2282 = vmatprep.subr.bf16.mxu0 0
    %2283 = vmatpush1.bf16.msra.mxu0 0
    %2284 = vmatprep.mubr.bf16.mxu0 0
    %2285 = vmatmul.mubr.bf16.gmra.mrb[0].mxu0 %v2251
    %v2286 = vpop.f32.mrb[0].mxu0
    %v2287 = vadd.f32 0.0, %v2286
    %v2288 = vpop.f32.mrb[0].mxu0
    %v2289 = vadd.f32 0.0, %v2288
    %v2290 = vpop.f32.mrb[0].mxu0
    %v2291 = vpop.f32.mrb[0].mxu0
    %2292 = vdwg.mxu0
    %2293 = vmatprep.subr.bf16.mxu0 0
    %2294 = vmatpush1.bf16.msra.mxu0 %v1986
    %2295 = vmatprep.subr.bf16.mxu0 0
    %2296 = vmatpush1.bf16.msra.mxu0 %v1989
    %2297 = vmatprep.subr.bf16.mxu0 0
    %2298 = vmatpush1.bf16.msra.mxu0 %v1992
    %2299 = vmatprep.subr.bf16.mxu0 0
    %2300 = vmatpush1.bf16.msra.mxu0 %v1995
    %2301 = vmatprep.subr.bf16.mxu0 0
    %2302 = vmatpush1.bf16.msra.mxu0 %v1998
    %2303 = vmatprep.subr.bf16.mxu0 0
    %2304 = vmatpush1.bf16.msra.mxu0 %v2001
    %2305 = vmatprep.subr.bf16.mxu0 0
    %2306 = vmatpush1.bf16.msra.mxu0 %v2004
    %2307 = vmatprep.subr.bf16.mxu0 0
    %2308 = vmatpush1.bf16.msra.mxu0 %v2007
    %2309 = vmatprep.subr.bf16.mxu0 0
    %2310 = vmatpush1.bf16.msra.mxu0 0
    %2311 = vmatprep.subr.bf16.mxu0 0
    %2312 = vmatpush1.bf16.msra.mxu0 0
    %2313 = vmatprep.subr.bf16.mxu0 0
    %2314 = vmatpush1.bf16.msra.mxu0 0
    %2315 = vmatprep.subr.bf16.mxu0 0
    %2316 = vmatpush1.bf16.msra.mxu0 0
    %2317 = vmatprep.subr.bf16.mxu0 0
    %2318 = vmatpush1.bf16.msra.mxu0 0
    %2319 = vmatprep.subr.bf16.mxu0 0
    %2320 = vmatpush1.bf16.msra.mxu0 0
    %2321 = vmatprep.subr.bf16.mxu0 0
    %2322 = vmatpush1.bf16.msra.mxu0 0
    %2323 = vmatprep.subr.bf16.mxu0 0
    %2324 = vmatpush1.bf16.msra.mxu0 0
    %2325 = vmatprep.mubr.bf16.mxu0 0
    %2326 = vmatmul.mubr.bf16.gmra.mrb[0].mxu0 %v2251
    %v2327 = vpop.f32.mrb[0].mxu0
    %v2328 = vadd.f32 0.0, %v2327
    %v2329 = vpop.f32.mrb[0].mxu0
    %v2330 = vpop.f32.mrb[0].mxu0
    %v2331 = vpop.f32.mrb[0].mxu0
    %2332 = vdwg.mxu0
    %v2333 = vadd.f32 %v2248, %v2287
    %v2334 = vxor.u32 %v2333, 2147483648
    %v2335 = vmul.f32 %v2334, 1.442695
    %v2336 = vpow.pop %v2335
    %v2337 = vadd.f32 %v2336, 1.0
    %v2338 = vrcp.pop %v2337
    %v2339 = vmul.f32 1.0, %v2338
    %v2340 = vadd.f32 %v2249, %v2289
    %v2341 = vxor.u32 %v2340, 2147483648
    %v2342 = vmul.f32 %v2341, 1.442695
    %v2343 = vpow.pop %v2342
    %v2344 = vadd.f32 %v2343, 1.0
    %v2345 = vrcp.pop %v2344
    %v2346 = vmul.f32 1.0, %v2345
    %v2347 = vadd.f32 %v2328, %v2131
    %v2348 = vmul.f32 %v2339, %v2347
    %v2349 = vadd.f32 %v2250, %v2348
    %v2350 = vtanh.pop %v2349
    %v2351 = vsub.f32 1.0, %v2346
    %v2352 = vmul.f32 %v2351, %v2350
    %v2353 = vmul.f32 %v2346, %v2247
    %v2354 = vadd.f32 %v2352, %v2353
    %v2355 = vld [vmem:[%s967] sm:$0xff]
    %v2356 = vld [vmem:[%s967 + $0x8] sm:$0xff]
    %v2357 = vld [vmem:[%s967 + $0x10] sm:$0xff]
    %v2358 = vpack.c.bf16 %v2354, %v2354
    %2359 = vmatprep.subr.bf16.mxu0 %v1985
    %2360 = vmatpush1.bf16.msra.mxu0 %v1984
    %2361 = vmatprep.subr.bf16.mxu0 %v1988
    %2362 = vmatpush1.bf16.msra.mxu0 %v1987
    %2363 = vmatprep.subr.bf16.mxu0 %v1991
    %2364 = vmatpush1.bf16.msra.mxu0 %v1990
    %2365 = vmatprep.subr.bf16.mxu0 %v1994
    %2366 = vmatpush1.bf16.msra.mxu0 %v1993
    %2367 = vmatprep.subr.bf16.mxu0 %v1997
    %2368 = vmatpush1.bf16.msra.mxu0 %v1996
    %2369 = vmatprep.subr.bf16.mxu0 %v2000
    %2370 = vmatpush1.bf16.msra.mxu0 %v1999
    %2371 = vmatprep.subr.bf16.mxu0 %v2003
    %2372 = vmatpush1.bf16.msra.mxu0 %v2002
    %2373 = vmatprep.subr.bf16.mxu0 %v2006
    %2374 = vmatpush1.bf16.msra.mxu0 %v2005
    %2375 = vmatprep.subr.bf16.mxu0 0
    %2376 = vmatpush1.bf16.msra.mxu0 0
    %2377 = vmatprep.subr.bf16.mxu0 0
    %2378 = vmatpush1.bf16.msra.mxu0 0
    %2379 = vmatprep.subr.bf16.mxu0 0
    %2380 = vmatpush1.bf16.msra.mxu0 0
    %2381 = vmatprep.subr.bf16.mxu0 0
    %2382 = vmatpush1.bf16.msra.mxu0 0
    %2383 = vmatprep.subr.bf16.mxu0 0
    %2384 = vmatpush1.bf16.msra.mxu0 0
    %2385 = vmatprep.subr.bf16.mxu0 0
    %2386 = vmatpush1.bf16.msra.mxu0 0
    %2387 = vmatprep.subr.bf16.mxu0 0
    %2388 = vmatpush1.bf16.msra.mxu0 0
    %2389 = vmatprep.subr.bf16.mxu0 0
    %2390 = vmatpush1.bf16.msra.mxu0 0
    %2391 = vmatprep.mubr.bf16.mxu0 0
    %2392 = vmatmul.mubr.bf16.gmra.mrb[0].mxu0 %v2358
    %v2393 = vpop.f32.mrb[0].mxu0
    %v2394 = vadd.f32 0.0, %v2393
    %v2395 = vpop.f32.mrb[0].mxu0
    %v2396 = vadd.f32 0.0, %v2395
    %v2397 = vpop.f32.mrb[0].mxu0
    %v2398 = vpop.f32.mrb[0].mxu0
    %2399 = vdwg.mxu0
    %2400 = vmatprep.subr.bf16.mxu0 0
    %2401 = vmatpush1.bf16.msra.mxu0 %v1986
    %2402 = vmatprep.subr.bf16.mxu0 0
    %2403 = vmatpush1.bf16.msra.mxu0 %v1989
    %2404 = vmatprep.subr.bf16.mxu0 0
    %2405 = vmatpush1.bf16.msra.mxu0 %v1992
    %2406 = vmatprep.subr.bf16.mxu0 0
    %2407 = vmatpush1.bf16.msra.mxu0 %v1995
    %2408 = vmatprep.subr.bf16.mxu0 0
    %2409 = vmatpush1.bf16.msra.mxu0 %v1998
    %2410 = vmatprep.subr.bf16.mxu0 0
    %2411 = vmatpush1.bf16.msra.mxu0 %v2001
    %2412 = vmatprep.subr.bf16.mxu0 0
    %2413 = vmatpush1.bf16.msra.mxu0 %v2004
    %2414 = vmatprep.subr.bf16.mxu0 0
    %2415 = vmatpush1.bf16.msra.mxu0 %v2007
    %2416 = vmatprep.subr.bf16.mxu0 0
    %2417 = vmatpush1.bf16.msra.mxu0 0
    %2418 = vmatprep.subr.bf16.mxu0 0
    %2419 = vmatpush1.bf16.msra.mxu0 0
    %2420 = vmatprep.subr.bf16.mxu0 0
    %2421 = vmatpush1.bf16.msra.mxu0 0
    %2422 = vmatprep.subr.bf16.mxu0 0
    %2423 = vmatpush1.bf16.msra.mxu0 0
    %2424 = vmatprep.subr.bf16.mxu0 0
    %2425 = vmatpush1.bf16.msra.mxu0 0
    %2426 = vmatprep.subr.bf16.mxu0 0
    %2427 = vmatpush1.bf16.msra.mxu0 0
    %2428 = vmatprep.subr.bf16.mxu0 0
    %2429 = vmatpush1.bf16.msra.mxu0 0
    %2430 = vmatprep.subr.bf16.mxu0 0
    %2431 = vmatpush1.bf16.msra.mxu0 0
    %2432 = vmatprep.mubr.bf16.mxu0 0
    %2433 = vmatmul.mubr.bf16.gmra.mrb[0].mxu0 %v2358
    %v2434 = vpop.f32.mrb[0].mxu0
    %v2435 = vadd.f32 0.0, %v2434
    %v2436 = vpop.f32.mrb[0].mxu0
    %v2437 = vpop.f32.mrb[0].mxu0
    %v2438 = vpop.f32.mrb[0].mxu0
    %2439 = vdwg.mxu0
    %v2440 = vadd.f32 %v2355, %v2394
    %v2441 = vxor.u32 %v2440, 2147483648
    %v2442 = vmul.f32 %v2441, 1.442695
    %v2443 = vpow.pop %v2442
    %v2444 = vadd.f32 %v2443, 1.0
    %v2445 = vrcp.pop %v2444
    %v2446 = vmul.f32 1.0, %v2445
    %v2447 = vadd.f32 %v2356, %v2396
    %v2448 = vxor.u32 %v2447, 2147483648
    %v2449 = vmul.f32 %v2448, 1.442695
    %v2450 = vpow.pop %v2449
    %v2451 = vadd.f32 %v2450, 1.0
    %v2452 = vrcp.pop %v2451
    %v2453 = vmul.f32 1.0, %v2452
    %v2454 = vadd.f32 %v2435, %v2131
    %v2455 = vmul.f32 %v2446, %v2454
    %v2456 = vadd.f32 %v2357, %v2455
    %v2457 = vtanh.pop %v2456
    %v2458 = vsub.f32 1.0, %v2453
    %v2459 = vmul.f32 %v2458, %v2457
    %v2460 = vmul.f32 %v2453, %v2354
    %v2461 = vadd.f32 %v2459, %v2460
    %v2462 = vld [vmem:[%s1077] sm:$0xff]
    %v2463 = vld [vmem:[%s1077 + $0x8] sm:$0xff]
    %v2464 = vld [vmem:[%s1077 + $0x10] sm:$0xff]
    %v2465 = vpack.c.bf16 %v2461, %v2461
    %2466 = vmatprep.subr.bf16.mxu0 %v1985
    %2467 = vmatpush1.bf16.msra.mxu0 %v1984
    %2468 = vmatprep.subr.bf16.mxu0 %v1988
    %2469 = vmatpush1.bf16.msra.mxu0 %v1987
    %2470 = vmatprep.subr.bf16.mxu0 %v1991
    %2471 = vmatpush1.bf16.msra.mxu0 %v1990
    %2472 = vmatprep.subr.bf16.mxu0 %v1994
    %2473 = vmatpush1.bf16.msra.mxu0 %v1993
    %2474 = vmatprep.subr.bf16.mxu0 %v1997
    %2475 = vmatpush1.bf16.msra.mxu0 %v1996
    %2476 = vmatprep.subr.bf16.mxu0 %v2000
    %2477 = vmatpush1.bf16.msra.mxu0 %v1999
    %2478 = vmatprep.subr.bf16.mxu0 %v2003
    %2479 = vmatpush1.bf16.msra.mxu0 %v2002
    %2480 = vmatprep.subr.bf16.mxu0 %v2006
    %2481 = vmatpush1.bf16.msra.mxu0 %v2005
    %2482 = vmatprep.subr.bf16.mxu0 0
    %2483 = vmatpush1.bf16.msra.mxu0 0
    %2484 = vmatprep.subr.bf16.mxu0 0
    %2485 = vmatpush1.bf16.msra.mxu0 0
    %2486 = vmatprep.subr.bf16.mxu0 0
    %2487 = vmatpush1.bf16.msra.mxu0 0
    %2488 = vmatprep.subr.bf16.mxu0 0
    %2489 = vmatpush1.bf16.msra.mxu0 0
    %2490 = vmatprep.subr.bf16.mxu0 0
    %2491 = vmatpush1.bf16.msra.mxu0 0
    %2492 = vmatprep.subr.bf16.mxu0 0
    %2493 = vmatpush1.bf16.msra.mxu0 0
    %2494 = vmatprep.subr.bf16.mxu0 0
    %2495 = vmatpush1.bf16.msra.mxu0 0
    %2496 = vmatprep.subr.bf16.mxu0 0
    %2497 = vmatpush1.bf16.msra.mxu0 0
    %2498 = vmatprep.mubr.bf16.mxu0 0
    %2499 = vmatmul.mubr.bf16.gmra.mrb[0].mxu0 %v2465
    %v2500 = vpop.f32.mrb[0].mxu0
    %v2501 = vadd.f32 0.0, %v2500
    %v2502 = vpop.f32.mrb[0].mxu0
    %v2503 = vadd.f32 0.0, %v2502
    %v2504 = vpop.f32.mrb[0].mxu0
    %v2505 = vpop.f32.mrb[0].mxu0
    %2506 = vdwg.mxu0
    %2507 = vmatprep.subr.bf16.mxu0 0
    %2508 = vmatpush1.bf16.msra.mxu0 %v1986
    %2509 = vmatprep.subr.bf16.mxu0 0
    %2510 = vmatpush1.bf16.msra.mxu0 %v1989
    %2511 = vmatprep.subr.bf16.mxu0 0
    %2512 = vmatpush1.bf16.msra.mxu0 %v1992
    %2513 = vmatprep.subr.bf16.mxu0 0
    %2514 = vmatpush1.bf16.msra.mxu0 %v1995
    %2515 = vmatprep.subr.bf16.mxu0 0
    %2516 = vmatpush1.bf16.msra.mxu0 %v1998
    %2517 = vmatprep.subr.bf16.mxu0 0
    %2518 = vmatpush1.bf16.msra.mxu0 %v2001
    %2519 = vmatprep.subr.bf16.mxu0 0
    %2520 = vmatpush1.bf16.msra.mxu0 %v2004
    %2521 = vmatprep.subr.bf16.mxu0 0
    %2522 = vmatpush1.bf16.msra.mxu0 %v2007
    %2523 = vmatprep.subr.bf16.mxu0 0
    %2524 = vmatpush1.bf16.msra.mxu0 0
    %2525 = vmatprep.subr.bf16.mxu0 0
    %2526 = vmatpush1.bf16.msra.mxu0 0
    %2527 = vmatprep.subr.bf16.mxu0 0
    %2528 = vmatpush1.bf16.msra.mxu0 0
    %2529 = vmatprep.subr.bf16.mxu0 0
    %2530 = vmatpush1.bf16.msra.mxu0 0
    %2531 = vmatprep.subr.bf16.mxu0 0
    %2532 = vmatpush1.bf16.msra.mxu0 0
    %2533 = vmatprep.subr.bf16.mxu0 0
    %2534 = vmatpush1.bf16.msra.mxu0 0
    %2535 = vmatprep.subr.bf16.mxu0 0
    %2536 = vmatpush1.bf16.msra.mxu0 0
    %2537 = vmatprep.subr.bf16.mxu0 0
    %2538 = vmatpush1.bf16.msra.mxu0 0
    %2539 = vmatprep.mubr.bf16.mxu0 0
    %2540 = vmatmul.mubr.bf16.gmra.mrb[0].mxu0 %v2465
    %v2541 = vpop.f32.mrb[0].mxu0
    %v2542 = vadd.f32 0.0, %v2541
    %v2543 = vpop.f32.mrb[0].mxu0
    %v2544 = vpop.f32.mrb[0].mxu0
    %v2545 = vpop.f32.mrb[0].mxu0
    %2546 = vdwg.mxu0
    %v2547 = vadd.f32 %v2462, %v2501
    %v2548 = vxor.u32 %v2547, 2147483648
    %v2549 = vmul.f32 %v2548, 1.442695
    %v2550 = vpow.pop %v2549
    %v2551 = vadd.f32 %v2550, 1.0
    %v2552 = vrcp.pop %v2551
    %v2553 = vmul.f32 1.0, %v2552
    %v2554 = vadd.f32 %v2463, %v2503
    %v2555 = vxor.u32 %v2554, 2147483648
    %v2556 = vmul.f32 %v2555, 1.442695
    %v2557 = vpow.pop %v2556
    %v2558 = vadd.f32 %v2557, 1.0
    %v2559 = vrcp.pop %v2558
    %v2560 = vmul.f32 1.0, %v2559
    %v2561 = vadd.f32 %v2542, %v2131
    %v2562 = vmul.f32 %v2553, %v2561
    %v2563 = vadd.f32 %v2464, %v2562
    %v2564 = vtanh.pop %v2563
    %v2565 = vsub.f32 1.0, %v2560
    %v2566 = vmul.f32 %v2565, %v2564
    %v2567 = vmul.f32 %v2560, %v2461
    %v2568 = vadd.f32 %v2566, %v2567
    %v2569 = vld [vmem:[%s1187] sm:$0xff]
    %v2570 = vld [vmem:[%s1187 + $0x8] sm:$0xff]
    %v2571 = vld [vmem:[%s1187 + $0x10] sm:$0xff]
    %v2572 = vpack.c.bf16 %v2568, %v2568
    %2573 = vmatprep.subr.bf16.mxu0 %v1985
    %2574 = vmatpush1.bf16.msra.mxu0 %v1984
    %2575 = vmatprep.subr.bf16.mxu0 %v1988
    %2576 = vmatpush1.bf16.msra.mxu0 %v1987
    %2577 = vmatprep.subr.bf16.mxu0 %v1991
    %2578 = vmatpush1.bf16.msra.mxu0 %v1990
    %2579 = vmatprep.subr.bf16.mxu0 %v1994
    %2580 = vmatpush1.bf16.msra.mxu0 %v1993
    %2581 = vmatprep.subr.bf16.mxu0 %v1997
    %2582 = vmatpush1.bf16.msra.mxu0 %v1996
    %2583 = vmatprep.subr.bf16.mxu0 %v2000
    %2584 = vmatpush1.bf16.msra.mxu0 %v1999
    %2585 = vmatprep.subr.bf16.mxu0 %v2003
    %2586 = vmatpush1.bf16.msra.mxu0 %v2002
    %2587 = vmatprep.subr.bf16.mxu0 %v2006
    %2588 = vmatpush1.bf16.msra.mxu0 %v2005
    %2589 = vmatprep.subr.bf16.mxu0 0
    %2590 = vmatpush1.bf16.msra.mxu0 0
    %2591 = vmatprep.subr.bf16.mxu0 0
    %2592 = vmatpush1.bf16.msra.mxu0 0
    %2593 = vmatprep.subr.bf16.mxu0 0
    %2594 = vmatpush1.bf16.msra.mxu0 0
    %2595 = vmatprep.subr.bf16.mxu0 0
    %2596 = vmatpush1.bf16.msra.mxu0 0
    %2597 = vmatprep.subr.bf16.mxu0 0
    %2598 = vmatpush1.bf16.msra.mxu0 0
    %2599 = vmatprep.subr.bf16.mxu0 0
    %2600 = vmatpush1.bf16.msra.mxu0 0
    %2601 = vmatprep.subr.bf16.mxu0 0
    %2602 = vmatpush1.bf16.msra.mxu0 0
    %2603 = vmatprep.subr.bf16.mxu0 0
    %2604 = vmatpush1.bf16.msra.mxu0 0
    %2605 = vmatprep.mubr.bf16.mxu0 0
    %2606 = vmatmul.mubr.bf16.gmra.mrb[0].mxu0 %v2572
    %v2607 = vpop.f32.mrb[0].mxu0
    %v2608 = vadd.f32 0.0, %v2607
    %v2609 = vpop.f32.mrb[0].mxu0
    %v2610 = vadd.f32 0.0, %v2609
    %v2611 = vpop.f32.mrb[0].mxu0
    %v2612 = vpop.f32.mrb[0].mxu0
    %2613 = vdwg.mxu0
    %2614 = vmatprep.subr.bf16.mxu0 0
    %2615 = vmatpush1.bf16.msra.mxu0 %v1986
    %2616 = vmatprep.subr.bf16.mxu0 0
    %2617 = vmatpush1.bf16.msra.mxu0 %v1989
    %2618 = vmatprep.subr.bf16.mxu0 0
    %2619 = vmatpush1.bf16.msra.mxu0 %v1992
    %2620 = vmatprep.subr.bf16.mxu0 0
    %2621 = vmatpush1.bf16.msra.mxu0 %v1995
    %2622 = vmatprep.subr.bf16.mxu0 0
    %2623 = vmatpush1.bf16.msra.mxu0 %v1998
    %2624 = vmatprep.subr.bf16.mxu0 0
    %2625 = vmatpush1.bf16.msra.mxu0 %v2001
    %2626 = vmatprep.subr.bf16.mxu0 0
    %2627 = vmatpush1.bf16.msra.mxu0 %v2004
    %2628 = vmatprep.subr.bf16.mxu0 0
    %2629 = vmatpush1.bf16.msra.mxu0 %v2007
    %2630 = vmatprep.subr.bf16.mxu0 0
    %2631 = vmatpush1.bf16.msra.mxu0 0
    %2632 = vmatprep.subr.bf16.mxu0 0
    %2633 = vmatpush1.bf16.msra.mxu0 0
    %2634 = vmatprep.subr.bf16.mxu0 0
    %2635 = vmatpush1.bf16.msra.mxu0 0
    %2636 = vmatprep.subr.bf16.mxu0 0
    %2637 = vmatpush1.bf16.msra.mxu0 0
    %2638 = vmatprep.subr.bf16.mxu0 0
    %2639 = vmatpush1.bf16.msra.mxu0 0
    %2640 = vmatprep.subr.bf16.mxu0 0
    %2641 = vmatpush1.bf16.msra.mxu0 0
    %2642 = vmatprep.subr.bf16.mxu0 0
    %2643 = vmatpush1.bf16.msra.mxu0 0
    %2644 = vmatprep.subr.bf16.mxu0 0
    %2645 = vmatpush1.bf16.msra.mxu0 0
    %2646 = vmatprep.mubr.bf16.mxu0 0
    %2647 = vmatmul.mubr.bf16.gmra.mrb[0].mxu0 %v2572
    %v2648 = vpop.f32.mrb[0].mxu0
    %v2649 = vadd.f32 0.0, %v2648
    %v2650 = vpop.f32.mrb[0].mxu0
    %v2651 = vpop.f32.mrb[0].mxu0
    %v2652 = vpop.f32.mrb[0].mxu0
    %2653 = vdwg.mxu0
    %v2654 = vadd.f32 %v2569, %v2608
    %v2655 = vxor.u32 %v2654, 2147483648
    %v2656 = vmul.f32 %v2655, 1.442695
    %v2657 = vpow.pop %v2656
    %v2658 = vadd.f32 %v2657, 1.0
    %v2659 = vrcp.pop %v2658
    %v2660 = vmul.f32 1.0, %v2659
    %v2661 = vadd.f32 %v2570, %v2610
    %v2662 = vxor.u32 %v2661, 2147483648
    %v2663 = vmul.f32 %v2662, 1.442695
    %v2664 = vpow.pop %v2663
    %v2665 = vadd.f32 %v2664, 1.0
    %v2666 = vrcp.pop %v2665
    %v2667 = vmul.f32 1.0, %v2666
    %v2668 = vadd.f32 %v2649, %v2131
    %v2669 = vmul.f32 %v2660, %v2668
    %v2670 = vadd.f32 %v2571, %v2669
    %v2671 = vtanh.pop %v2670
    %v2672 = vsub.f32 1.0, %v2667
    %v2673 = vmul.f32 %v2672, %v2671
    %v2674 = vmul.f32 %v2667, %v2568
    %v2675 = vadd.f32 %v2673, %v2674
    %v2676 = vld [vmem:[%s1297] sm:$0xff]
    %v2677 = vld [vmem:[%s1297 + $0x8] sm:$0xff]
    %v2678 = vld [vmem:[%s1297 + $0x10] sm:$0xff]
    %v2679 = vpack.c.bf16 %v2675, %v2675
    %2680 = vmatprep.subr.bf16.mxu0 %v1985
    %2681 = vmatpush1.bf16.msra.mxu0 %v1984
    %2682 = vmatprep.subr.bf16.mxu0 %v1988
    %2683 = vmatpush1.bf16.msra.mxu0 %v1987
    %2684 = vmatprep.subr.bf16.mxu0 %v1991
    %2685 = vmatpush1.bf16.msra.mxu0 %v1990
    %2686 = vmatprep.subr.bf16.mxu0 %v1994
    %2687 = vmatpush1.bf16.msra.mxu0 %v1993
    %2688 = vmatprep.subr.bf16.mxu0 %v1997
    %2689 = vmatpush1.bf16.msra.mxu0 %v1996
    %2690 = vmatprep.subr.bf16.mxu0 %v2000
    %2691 = vmatpush1.bf16.msra.mxu0 %v1999
    %2692 = vmatprep.subr.bf16.mxu0 %v2003
    %2693 = vmatpush1.bf16.msra.mxu0 %v2002
    %2694 = vmatprep.subr.bf16.mxu0 %v2006
    %2695 = vmatpush1.bf16.msra.mxu0 %v2005
    %2696 = vmatprep.subr.bf16.mxu0 0
    %2697 = vmatpush1.bf16.msra.mxu0 0
    %2698 = vmatprep.subr.bf16.mxu0 0
    %2699 = vmatpush1.bf16.msra.mxu0 0
    %2700 = vmatprep.subr.bf16.mxu0 0
    %2701 = vmatpush1.bf16.msra.mxu0 0
    %2702 = vmatprep.subr.bf16.mxu0 0
    %2703 = vmatpush1.bf16.msra.mxu0 0
    %2704 = vmatprep.subr.bf16.mxu0 0
    %2705 = vmatpush1.bf16.msra.mxu0 0
    %2706 = vmatprep.subr.bf16.mxu0 0
    %2707 = vmatpush1.bf16.msra.mxu0 0
    %2708 = vmatprep.subr.bf16.mxu0 0
    %2709 = vmatpush1.bf16.msra.mxu0 0
    %2710 = vmatprep.subr.bf16.mxu0 0
    %2711 = vmatpush1.bf16.msra.mxu0 0
    %2712 = vmatprep.mubr.bf16.mxu0 0
    %2713 = vmatmul.mubr.bf16.gmra.mrb[0].mxu0 %v2679
    %v2714 = vpop.f32.mrb[0].mxu0
    %v2715 = vadd.f32 0.0, %v2714
    %v2716 = vpop.f32.mrb[0].mxu0
    %v2717 = vadd.f32 0.0, %v2716
    %v2718 = vpop.f32.mrb[0].mxu0
    %v2719 = vpop.f32.mrb[0].mxu0
    %2720 = vdwg.mxu0
    %2721 = vmatprep.subr.bf16.mxu0 0
    %2722 = vmatpush1.bf16.msra.mxu0 %v1986
    %2723 = vmatprep.subr.bf16.mxu0 0
    %2724 = vmatpush1.bf16.msra.mxu0 %v1989
    %2725 = vmatprep.subr.bf16.mxu0 0
    %2726 = vmatpush1.bf16.msra.mxu0 %v1992
    %2727 = vmatprep.subr.bf16.mxu0 0
    %2728 = vmatpush1.bf16.msra.mxu0 %v1995
    %2729 = vmatprep.subr.bf16.mxu0 0
    %2730 = vmatpush1.bf16.msra.mxu0 %v1998
    %2731 = vmatprep.subr.bf16.mxu0 0
    %2732 = vmatpush1.bf16.msra.mxu0 %v2001
    %2733 = vmatprep.subr.bf16.mxu0 0
    %2734 = vmatpush1.bf16.msra.mxu0 %v2004
    %2735 = vmatprep.subr.bf16.mxu0 0
    %2736 = vmatpush1.bf16.msra.mxu0 %v2007
    %2737 = vmatprep.subr.bf16.mxu0 0
    %2738 = vmatpush1.bf16.msra.mxu0 0
    %2739 = vmatprep.subr.bf16.mxu0 0
    %2740 = vmatpush1.bf16.msra.mxu0 0
    %2741 = vmatprep.subr.bf16.mxu0 0
    %2742 = vmatpush1.bf16.msra.mxu0 0
    %2743 = vmatprep.subr.bf16.mxu0 0
    %2744 = vmatpush1.bf16.msra.mxu0 0
    %2745 = vmatprep.subr.bf16.mxu0 0
    %2746 = vmatpush1.bf16.msra.mxu0 0
    %2747 = vmatprep.subr.bf16.mxu0 0
    %2748 = vmatpush1.bf16.msra.mxu0 0
    %2749 = vmatprep.subr.bf16.mxu0 0
    %2750 = vmatpush1.bf16.msra.mxu0 0
    %2751 = vmatprep.subr.bf16.mxu0 0
    %2752 = vmatpush1.bf16.msra.mxu0 0
    %2753 = vmatprep.mubr.bf16.mxu0 0
    %2754 = vmatmul.mubr.bf16.gmra.mrb[0].mxu0 %v2679
    %v2755 = vpop.f32.mrb[0].mxu0
    %v2756 = vadd.f32 0.0, %v2755
    %v2757 = vpop.f32.mrb[0].mxu0
    %v2758 = vpop.f32.mrb[0].mxu0
    %v2759 = vpop.f32.mrb[0].mxu0
    %2760 = vdwg.mxu0
    %v2761 = vadd.f32 %v2676, %v2715
    %v2762 = vxor.u32 %v2761, 2147483648
    %v2763 = vmul.f32 %v2762, 1.442695
    %v2764 = vpow.pop %v2763
    %v2765 = vadd.f32 %v2764, 1.0
    %v2766 = vrcp.pop %v2765
    %v2767 = vmul.f32 1.0, %v2766
    %v2768 = vadd.f32 %v2677, %v2717
    %v2769 = vxor.u32 %v2768, 2147483648
    %v2770 = vmul.f32 %v2769, 1.442695
    %v2771 = vpow.pop %v2770
    %v2772 = vadd.f32 %v2771, 1.0
    %v2773 = vrcp.pop %v2772
    %v2774 = vmul.f32 1.0, %v2773
    %v2775 = vadd.f32 %v2756, %v2131
    %v2776 = vmul.f32 %v2767, %v2775
    %v2777 = vadd.f32 %v2678, %v2776
    %v2778 = vtanh.pop %v2777
    %v2779 = vsub.f32 1.0, %v2774
    %v2780 = vmul.f32 %v2779, %v2778
    %v2781 = vmul.f32 %v2774, %v2675
    %v2782 = vadd.f32 %v2780, %v2781
    %v2783 = vld [vmem:[%s1407] sm:$0xff]
    %v2784 = vld [vmem:[%s1407 + $0x8] sm:$0xff]
    %v2785 = vld [vmem:[%s1407 + $0x10] sm:$0xff]
    %v2786 = vpack.c.bf16 %v2782, %v2782
    %2787 = vmatprep.subr.bf16.mxu0 %v1985
    %2788 = vmatpush1.bf16.msra.mxu0 %v1984
    %2789 = vmatprep.subr.bf16.mxu0 %v1988
    %2790 = vmatpush1.bf16.msra.mxu0 %v1987
    %2791 = vmatprep.subr.bf16.mxu0 %v1991
    %2792 = vmatpush1.bf16.msra.mxu0 %v1990
    %2793 = vmatprep.subr.bf16.mxu0 %v1994
    %2794 = vmatpush1.bf16.msra.mxu0 %v1993
    %2795 = vmatprep.subr.bf16.mxu0 %v1997
    %2796 = vmatpush1.bf16.msra.mxu0 %v1996
    %2797 = vmatprep.subr.bf16.mxu0 %v2000
    %2798 = vmatpush1.bf16.msra.mxu0 %v1999
    %2799 = vmatprep.subr.bf16.mxu0 %v2003
    %2800 = vmatpush1.bf16.msra.mxu0 %v2002
    %2801 = vmatprep.subr.bf16.mxu0 %v2006
    %2802 = vmatpush1.bf16.msra.mxu0 %v2005
    %2803 = vmatprep.subr.bf16.mxu0 0
    %2804 = vmatpush1.bf16.msra.mxu0 0
    %2805 = vmatprep.subr.bf16.mxu0 0
    %2806 = vmatpush1.bf16.msra.mxu0 0
    %2807 = vmatprep.subr.bf16.mxu0 0
    %2808 = vmatpush1.bf16.msra.mxu0 0
    %2809 = vmatprep.subr.bf16.mxu0 0
    %2810 = vmatpush1.bf16.msra.mxu0 0
    %2811 = vmatprep.subr.bf16.mxu0 0
    %2812 = vmatpush1.bf16.msra.mxu0 0
    %2813 = vmatprep.subr.bf16.mxu0 0
    %2814 = vmatpush1.bf16.msra.mxu0 0
    %2815 = vmatprep.subr.bf16.mxu0 0
    %2816 = vmatpush1.bf16.msra.mxu0 0
    %2817 = vmatprep.subr.bf16.mxu0 0
    %2818 = vmatpush1.bf16.msra.mxu0 0
    %2819 = vmatprep.mubr.bf16.mxu0 0
    %2820 = vmatmul.mubr.bf16.gmra.mrb[0].mxu0 %v2786
    %v2821 = vpop.f32.mrb[0].mxu0
    %v2822 = vadd.f32 0.0, %v2821
    %v2823 = vpop.f32.mrb[0].mxu0
    %v2824 = vadd.f32 0.0, %v2823
    %v2825 = vpop.f32.mrb[0].mxu0
    %v2826 = vpop.f32.mrb[0].mxu0
    %2827 = vdwg.mxu0
    %2828 = vmatprep.subr.bf16.mxu0 0
    %2829 = vmatpush1.bf16.msra.mxu0 %v1986
    %2830 = vmatprep.subr.bf16.mxu0 0
    %2831 = vmatpush1.bf16.msra.mxu0 %v1989
    %2832 = vmatprep.subr.bf16.mxu0 0
    %2833 = vmatpush1.bf16.msra.mxu0 %v1992
    %2834 = vmatprep.subr.bf16.mxu0 0
    %2835 = vmatpush1.bf16.msra.mxu0 %v1995
    %2836 = vmatprep.subr.bf16.mxu0 0
    %2837 = vmatpush1.bf16.msra.mxu0 %v1998
    %2838 = vmatprep.subr.bf16.mxu0 0
    %2839 = vmatpush1.bf16.msra.mxu0 %v2001
    %2840 = vmatprep.subr.bf16.mxu0 0
    %2841 = vmatpush1.bf16.msra.mxu0 %v2004
    %2842 = vmatprep.subr.bf16.mxu0 0
    %2843 = vmatpush1.bf16.msra.mxu0 %v2007
    %2844 = vmatprep.subr.bf16.mxu0 0
    %2845 = vmatpush1.bf16.msra.mxu0 0
    %2846 = vmatprep.subr.bf16.mxu0 0
    %2847 = vmatpush1.bf16.msra.mxu0 0
    %2848 = vmatprep.subr.bf16.mxu0 0
    %2849 = vmatpush1.bf16.msra.mxu0 0
    %2850 = vmatprep.subr.bf16.mxu0 0
    %2851 = vmatpush1.bf16.msra.mxu0 0
    %2852 = vmatprep.subr.bf16.mxu0 0
    %2853 = vmatpush1.bf16.msra.mxu0 0
    %2854 = vmatprep.subr.bf16.mxu0 0
    %2855 = vmatpush1.bf16.msra.mxu0 0
    %2856 = vmatprep.subr.bf16.mxu0 0
    %2857 = vmatpush1.bf16.msra.mxu0 0
    %2858 = vmatprep.subr.bf16.mxu0 0
    %2859 = vmatpush1.bf16.msra.mxu0 0
    %2860 = vmatprep.mubr.bf16.mxu0 0
    %2861 = vmatmul.mubr.bf16.gmra.mrb[0].mxu0 %v2786
    %v2862 = vpop.f32.mrb[0].mxu0
    %v2863 = vadd.f32 0.0, %v2862
    %v2864 = vpop.f32.mrb[0].mxu0
    %v2865 = vpop.f32.mrb[0].mxu0
    %v2866 = vpop.f32.mrb[0].mxu0
    %2867 = vdwg.mxu0
    %v2868 = vadd.f32 %v2783, %v2822
    %v2869 = vxor.u32 %v2868, 2147483648
    %v2870 = vmul.f32 %v2869, 1.442695
    %v2871 = vpow.pop %v2870
    %v2872 = vadd.f32 %v2871, 1.0
    %v2873 = vrcp.pop %v2872
    %v2874 = vmul.f32 1.0, %v2873
    %v2875 = vadd.f32 %v2784, %v2824
    %v2876 = vxor.u32 %v2875, 2147483648
    %v2877 = vmul.f32 %v2876, 1.442695
    %v2878 = vpow.pop %v2877
    %v2879 = vadd.f32 %v2878, 1.0
    %v2880 = vrcp.pop %v2879
    %v2881 = vmul.f32 1.0, %v2880
    %v2882 = vadd.f32 %v2863, %v2131
    %v2883 = vmul.f32 %v2874, %v2882
    %v2884 = vadd.f32 %v2785, %v2883
    %v2885 = vtanh.pop %v2884
    %v2886 = vsub.f32 1.0, %v2881
    %v2887 = vmul.f32 %v2886, %v2885
    %v2888 = vmul.f32 %v2881, %v2782
    %v2889 = vadd.f32 %v2887, %v2888
    %v2890 = vpack.c.bf16 %v2889, %v2889
    %v2891 = vld [vmem:[#allocation13] sm:$0xf]
    %v2892 = vld [vmem:[#allocation13 + $0x4] sm:$0xf]
    %v2893 = vld [vmem:[#allocation13 + $0x8] sm:$0xf]
    %v2894 = vld [vmem:[#allocation13 + $0xc] sm:$0xf]
    %v2895 = vld [vmem:[#allocation13 + $0x10] sm:$0xf]
    %v2896 = vld [vmem:[#allocation13 + $0x14] sm:$0xf]
    %v2897 = vld [vmem:[#allocation13 + $0x18] sm:$0xf]
    %v2898 = vld [vmem:[#allocation13 + $0x1c] sm:$0xf]
    %v2899 = vld [vmem:[#allocation13 + $0x20] sm:$0xf]
    %v2900 = vld [vmem:[#allocation13 + $0x24] sm:$0xf]
    %v2901 = vld [vmem:[#allocation13 + $0x28] sm:$0xf]
    %v2902 = vld [vmem:[#allocation13 + $0x2c] sm:$0xf]
    %v2903 = vld [vmem:[#allocation13 + $0x30] sm:$0xf]
    %v2904 = vld [vmem:[#allocation13 + $0x34] sm:$0xf]
    %v2905 = vld [vmem:[#allocation13 + $0x38] sm:$0xf]
    %v2906 = vld [vmem:[#allocation13 + $0x3c] sm:$0xf]
    %v2907 = vld [vmem:[%s10] sm:$0x1]
    %v2909 = vlaneseq
    %v2910 = vshrl.u32 %v2909, 7
    %v2911 = vsub.s32 0, %v2910
    %v2912 = vrot.slane %v2907, %v2911
    %v2930 = vunpack.c.l.b16 %v2891
    %v2931 = vunpack.c.l.b16 %v2892
    %v2932 = vunpack.c.l.b16 %v2893
    %v2933 = vunpack.c.l.b16 %v2894
    %v2934 = vunpack.c.l.b16 %v2895
    %v2935 = vunpack.c.l.b16 %v2896
    %v2936 = vunpack.c.l.b16 %v2897
    %v2937 = vunpack.c.l.b16 %v2898
    %v2938 = vunpack.c.l.b16 %v2899
    %v2939 = vunpack.c.l.b16 %v2900
    %v2940 = vunpack.c.l.b16 %v2901
    %v2941 = vunpack.c.l.b16 %v2902
    %v2942 = vunpack.c.l.b16 %v2903
    %v2943 = vunpack.c.l.b16 %v2904
    %v2944 = vunpack.c.l.b16 %v2905
    %v2945 = vunpack.c.l.b16 %v2906
    %v2946 = vpack.c.b16 %v2931, %v2930
    %v2947 = vpack.c.b16 %v2933, %v2932
    %v2948 = vpack.c.b16 %v2935, %v2934
    %v2949 = vpack.c.b16 %v2937, %v2936
    %v2950 = vpack.c.b16 %v2939, %v2938
    %v2951 = vpack.c.b16 %v2941, %v2940
    %v2952 = vpack.c.b16 %v2943, %v2942
    %v2953 = vpack.c.b16 %v2945, %v2944
    %2962 = vmatprep.subr.bf16.mxu0 0
    %2963 = vmatpush1.bf16.msra.mxu0 %v2946
    %2964 = vmatprep.subr.bf16.mxu0 0
    %2965 = vmatpush1.bf16.msra.mxu0 %v2947
    %2966 = vmatprep.subr.bf16.mxu0 0
    %2967 = vmatpush1.bf16.msra.mxu0 %v2948
    %2968 = vmatprep.subr.bf16.mxu0 0
    %2969 = vmatpush1.bf16.msra.mxu0 %v2949
    %2970 = vmatprep.subr.bf16.mxu0 0
    %2971 = vmatpush1.bf16.msra.mxu0 %v2950
    %2972 = vmatprep.subr.bf16.mxu0 0
    %2973 = vmatpush1.bf16.msra.mxu0 %v2951
    %2974 = vmatprep.subr.bf16.mxu0 0
    %2975 = vmatpush1.bf16.msra.mxu0 %v2952
    %2976 = vmatprep.subr.bf16.mxu0 0
    %2977 = vmatpush1.bf16.msra.mxu0 %v2953
    %2978 = vmatprep.subr.bf16.mxu0 0
    %2979 = vmatpush1.bf16.msra.mxu0 0
    %2980 = vmatprep.subr.bf16.mxu0 0
    %2981 = vmatpush1.bf16.msra.mxu0 0
    %2982 = vmatprep.subr.bf16.mxu0 0
    %2983 = vmatpush1.bf16.msra.mxu0 0
    %2984 = vmatprep.subr.bf16.mxu0 0
    %2985 = vmatpush1.bf16.msra.mxu0 0
    %2986 = vmatprep.subr.bf16.mxu0 0
    %2987 = vmatpush1.bf16.msra.mxu0 0
    %2988 = vmatprep.subr.bf16.mxu0 0
    %2989 = vmatpush1.bf16.msra.mxu0 0
    %2990 = vmatprep.subr.bf16.mxu0 0
    %2991 = vmatpush1.bf16.msra.mxu0 0
    %2992 = vmatprep.subr.bf16.mxu0 0
    %2993 = vmatpush1.bf16.msra.mxu0 0
    %2994 = vmatprep.mubr.bf16.mxu0 0
    %2995 = vmatmul.mubr.bf16.gmra.mrb[0].mxu0 %v2890
    %v2996 = vpop.f32.mrb[0].mxu0
    %v2997 = vadd.f32 %v2912, %v2996
    %v2998 = vpop.f32.mrb[0].mxu0
    %v2999 = vpop.f32.mrb[0].mxu0
    %v3000 = vpop.f32.mrb[0].mxu0
    %3001 = vdwg.mxu0
    %3002 = vst [vmem:[#allocation15] sm:$0xff] %v2997
    // Predicated region
    $region70: #{tpu_custom_call.1} parent=1 // pred_check
      _
    $region71: #{tpu_custom_call.1} parent=1 // pred_check_branch
      %3004 = sbr.rel (0) target = $region73
    $region72: #{tpu_custom_call.1} parent=1 // pred_region
      %s3006 = ssub.s32 128, 128
      %3007 = vsyncadd [#allocation6], %s3006
      %s3009 = sshll.u32 [#allocation15], 4
      %s3010 = int_to_ptr.vmem [resolvable:$true] %s3009
      %3012 = dma.vmem_to_hbm [thread:$0]  %s3010, 128, %s11, [#allocation6]
    $region73: #{tpu_custom_call.1} parent=1 // pred_fallthru
      _
    // Predicated region
    $region74: #{tpu_custom_call.1} parent=1 // pred_check
      _
    $region75: #{tpu_custom_call.1} parent=1 // pred_check_branch
      %3014 = sbr.rel (0) target = $region77
    $region76: #{tpu_custom_call.1} parent=1 // pred_region
      %3015 = dma.done [#allocation6], 128
    $region77: #{tpu_custom_call.1} parent=1 // pred_fallthru
      _
    %3016 = vsyncpa [#allocation5], 1
    %3017 = vsyncpa [#allocation8], 1
    %3018 = vsyncpa [#allocation11], 1
    %3019 = vsyncpa [#allocation14], 1
    %3020 = vsyncpa [#allocation6], 1

</llo_original>
